<compile_context>
chip_gen: v6e
topology: v6e:2x2x1
jax: 0.10.0
libtpu: 0.0.40
codegen_flags: <defaults>
</compile_context>

<pallas_src>
import math

import jax
import jax.numpy as jnp
from jax.experimental import pallas as pl
from jax.experimental.pallas import tpu as pltpu


def _mlp_kernel(x_ref, w1_ref, b1_ref, w2_ref, b2_ref, w3_ref, b3_ref, o_ref):
    """Fused 3-layer MLP. Matmuls in the weight dtype (bf16), f32 accumulation."""
    cdt = w1_ref.dtype  # matmul operand dtype (bfloat16 by default)
    x = x_ref[...].astype(cdt)
    # Layer 1: Linear(64 -> 256) + ReLU   (bias add / ReLU in f32)
    h1 = jnp.dot(x, w1_ref[...], preferred_element_type=jnp.float32) + b1_ref[...]
    h1 = jnp.maximum(h1, 0.0)
    # Layer 2: Linear(256 -> 512) + ReLU
    h2 = jnp.dot(h1.astype(cdt), w2_ref[...],
                 preferred_element_type=jnp.float32) + b2_ref[...]
    h2 = jnp.maximum(h2, 0.0)
    # Layer 3: Linear(512 -> 1024) + Tanh
    h3 = jnp.dot(h2.astype(cdt), w3_ref[...],
                 preferred_element_type=jnp.float32) + b3_ref[...]
    o_ref[...] = jnp.tanh(h3).astype(o_ref.dtype)


def _round_up(n, m):
    return ((n + m - 1) // m) * m


def key_stream_generator(x, params, *, batch_tile=256):
    """Forward pass of KeyStreamGenerator.

    x: (B, 64) float32
    params: w1 (64,256), w2 (256,512), w3 (512,1024) in bf16 (or f32),
            b1 (1,256), b2 (1,512), b3 (1,1024) in f32.
    returns (B, 1024) float32
    """
    w1, b1 = params["w1"], params["b1"]
    w2, b2 = params["w2"], params["b2"]
    w3, b3 = params["w3"], params["b3"]

    B, in_dim = x.shape
    out_dim = w3.shape[1]

    # Small batch: a single grid step over the whole (sublane-padded) batch.
    # Large batch: 256-row tiles (multiple of 128 and 256 -> fills the MXU on
    # v5e/v6e/v7x) sharded across TensorCores via the parallel batch axis.
    b_min = max(8, _round_up(B, 8))
    if b_min <= batch_tile:
        tile, b_pad = b_min, b_min
    else:
        tile = batch_tile
        b_pad = _round_up(B, tile)

    if b_pad != B:
        x = jnp.pad(x, ((0, b_pad - B), (0, 0)))

    grid = (b_pad // tile,)

    def call(weight_pipeline_mode):
        def const_spec(arr):
            kwargs = {}
            if weight_pipeline_mode is not None:
                kwargs["pipeline_mode"] = weight_pipeline_mode
            # Full tensor, constant block index: resident across grid steps.
            return pl.BlockSpec(arr.shape, lambda i: (0, 0), **kwargs)

        return pl.pallas_call(
            _mlp_kernel,
            out_shape=jax.ShapeDtypeStruct((b_pad, out_dim), jnp.float32),
            grid_spec=pl.GridSpec(
                grid=grid,
                in_specs=[
                    pl.BlockSpec((tile, in_dim), lambda i: (i, 0)),  # x
                    const_spec(w1), const_spec(b1),
                    const_spec(w2), const_spec(b2),
                    const_spec(w3), const_spec(b3),
                ],
                out_specs=pl.BlockSpec((tile, out_dim), lambda i: (i, 0)),
            ),
            compiler_params=pltpu.CompilerParams(
                dimension_semantics=("parallel",),
            ),
        )(x, w1, b1, w2, b2, w3, b3)

    try:
        # Constant-index weight blocks do not need double buffering.
        out = call(pl.Buffered(1))
    except Exception:
        # Fallback for jax versions / configs that reject pipeline_mode.
        out = call(None)

    return out[:B]


def init_params(key, input_size=64, output_size=1024, param_dtype=jnp.bfloat16):
    """nn.Linear default init U(-1/sqrt(fan_in), +1/sqrt(fan_in)).

    Weights cast to `param_dtype` (bf16 for MXU throughput / halved HBM
    traffic); biases kept f32 since they are added to the f32 accumulator.
    """
    sizes = [(input_size, 256), (256, 512), (512, output_size)]
    params = {}
    for idx, (fan_in, fan_out) in enumerate(sizes, start=1):
        key, kw, kb = jax.random.split(key, 3)
        bound = 1.0 / math.sqrt(fan_in)
        w = jax.random.uniform(kw, (fan_in, fan_out), jnp.float32,
                               minval=-bound, maxval=bound)
        b = jax.random.uniform(kb, (1, fan_out), jnp.float32,
                               minval=-bound, maxval=bound)
        params[f"w{idx}"] = w.astype(param_dtype)
        params[f"b{idx}"] = b
    return params


def _reference(x, p):
    """Pure-JAX reference with the same dtype/casting scheme as the kernel."""
    cdt = p["w1"].dtype
    h1 = jnp.maximum(
        jnp.dot(x.astype(cdt), p["w1"], preferred_element_type=jnp.float32)
        + p["b1"], 0.0)
    h2 = jnp.maximum(
        jnp.dot(h1.astype(cdt), p["w2"], preferred_element_type=jnp.float32)
        + p["b2"], 0.0)
    return jnp.tanh(
        jnp.dot(h2.astype(cdt), p["w3"], preferred_element_type=jnp.float32)
        + p["b3"])


if __name__ == "__main__":
    key = jax.random.PRNGKey(0)
    key, kx = jax.random.split(key)

    B, INPUT, OUTPUT = 8, 64, 1024
    x = jax.random.normal(kx, (B, INPUT), jnp.float32)
    params = init_params(key, INPUT, OUTPUT)

    out = jax.block_until_ready(key_stream_generator(x, params))

    ref = _reference(x, params)
    assert out.shape == (B, OUTPUT)
    assert jnp.allclose(out, ref, atol=1e-2, rtol=1e-2), "mismatch vs reference"

    print("KERNEL_OK")
</pallas_src>

<mosaic_0001>
module attributes {stable_mosaic.version = 11 : i64} {
  func.func @_mlp_kernel(%arg0: i32, %arg1: memref<8x64xf32, #tpu.memory_space<vmem>>, %arg2: memref<64x256xbf16, #tpu.memory_space<vmem>>, %arg3: memref<1x256xf32, #tpu.memory_space<vmem>>, %arg4: memref<256x512xbf16, #tpu.memory_space<vmem>>, %arg5: memref<1x512xf32, #tpu.memory_space<vmem>>, %arg6: memref<512x1024xbf16, #tpu.memory_space<vmem>>, %arg7: memref<1x1024xf32, #tpu.memory_space<vmem>>, %arg8: memref<8x1024xf32, #tpu.memory_space<vmem>>) attributes {dimension_semantics = [#tpu.dimension_semantics<parallel>], iteration_bounds = array<i64: 1>, scalar_prefetch = 0 : i64, scratch_operands = 0 : i64, tpu.core_type = #tpu.core_type<tc>, window_params = [{transform_indices = @transform_0, window_bounds = array<i64: 8, 64>}, {pipeline_mode = #tpu.pipeline_mode<synchronous>, transform_indices = @transform_1, window_bounds = array<i64: 64, 256>}, {pipeline_mode = #tpu.pipeline_mode<synchronous>, transform_indices = @transform_2, window_bounds = array<i64: 1, 256>}, {pipeline_mode = #tpu.pipeline_mode<synchronous>, transform_indices = @transform_3, window_bounds = array<i64: 256, 512>}, {pipeline_mode = #tpu.pipeline_mode<synchronous>, transform_indices = @transform_4, window_bounds = array<i64: 1, 512>}, {pipeline_mode = #tpu.pipeline_mode<synchronous>, transform_indices = @transform_5, window_bounds = array<i64: 512, 1024>}, {pipeline_mode = #tpu.pipeline_mode<synchronous>, transform_indices = @transform_6, window_bounds = array<i64: 1, 1024>}, {transform_indices = @transform_7, window_bounds = array<i64: 8, 1024>}]} {
    %c0 = arith.constant 0 : index
    %c0_0 = arith.constant 0 : index
    %0 = vector.load %arg1[%c0, %c0_0] : memref<8x64xf32, #tpu.memory_space<vmem>>, vector<8x64xf32>
    %1 = arith.truncf %0 : vector<8x64xf32> to vector<8x64xbf16>
    %c0_1 = arith.constant 0 : index
    %c0_2 = arith.constant 0 : index
    %2 = vector.load %arg2[%c0_1, %c0_2] : memref<64x256xbf16, #tpu.memory_space<vmem>>, vector<64x256xbf16>
    %cst = arith.constant dense<0.000000e+00> : vector<8x256xf32>
    %3 = tpu.matmul %1, %2, %cst {dimension_numbers = #tpu.dot_dimension_numbers<[1], [0], [0], [1], [0, 0, 1, 1], [], []>} : vector<8x64xbf16>, vector<64x256xbf16>, vector<8x256xf32> -> vector<8x256xf32>
    %c0_3 = arith.constant 0 : index
    %c0_4 = arith.constant 0 : index
    %4 = vector.load %arg3[%c0_3, %c0_4] : memref<1x256xf32, #tpu.memory_space<vmem>>, vector<1x256xf32>
    %5 = vector.broadcast %4 : vector<1x256xf32> to vector<8x256xf32>
    %6 = arith.addf %3, %5 : vector<8x256xf32>
    %cst_5 = arith.constant 0.000000e+00 : f32
    %7 = vector.broadcast %cst_5 : f32 to vector<8x256xf32>
    %8 = arith.maximumf %6, %7 : vector<8x256xf32>
    %9 = arith.truncf %8 : vector<8x256xf32> to vector<8x256xbf16>
    %c0_6 = arith.constant 0 : index
    %c0_7 = arith.constant 0 : index
    %10 = vector.load %arg4[%c0_6, %c0_7] : memref<256x512xbf16, #tpu.memory_space<vmem>>, vector<256x512xbf16>
    %cst_8 = arith.constant dense<0.000000e+00> : vector<8x512xf32>
    %11 = tpu.matmul %9, %10, %cst_8 {dimension_numbers = #tpu.dot_dimension_numbers<[1], [0], [0], [1], [0, 0, 1, 1], [], []>} : vector<8x256xbf16>, vector<256x512xbf16>, vector<8x512xf32> -> vector<8x512xf32>
    %c0_9 = arith.constant 0 : index
    %c0_10 = arith.constant 0 : index
    %12 = vector.load %arg5[%c0_9, %c0_10] : memref<1x512xf32, #tpu.memory_space<vmem>>, vector<1x512xf32>
    %13 = vector.broadcast %12 : vector<1x512xf32> to vector<8x512xf32>
    %14 = arith.addf %11, %13 : vector<8x512xf32>
    %cst_11 = arith.constant 0.000000e+00 : f32
    %15 = vector.broadcast %cst_11 : f32 to vector<8x512xf32>
    %16 = arith.maximumf %14, %15 : vector<8x512xf32>
    %17 = arith.truncf %16 : vector<8x512xf32> to vector<8x512xbf16>
    %c0_12 = arith.constant 0 : index
    %c0_13 = arith.constant 0 : index
    %18 = vector.load %arg6[%c0_12, %c0_13] : memref<512x1024xbf16, #tpu.memory_space<vmem>>, vector<512x1024xbf16>
    %cst_14 = arith.constant dense<0.000000e+00> : vector<8x1024xf32>
    %19 = tpu.matmul %17, %18, %cst_14 {dimension_numbers = #tpu.dot_dimension_numbers<[1], [0], [0], [1], [0, 0, 1, 1], [], []>} : vector<8x512xbf16>, vector<512x1024xbf16>, vector<8x1024xf32> -> vector<8x1024xf32>
    %c0_15 = arith.constant 0 : index
    %c0_16 = arith.constant 0 : index
    %20 = vector.load %arg7[%c0_15, %c0_16] : memref<1x1024xf32, #tpu.memory_space<vmem>>, vector<1x1024xf32>
    %21 = vector.broadcast %20 : vector<1x1024xf32> to vector<8x1024xf32>
    %22 = arith.addf %19, %21 : vector<8x1024xf32>
    %23 = math.tanh %22 : vector<8x1024xf32>
    %c0_17 = arith.constant 0 : index
    %c0_18 = arith.constant 0 : index
    %24 = vector.load %arg8[%c0_17, %c0_18] : memref<8x1024xf32, #tpu.memory_space<vmem>>, vector<8x1024xf32>
    tpu.vector_store %arg8[%c0_17, %c0_18], %23 {strides = array<i32>} : memref<8x1024xf32, #tpu.memory_space<vmem>>, vector<8x1024xf32>,
    return
  }
  func.func @transform_0(%arg0: i32) -> (i32, i32) {
    %c0_i32 = arith.constant 0 : i32
    %c0_i32_0 = arith.constant 0 : i32
    return %arg0, %c0_i32 : i32, i32
  }
  func.func @transform_1(%arg0: i32) -> (i32, i32) {
    %c0_i32 = arith.constant 0 : i32
    %c0_i32_0 = arith.constant 0 : i32
    %c0_i32_1 = arith.constant 0 : i32
    return %c0_i32, %c0_i32_0 : i32, i32
  }
  func.func @transform_2(%arg0: i32) -> (i32, i32) {
    %c0_i32 = arith.constant 0 : i32
    %c0_i32_0 = arith.constant 0 : i32
    %c0_i32_1 = arith.constant 0 : i32
    return %c0_i32, %c0_i32_0 : i32, i32
  }
  func.func @transform_3(%arg0: i32) -> (i32, i32) {
    %c0_i32 = arith.constant 0 : i32
    %c0_i32_0 = arith.constant 0 : i32
    %c0_i32_1 = arith.constant 0 : i32
    return %c0_i32, %c0_i32_0 : i32, i32
  }
  func.func @transform_4(%arg0: i32) -> (i32, i32) {
    %c0_i32 = arith.constant 0 : i32
    %c0_i32_0 = arith.constant 0 : i32
    %c0_i32_1 = arith.constant 0 : i32
    return %c0_i32, %c0_i32_0 : i32, i32
  }
  func.func @transform_5(%arg0: i32) -> (i32, i32) {
    %c0_i32 = arith.constant 0 : i32
    %c0_i32_0 = arith.constant 0 : i32
    %c0_i32_1 = arith.constant 0 : i32
    return %c0_i32, %c0_i32_0 : i32, i32
  }
  func.func @transform_6(%arg0: i32) -> (i32, i32) {
    %c0_i32 = arith.constant 0 : i32
    %c0_i32_0 = arith.constant 0 : i32
    %c0_i32_1 = arith.constant 0 : i32
    return %c0_i32, %c0_i32_0 : i32, i32
  }
  func.func @transform_7(%arg0: i32) -> (i32, i32) {
    %c0_i32 = arith.constant 0 : i32
    %c0_i32_0 = arith.constant 0 : i32
    return %arg0, %c0_i32 : i32, i32
  }
}

module attributes {stable_mosaic.version = 11 : i64} {
  func.func @_mlp_kernel(%arg0: i32, %arg1: memref<8x64xf32, #tpu.memory_space<vmem>>, %arg2: memref<64x256xbf16, #tpu.memory_space<vmem>>, %arg3: memref<1x256xf32, #tpu.memory_space<vmem>>, %arg4: memref<256x512xbf16, #tpu.memory_space<vmem>>, %arg5: memref<1x512xf32, #tpu.memory_space<vmem>>, %arg6: memref<512x1024xbf16, #tpu.memory_space<vmem>>, %arg7: memref<1x1024xf32, #tpu.memory_space<vmem>>, %arg8: memref<8x1024xf32, #tpu.memory_space<vmem>>) attributes {dimension_semantics = [#tpu.dimension_semantics<parallel>], iteration_bounds = array<i64: 1>, scalar_prefetch = 0 : i64, scratch_operands = 0 : i64, tpu.core_type = #tpu.core_type<tc>, window_params = [{transform_indices = @transform_0, window_bounds = array<i64: 8, 64>}, {pipeline_mode = #tpu.pipeline_mode<synchronous>, transform_indices = @transform_1, window_bounds = array<i64: 64, 256>}, {pipeline_mode = #tpu.pipeline_mode<synchronous>, transform_indices = @transform_2, window_bounds = array<i64: 1, 256>}, {pipeline_mode = #tpu.pipeline_mode<synchronous>, transform_indices = @transform_3, window_bounds = array<i64: 256, 512>}, {pipeline_mode = #tpu.pipeline_mode<synchronous>, transform_indices = @transform_4, window_bounds = array<i64: 1, 512>}, {pipeline_mode = #tpu.pipeline_mode<synchronous>, transform_indices = @transform_5, window_bounds = array<i64: 512, 1024>}, {pipeline_mode = #tpu.pipeline_mode<synchronous>, transform_indices = @transform_6, window_bounds = array<i64: 1, 1024>}, {transform_indices = @transform_7, window_bounds = array<i64: 8, 1024>}]} {
    %c0 = arith.constant 0 : index
    %c0_0 = arith.constant 0 : index
    %0 = vector.load %arg1[%c0, %c0_0] : memref<8x64xf32, #tpu.memory_space<vmem>>, vector<8x64xf32>
    %1 = arith.truncf %0 : vector<8x64xf32> to vector<8x64xbf16>
    %c0_1 = arith.constant 0 : index
    %c0_2 = arith.constant 0 : index
    %2 = vector.load %arg2[%c0_1, %c0_2] : memref<64x256xbf16, #tpu.memory_space<vmem>>, vector<64x256xbf16>
    %cst = arith.constant dense<0.000000e+00> : vector<8x256xf32>
    %3 = tpu.matmul %1, %2, %cst {dimension_numbers = #tpu.dot_dimension_numbers<[1], [0], [0], [1], [0, 0, 1, 1], [], []>} : vector<8x64xbf16>, vector<64x256xbf16>, vector<8x256xf32> -> vector<8x256xf32>
    %c0_3 = arith.constant 0 : index
    %c0_4 = arith.constant 0 : index
    %4 = vector.load %arg3[%c0_3, %c0_4] : memref<1x256xf32, #tpu.memory_space<vmem>>, vector<1x256xf32>
    %5 = vector.broadcast %4 : vector<1x256xf32> to vector<8x256xf32>
    %6 = arith.addf %3, %5 : vector<8x256xf32>
    %cst_5 = arith.constant 0.000000e+00 : f32
    %7 = vector.broadcast %cst_5 : f32 to vector<8x256xf32>
    %8 = arith.maximumf %6, %7 : vector<8x256xf32>
    %9 = arith.truncf %8 : vector<8x256xf32> to vector<8x256xbf16>
    %c0_6 = arith.constant 0 : index
    %c0_7 = arith.constant 0 : index
    %10 = vector.load %arg4[%c0_6, %c0_7] : memref<256x512xbf16, #tpu.memory_space<vmem>>, vector<256x512xbf16>
    %cst_8 = arith.constant dense<0.000000e+00> : vector<8x512xf32>
    %11 = tpu.matmul %9, %10, %cst_8 {dimension_numbers = #tpu.dot_dimension_numbers<[1], [0], [0], [1], [0, 0, 1, 1], [], []>} : vector<8x256xbf16>, vector<256x512xbf16>, vector<8x512xf32> -> vector<8x512xf32>
    %c0_9 = arith.constant 0 : index
    %c0_10 = arith.constant 0 : index
    %12 = vector.load %arg5[%c0_9, %c0_10] : memref<1x512xf32, #tpu.memory_space<vmem>>, vector<1x512xf32>
    %13 = vector.broadcast %12 : vector<1x512xf32> to vector<8x512xf32>
    %14 = arith.addf %11, %13 : vector<8x512xf32>
    %cst_11 = arith.constant 0.000000e+00 : f32
    %15 = vector.broadcast %cst_11 : f32 to vector<8x512xf32>
    %16 = arith.maximumf %14, %15 : vector<8x512xf32>
    %17 = arith.truncf %16 : vector<8x512xf32> to vector<8x512xbf16>
    %c0_12 = arith.constant 0 : index
    %c0_13 = arith.constant 0 : index
    %18 = vector.load %arg6[%c0_12, %c0_13] : memref<512x1024xbf16, #tpu.memory_space<vmem>>, vector<512x1024xbf16>
    %cst_14 = arith.constant dense<0.000000e+00> : vector<8x1024xf32>
    %19 = tpu.matmul %17, %18, %cst_14 {dimension_numbers = #tpu.dot_dimension_numbers<[1], [0], [0], [1], [0, 0, 1, 1], [], []>} : vector<8x512xbf16>, vector<512x1024xbf16>, vector<8x1024xf32> -> vector<8x1024xf32>
    %c0_15 = arith.constant 0 : index
    %c0_16 = arith.constant 0 : index
    %20 = vector.load %arg7[%c0_15, %c0_16] : memref<1x1024xf32, #tpu.memory_space<vmem>>, vector<1x1024xf32>
    %21 = vector.broadcast %20 : vector<1x1024xf32> to vector<8x1024xf32>
    %22 = arith.addf %19, %21 : vector<8x1024xf32>
    %23 = math.tanh %22 : vector<8x1024xf32>
    %c0_17 = arith.constant 0 : index
    %c0_18 = arith.constant 0 : index
    %24 = vector.load %arg8[%c0_17, %c0_18] : memref<8x1024xf32, #tpu.memory_space<vmem>>, vector<8x1024xf32>
    tpu.vector_store %arg8[%c0_17, %c0_18], %23 {strides = array<i32>} : memref<8x1024xf32, #tpu.memory_space<vmem>>, vector<8x1024xf32>,
    return
  }
  func.func @transform_0(%arg0: i32) -> (i32, i32) {
    %c0_i32 = arith.constant 0 : i32
    %c0_i32_0 = arith.constant 0 : i32
    return %arg0, %c0_i32 : i32, i32
  }
  func.func @transform_1(%arg0: i32) -> (i32, i32) {
    %c0_i32 = arith.constant 0 : i32
    %c0_i32_0 = arith.constant 0 : i32
    %c0_i32_1 = arith.constant 0 : i32
    return %c0_i32, %c0_i32_0 : i32, i32
  }
  func.func @transform_2(%arg0: i32) -> (i32, i32) {
    %c0_i32 = arith.constant 0 : i32
    %c0_i32_0 = arith.constant 0 : i32
    %c0_i32_1 = arith.constant 0 : i32
    return %c0_i32, %c0_i32_0 : i32, i32
  }
  func.func @transform_3(%arg0: i32) -> (i32, i32) {
    %c0_i32 = arith.constant 0 : i32
    %c0_i32_0 = arith.constant 0 : i32
    %c0_i32_1 = arith.constant 0 : i32
    return %c0_i32, %c0_i32_0 : i32, i32
  }
  func.func @transform_4(%arg0: i32) -> (i32, i32) {
    %c0_i32 = arith.constant 0 : i32
    %c0_i32_0 = arith.constant 0 : i32
    %c0_i32_1 = arith.constant 0 : i32
    return %c0_i32, %c0_i32_0 : i32, i32
  }
  func.func @transform_5(%arg0: i32) -> (i32, i32) {
    %c0_i32 = arith.constant 0 : i32
    %c0_i32_0 = arith.constant 0 : i32
    %c0_i32_1 = arith.constant 0 : i32
    return %c0_i32, %c0_i32_0 : i32, i32
  }
  func.func @transform_6(%arg0: i32) -> (i32, i32) {
    %c0_i32 = arith.constant 0 : i32
    %c0_i32_0 = arith.constant 0 : i32
    %c0_i32_1 = arith.constant 0 : i32
    return %c0_i32, %c0_i32_0 : i32, i32
  }
  func.func @transform_7(%arg0: i32) -> (i32, i32) {
    %c0_i32 = arith.constant 0 : i32
    %c0_i32_0 = arith.constant 0 : i32
    return %arg0, %c0_i32 : i32, i32
  }
}

</mosaic_0001>

<llo_original>
// kernel: tpu_custom_call.1
$region0: #{tpu_custom_call.1}
  #allocation0 [shape = 'u32[]', space=smem, size = 0x4, offset = 0x4, fixed_abs, tag = 'smem constant byte address 0x4 - core index']
  #allocation1 [shape = 'u32[144,128]{1,0:T(1,128)}', space=vmem, size = 0x12000, scoped, tag = 'internal scratch']
  %s0 = inlined_call_operand.hbm [shape: f32[8,64], index: 0, kind: input, shape index: {}]
  %s1 = inlined_call_operand.hbm [shape: bf16[64,256], index: 1, kind: input, shape index: {}]
  %s2 = inlined_call_operand.vmem [shape: f32[1,256], index: 2, kind: input, shape index: {}]
  %s3 = inlined_call_operand.hbm [shape: bf16[256,512], index: 3, kind: input, shape index: {}]
  %s4 = inlined_call_operand.hbm [shape: f32[1,512], index: 4, kind: input, shape index: {}]
  %s5 = inlined_call_operand.hbm [shape: bf16[512,1024], index: 5, kind: input, shape index: {}]
  %s6 = inlined_call_operand.vmem [shape: f32[1,1024], index: 6, kind: input, shape index: {}]
  %s7 = inlined_call_operand.hbm [shape: f32[8,1024], index: 7, kind: output, shape index: {}]
  %s8 = sld [smem:[#allocation0]]
  $region58: #{tpu_custom_call.1} parent=0
    _
  %s10 = ssub.s32 1, %s8
  %s11 = scalar_select 0, %s10, %s8
  $region1: #{tpu_custom_call.1} parent=0
    #allocation2 [shape = 'u8[4096]{0}', space=vmem, size = 0x1000, scoped, tag = 'input window, operand 0, single buffered']
    #allocation3 [shape = 's32[1]{0}', space=sflag, size = 0x4, scoped, tag = 'scoped memory for tpu_custom_call.1']
    #allocation4 [shape = 's32[1]{0}', space=sflag, size = 0x4, scoped, tag = 'scoped memory for tpu_custom_call.1']
    #allocation5 [shape = 'u8[32768]{0}', space=vmem, size = 0x8000, scoped, tag = 'input window, operand 1, single buffered']
    #allocation6 [shape = 's32[1]{0}', space=sflag, size = 0x4, scoped, tag = 'scoped memory for tpu_custom_call.1']
    #allocation7 [shape = 'u8[262144]{0}', space=vmem, size = 0x40000, scoped, tag = 'input window, operand 3, single buffered']
    #allocation8 [shape = 'u8[2048]{0}', space=vmem, size = 0x800, scoped, tag = 'input window, operand 4, single buffered']
    #allocation9 [shape = 's32[1]{0}', space=sflag, size = 0x4, scoped, tag = 'scoped memory for tpu_custom_call.1']
    #allocation10 [shape = 'u8[1048576]{0}', space=vmem, size = 0x100000, scoped, tag = 'input window, operand 5, single buffered']
    #allocation11 [shape = 'u8[32768]{0}', space=vmem, size = 0x8000, scoped, tag = 'output window, operand 0, single buffered']
    %12 = vsyncpa [#allocation3], 0
    %13 = vsyncpa [#allocation6], 0
    %14 = vsyncpa [#allocation9], 0
    %15 = vsyncpa [#allocation4], 0
    // Predicated region
    $region2: #{tpu_custom_call.1} parent=1 // pred_check
      _
    $region3: #{tpu_custom_call.1} parent=1 // pred_check_branch
      %17 = sbr.rel (0) target = $region5
    $region4: #{tpu_custom_call.1} parent=1 // pred_region
      %s19 = ssub.s32 128, 128
      %20 = vsyncadd [#allocation3], %s19
      %s22 = sshll.u32 [#allocation2], 4
      %s23 = int_to_ptr.vmem [resolvable:$true] %s22
      %25 = dma.hbm_to_vmem [thread:$0]  %s0, 128, %s23, [#allocation3]
    $region5: #{tpu_custom_call.1} parent=1 // pred_fallthru
      _
    // Predicated region
    $region6: #{tpu_custom_call.1} parent=1 // pred_check
      _
    $region7: #{tpu_custom_call.1} parent=1 // pred_check_branch
      %27 = sbr.rel (0) target = $region9
    $region8: #{tpu_custom_call.1} parent=1 // pred_region
      %s29 = ssub.s32 1024, 1024
      %30 = vsyncadd [#allocation6], %s29
      %s31 = sshll.u32 [#allocation5], 4
      %s32 = int_to_ptr.vmem [resolvable:$true] %s31
      %37 = dma.hbm_to_vmem [thread:$0]  %s1, 1024, %s32, [#allocation6], 128, 128, 8
    $region9: #{tpu_custom_call.1} parent=1 // pred_fallthru
      _
    // Predicated region
    $region10: #{tpu_custom_call.1} parent=1 // pred_check
      _
    $region11: #{tpu_custom_call.1} parent=1 // pred_check_branch
      %39 = sbr.rel (0) target = $region13
    $region12: #{tpu_custom_call.1} parent=1 // pred_region
      _
    $region13: #{tpu_custom_call.1} parent=1 // pred_fallthru
      _
    // Predicated region
    $region14: #{tpu_custom_call.1} parent=1 // pred_check
      _
    $region15: #{tpu_custom_call.1} parent=1 // pred_check_branch
      %41 = sbr.rel (0) target = $region17
    $region16: #{tpu_custom_call.1} parent=1 // pred_region
      %s43 = ssub.s32 8192, 8192
      %44 = vsyncadd [#allocation6], %s43
      %s45 = sshll.u32 [#allocation7], 4
      %s46 = int_to_ptr.vmem [resolvable:$true] %s45
      %51 = dma.hbm_to_vmem [thread:$0]  %s3, 8192, %s46, [#allocation6], 256, 256, 16
    $region17: #{tpu_custom_call.1} parent=1 // pred_fallthru
      _
    // Predicated region
    $region18: #{tpu_custom_call.1} parent=1 // pred_check
      _
    $region19: #{tpu_custom_call.1} parent=1 // pred_check_branch
      %53 = sbr.rel (0) target = $region21
    $region20: #{tpu_custom_call.1} parent=1 // pred_region
      %s55 = ssub.s32 64, 64
      %56 = vsyncadd [#allocation9], %s55
      %s58 = sshll.u32 [#allocation8], 4
      %s59 = int_to_ptr.vmem [resolvable:$true] %s58
      %61 = dma.hbm_to_vmem [thread:$0]  %s4, 64, %s59, [#allocation9]
    $region21: #{tpu_custom_call.1} parent=1 // pred_fallthru
      _
    // Predicated region
    $region22: #{tpu_custom_call.1} parent=1 // pred_check
      _
    $region23: #{tpu_custom_call.1} parent=1 // pred_check_branch
      %63 = sbr.rel (0) target = $region25
    $region24: #{tpu_custom_call.1} parent=1 // pred_region
      %s65 = ssub.s32 32768, 32768
      %66 = vsyncadd [#allocation9], %s65
      %s67 = sshll.u32 [#allocation10], 4
      %s68 = int_to_ptr.vmem [resolvable:$true] %s67
      %73 = dma.hbm_to_vmem [thread:$0]  %s5, 32768, %s68, [#allocation9], 512, 512, 32
    $region25: #{tpu_custom_call.1} parent=1 // pred_fallthru
      _
    // Predicated region
    $region26: #{tpu_custom_call.1} parent=1 // pred_check
      _
    $region27: #{tpu_custom_call.1} parent=1 // pred_check_branch
      %75 = sbr.rel (0) target = $region29
    $region28: #{tpu_custom_call.1} parent=1 // pred_region
      _
    $region29: #{tpu_custom_call.1} parent=1 // pred_fallthru
      _
    // Predicated region
    $region30: #{tpu_custom_call.1} parent=1 // pred_check
      _
    $region31: #{tpu_custom_call.1} parent=1 // pred_check_branch
      %77 = sbr.rel (0) target = $region33
    $region32: #{tpu_custom_call.1} parent=1 // pred_region
      %78 = dma.done [#allocation3], 128
    $region33: #{tpu_custom_call.1} parent=1 // pred_fallthru
      _
    // Predicated region
    $region34: #{tpu_custom_call.1} parent=1 // pred_check
      _
    $region35: #{tpu_custom_call.1} parent=1 // pred_check_branch
      %80 = sbr.rel (0) target = $region37
    $region36: #{tpu_custom_call.1} parent=1 // pred_region
      %81 = dma.done [#allocation6], 1024
    $region37: #{tpu_custom_call.1} parent=1 // pred_fallthru
      _
    // Predicated region
    $region38: #{tpu_custom_call.1} parent=1 // pred_check
      _
    $region39: #{tpu_custom_call.1} parent=1 // pred_check_branch
      %83 = sbr.rel (0) target = $region41
    $region40: #{tpu_custom_call.1} parent=1 // pred_region
      %84 = dma.done [#allocation6], 8192
    $region41: #{tpu_custom_call.1} parent=1 // pred_fallthru
      _
    // Predicated region
    $region42: #{tpu_custom_call.1} parent=1 // pred_check
      _
    $region43: #{tpu_custom_call.1} parent=1 // pred_check_branch
      %86 = sbr.rel (0) target = $region45
    $region44: #{tpu_custom_call.1} parent=1 // pred_region
      %87 = dma.done [#allocation9], 64
    $region45: #{tpu_custom_call.1} parent=1 // pred_fallthru
      _
    // Predicated region
    $region46: #{tpu_custom_call.1} parent=1 // pred_check
      _
    $region47: #{tpu_custom_call.1} parent=1 // pred_check_branch
      %89 = sbr.rel (0) target = $region49
    $region48: #{tpu_custom_call.1} parent=1 // pred_region
      %90 = dma.done [#allocation9], 32768
    $region49: #{tpu_custom_call.1} parent=1 // pred_fallthru
      _
    %v92 = vld [vmem:[#allocation2] sm:$0xff]
    %v93 = vpack.c.bf16 %v92, %v92
    %v94 = vld [vmem:[#allocation5] sm:$0xff]
    %v95 = vld [vmem:[#allocation5 + $0x8] sm:$0xff]
    %v96 = vld [vmem:[#allocation5 + $0x10] sm:$0xff]
    %v97 = vld [vmem:[#allocation5 + $0x18] sm:$0xff]
    %v98 = vld [vmem:[#allocation5 + $0x20] sm:$0xff]
    %v99 = vld [vmem:[#allocation5 + $0x28] sm:$0xff]
    %v100 = vld [vmem:[#allocation5 + $0x30] sm:$0xff]
    %v101 = vld [vmem:[#allocation5 + $0x38] sm:$0xff]
    %v102 = vld [vmem:[%s2] sm:$0x3]
    %v104 = vlaneseq
    %v105 = vshrl.u32 %v104, 7
    %v106 = vsub.s32 0, %v105
    %v107 = vrot.slane %v102, %v106
    %v108 = vlaneseq
    %v109 = vshrl.u32 %v108, 7
    %v110 = vsub.s32 1, %v109
    %v111 = vrot.slane %v102, %v110
    %v122 = vunpack.c.l.b16 %v94
    %v123 = vunpack.c.h.b16 %v94
    %v124 = vunpack.c.l.b16 %v95
    %v125 = vunpack.c.h.b16 %v95
    %v126 = vunpack.c.l.b16 %v96
    %v127 = vunpack.c.h.b16 %v96
    %v128 = vunpack.c.l.b16 %v97
    %v129 = vunpack.c.h.b16 %v97
    %v130 = vunpack.c.l.b16 %v98
    %v131 = vunpack.c.h.b16 %v98
    %v132 = vunpack.c.l.b16 %v99
    %v133 = vunpack.c.h.b16 %v99
    %v134 = vunpack.c.l.b16 %v100
    %v135 = vunpack.c.h.b16 %v100
    %v136 = vunpack.c.l.b16 %v101
    %v137 = vunpack.c.h.b16 %v101
    %v138 = vpack.c.b16 %v124, %v122
    %v139 = vpack.c.b16 %v125, %v123
    %v140 = vpack.c.b16 %v128, %v126
    %v141 = vpack.c.b16 %v129, %v127
    %v142 = vpack.c.b16 %v132, %v130
    %v143 = vpack.c.b16 %v133, %v131
    %v144 = vpack.c.b16 %v136, %v134
    %v145 = vpack.c.b16 %v137, %v135
    %vm154 = vcmask 523264
    %v156 = vsel %vm154, %v93, 0
    %158 = vmatprep.subr.bf16.mxu0 0
    %159 = vmatpush1.bf16.msra.mxu0 0
    %160 = vmatprep.subr.bf16.mxu0 0
    %161 = vmatpush1.bf16.msra.mxu0 0
    %162 = vmatprep.subr.bf16.mxu0 0
    %163 = vmatpush1.bf16.msra.mxu0 0
    %164 = vmatprep.subr.bf16.mxu0 0
    %165 = vmatpush1.bf16.msra.mxu0 0
    %166 = vmatprep.subr.bf16.mxu0 %v145
    %167 = vmatpush1.bf16.msra.mxu0 %v144
    %168 = vmatprep.subr.bf16.mxu0 %v143
    %169 = vmatpush1.bf16.msra.mxu0 %v142
    %170 = vmatprep.subr.bf16.mxu0 %v141
    %171 = vmatpush1.bf16.msra.mxu0 %v140
    %172 = vmatprep.subr.bf16.mxu0 %v139
    %173 = vmatpush1.bf16.msra.mxu0 %v138
    %174 = vmatprep.subr.bf16.mxu0 0
    %175 = vmatpush2.bf16.msra.mxu0 0
    %176 = vmatprep.subr.bf16.mxu0 0
    %177 = vmatpush2.bf16.msra.mxu0 0
    %178 = vmatprep.subr.bf16.mxu0 0
    %179 = vmatpush2.bf16.msra.mxu0 0
    %180 = vmatprep.subr.bf16.mxu0 0
    %181 = vmatpush2.bf16.msra.mxu0 0
    %182 = vmatprep.subr.bf16.mxu0 0
    %183 = vmatpush2.bf16.msra.mxu0 0
    %184 = vmatprep.subr.bf16.mxu0 0
    %185 = vmatpush2.bf16.msra.mxu0 0
    %186 = vmatprep.subr.bf16.mxu0 0
    %187 = vmatpush2.bf16.msra.mxu0 0
    %188 = vmatprep.subr.bf16.mxu0 0
    %189 = vmatpush2.bf16.msra.mxu0 0
    %190 = vmatprep.mubr.bf16.mxu0 0
    %191 = vmatmul.mubr.bf16.gmra.mxu0 %v156
    %v192 = vpop.f32.mrf.mxu0
    %v193 = vadd.f32 %v107, %v192
    %v194 = vpop.f32.mrf.mxu0
    %v195 = vadd.f32 %v111, %v194
    %v196 = vpop.f32.mrf.mxu0
    %v197 = vpop.f32.mrf.mxu0
    %198 = vdwg.mxu0
    %v199 = vmax.f32 %v193, 0.0
    %v200 = vmax.f32 %v195, 0.0
    %v201 = vpack.c.bf16 %v199, %v199
    %v202 = vpack.c.bf16 %v200, %v200
    %v203 = vld [vmem:[#allocation7] sm:$0xff]
    %v204 = vld [vmem:[#allocation7 + $0x8] sm:$0xff]
    %v205 = vld [vmem:[#allocation7 + $0x10] sm:$0xff]
    %v206 = vld [vmem:[#allocation7 + $0x18] sm:$0xff]
    %v207 = vld [vmem:[#allocation7 + $0x20] sm:$0xff]
    %v208 = vld [vmem:[#allocation7 + $0x28] sm:$0xff]
    %v209 = vld [vmem:[#allocation7 + $0x30] sm:$0xff]
    %v210 = vld [vmem:[#allocation7 + $0x38] sm:$0xff]
    %v211 = vld [vmem:[#allocation7 + $0x40] sm:$0xff]
    %v212 = vld [vmem:[#allocation7 + $0x48] sm:$0xff]
    %v213 = vld [vmem:[#allocation7 + $0x50] sm:$0xff]
    %v214 = vld [vmem:[#allocation7 + $0x58] sm:$0xff]
    %v215 = vld [vmem:[#allocation7 + $0x60] sm:$0xff]
    %v216 = vld [vmem:[#allocation7 + $0x68] sm:$0xff]
    %v217 = vld [vmem:[#allocation7 + $0x70] sm:$0xff]
    %v218 = vld [vmem:[#allocation7 + $0x78] sm:$0xff]
    %v219 = vld [vmem:[#allocation7 + $0x80] sm:$0xff]
    %v220 = vld [vmem:[#allocation7 + $0x88] sm:$0xff]
    %v221 = vld [vmem:[#allocation7 + $0x90] sm:$0xff]
    %v222 = vld [vmem:[#allocation7 + $0x98] sm:$0xff]
    %v223 = vld [vmem:[#allocation7 + $0xa0] sm:$0xff]
    %v224 = vld [vmem:[#allocation7 + $0xa8] sm:$0xff]
    %v225 = vld [vmem:[#allocation7 + $0xb0] sm:$0xff]
    %v226 = vld [vmem:[#allocation7 + $0xb8] sm:$0xff]
    %v227 = vld [vmem:[#allocation7 + $0xc0] sm:$0xff]
    %v228 = vld [vmem:[#allocation7 + $0xc8] sm:$0xff]
    %v229 = vld [vmem:[#allocation7 + $0xd0] sm:$0xff]
    %v230 = vld [vmem:[#allocation7 + $0xd8] sm:$0xff]
    %v231 = vld [vmem:[#allocation7 + $0xe0] sm:$0xff]
    %v232 = vld [vmem:[#allocation7 + $0xe8] sm:$0xff]
    %v233 = vld [vmem:[#allocation7 + $0xf0] sm:$0xff]
    %v234 = vld [vmem:[#allocation7 + $0xf8] sm:$0xff]
    %v235 = vld [vmem:[#allocation7 + $0x100] sm:$0xff]
    %v236 = vld [vmem:[#allocation7 + $0x108] sm:$0xff]
    %v237 = vld [vmem:[#allocation7 + $0x110] sm:$0xff]
    %v238 = vld [vmem:[#allocation7 + $0x118] sm:$0xff]
    %v239 = vld [vmem:[#allocation7 + $0x120] sm:$0xff]
    %v240 = vld [vmem:[#allocation7 + $0x128] sm:$0xff]
    %v241 = vld [vmem:[#allocation7 + $0x130] sm:$0xff]
    %v242 = vld [vmem:[#allocation7 + $0x138] sm:$0xff]
    %v243 = vld [vmem:[#allocation7 + $0x140] sm:$0xff]
    %v244 = vld [vmem:[#allocation7 + $0x148] sm:$0xff]
    %v245 = vld [vmem:[#allocation7 + $0x150] sm:$0xff]
    %v246 = vld [vmem:[#allocation7 + $0x158] sm:$0xff]
    %v247 = vld [vmem:[#allocation7 + $0x160] sm:$0xff]
    %v248 = vld [vmem:[#allocation7 + $0x168] sm:$0xff]
    %v249 = vld [vmem:[#allocation7 + $0x170] sm:$0xff]
    %v250 = vld [vmem:[#allocation7 + $0x178] sm:$0xff]
    %v251 = vld [vmem:[#allocation7 + $0x180] sm:$0xff]
    %v252 = vld [vmem:[#allocation7 + $0x188] sm:$0xff]
    %v253 = vld [vmem:[#allocation7 + $0x190] sm:$0xff]
    %v254 = vld [vmem:[#allocation7 + $0x198] sm:$0xff]
    %v255 = vld [vmem:[#allocation7 + $0x1a0] sm:$0xff]
    %v256 = vld [vmem:[#allocation7 + $0x1a8] sm:$0xff]
    %v257 = vld [vmem:[#allocation7 + $0x1b0] sm:$0xff]
    %v258 = vld [vmem:[#allocation7 + $0x1b8] sm:$0xff]
    %v259 = vld [vmem:[#allocation7 + $0x1c0] sm:$0xff]
    %v260 = vld [vmem:[#allocation7 + $0x1c8] sm:$0xff]
    %v261 = vld [vmem:[#allocation7 + $0x1d0] sm:$0xff]
    %v262 = vld [vmem:[#allocation7 + $0x1d8] sm:$0xff]
    %v263 = vld [vmem:[#allocation7 + $0x1e0] sm:$0xff]
    %v264 = vld [vmem:[#allocation7 + $0x1e8] sm:$0xff]
    %v265 = vld [vmem:[#allocation7 + $0x1f0] sm:$0xff]
    %v266 = vld [vmem:[#allocation7 + $0x1f8] sm:$0xff]
    %v267 = vld [vmem:[#allocation8] sm:$0xf]
    %v269 = vlaneseq
    %v270 = vshrl.u32 %v269, 7
    %v271 = vsub.s32 0, %v270
    %v272 = vrot.slane %v267, %v271
    %v273 = vlaneseq
    %v274 = vshrl.u32 %v273, 7
    %v275 = vsub.s32 1, %v274
    %v276 = vrot.slane %v267, %v275
    %v277 = vlaneseq
    %v278 = vshrl.u32 %v277, 7
    %v279 = vsub.s32 2, %v278
    %v280 = vrot.slane %v267, %v279
    %v281 = vlaneseq
    %v282 = vshrl.u32 %v281, 7
    %v283 = vsub.s32 3, %v282
    %v284 = vrot.slane %v267, %v283
    %v353 = vunpack.c.l.b16 %v203
    %v354 = vunpack.c.h.b16 %v203
    %v355 = vunpack.c.l.b16 %v204
    %v356 = vunpack.c.h.b16 %v204
    %v357 = vunpack.c.l.b16 %v205
    %v358 = vunpack.c.h.b16 %v205
    %v359 = vunpack.c.l.b16 %v206
    %v360 = vunpack.c.h.b16 %v206
    %v361 = vunpack.c.l.b16 %v207
    %v362 = vunpack.c.h.b16 %v207
    %v363 = vunpack.c.l.b16 %v208
    %v364 = vunpack.c.h.b16 %v208
    %v365 = vunpack.c.l.b16 %v209
    %v366 = vunpack.c.h.b16 %v209
    %v367 = vunpack.c.l.b16 %v210
    %v368 = vunpack.c.h.b16 %v210
    %v369 = vunpack.c.l.b16 %v211
    %v370 = vunpack.c.h.b16 %v211
    %v371 = vunpack.c.l.b16 %v212
    %v372 = vunpack.c.h.b16 %v212
    %v373 = vunpack.c.l.b16 %v213
    %v374 = vunpack.c.h.b16 %v213
    %v375 = vunpack.c.l.b16 %v214
    %v376 = vunpack.c.h.b16 %v214
    %v377 = vunpack.c.l.b16 %v215
    %v378 = vunpack.c.h.b16 %v215
    %v379 = vunpack.c.l.b16 %v216
    %v380 = vunpack.c.h.b16 %v216
    %v381 = vunpack.c.l.b16 %v217
    %v382 = vunpack.c.h.b16 %v217
    %v383 = vunpack.c.l.b16 %v218
    %v384 = vunpack.c.h.b16 %v218
    %v385 = vunpack.c.l.b16 %v219
    %v386 = vunpack.c.h.b16 %v219
    %v387 = vunpack.c.l.b16 %v220
    %v388 = vunpack.c.h.b16 %v220
    %v389 = vunpack.c.l.b16 %v221
    %v390 = vunpack.c.h.b16 %v221
    %v391 = vunpack.c.l.b16 %v222
    %v392 = vunpack.c.h.b16 %v222
    %v393 = vunpack.c.l.b16 %v223
    %v394 = vunpack.c.h.b16 %v223
    %v395 = vunpack.c.l.b16 %v224
    %v396 = vunpack.c.h.b16 %v224
    %v397 = vunpack.c.l.b16 %v225
    %v398 = vunpack.c.h.b16 %v225
    %v399 = vunpack.c.l.b16 %v226
    %v400 = vunpack.c.h.b16 %v226
    %v401 = vunpack.c.l.b16 %v227
    %v402 = vunpack.c.h.b16 %v227
    %v403 = vunpack.c.l.b16 %v228
    %v404 = vunpack.c.h.b16 %v228
    %v405 = vunpack.c.l.b16 %v229
    %v406 = vunpack.c.h.b16 %v229
    %v407 = vunpack.c.l.b16 %v230
    %v408 = vunpack.c.h.b16 %v230
    %v409 = vunpack.c.l.b16 %v231
    %v410 = vunpack.c.h.b16 %v231
    %v411 = vunpack.c.l.b16 %v232
    %v412 = vunpack.c.h.b16 %v232
    %v413 = vunpack.c.l.b16 %v233
    %v414 = vunpack.c.h.b16 %v233
    %v415 = vunpack.c.l.b16 %v234
    %v416 = vunpack.c.h.b16 %v234
    %v417 = vunpack.c.l.b16 %v235
    %v418 = vunpack.c.h.b16 %v235
    %v419 = vunpack.c.l.b16 %v236
    %v420 = vunpack.c.h.b16 %v236
    %v421 = vunpack.c.l.b16 %v237
    %v422 = vunpack.c.h.b16 %v237
    %v423 = vunpack.c.l.b16 %v238
    %v424 = vunpack.c.h.b16 %v238
    %v425 = vunpack.c.l.b16 %v239
    %v426 = vunpack.c.h.b16 %v239
    %v427 = vunpack.c.l.b16 %v240
    %v428 = vunpack.c.h.b16 %v240
    %v429 = vunpack.c.l.b16 %v241
    %v430 = vunpack.c.h.b16 %v241
    %v431 = vunpack.c.l.b16 %v242
    %v432 = vunpack.c.h.b16 %v242
    %v433 = vunpack.c.l.b16 %v243
    %v434 = vunpack.c.h.b16 %v243
    %v435 = vunpack.c.l.b16 %v244
    %v436 = vunpack.c.h.b16 %v244
    %v437 = vunpack.c.l.b16 %v245
    %v438 = vunpack.c.h.b16 %v245
    %v439 = vunpack.c.l.b16 %v246
    %v440 = vunpack.c.h.b16 %v246
    %v441 = vunpack.c.l.b16 %v247
    %v442 = vunpack.c.h.b16 %v247
    %v443 = vunpack.c.l.b16 %v248
    %v444 = vunpack.c.h.b16 %v248
    %v445 = vunpack.c.l.b16 %v249
    %v446 = vunpack.c.h.b16 %v249
    %v447 = vunpack.c.l.b16 %v250
    %v448 = vunpack.c.h.b16 %v250
    %v449 = vunpack.c.l.b16 %v251
    %v450 = vunpack.c.h.b16 %v251
    %v451 = vunpack.c.l.b16 %v252
    %v452 = vunpack.c.h.b16 %v252
    %v453 = vunpack.c.l.b16 %v253
    %v454 = vunpack.c.h.b16 %v253
    %v455 = vunpack.c.l.b16 %v254
    %v456 = vunpack.c.h.b16 %v254
    %v457 = vunpack.c.l.b16 %v255
    %v458 = vunpack.c.h.b16 %v255
    %v459 = vunpack.c.l.b16 %v256
    %v460 = vunpack.c.h.b16 %v256
    %v461 = vunpack.c.l.b16 %v257
    %v462 = vunpack.c.h.b16 %v257
    %v463 = vunpack.c.l.b16 %v258
    %v464 = vunpack.c.h.b16 %v258
    %v465 = vunpack.c.l.b16 %v259
    %v466 = vunpack.c.h.b16 %v259
    %v467 = vunpack.c.l.b16 %v260
    %v468 = vunpack.c.h.b16 %v260
    %v469 = vunpack.c.l.b16 %v261
    %v470 = vunpack.c.h.b16 %v261
    %v471 = vunpack.c.l.b16 %v262
    %v472 = vunpack.c.h.b16 %v262
    %v473 = vunpack.c.l.b16 %v263
    %v474 = vunpack.c.h.b16 %v263
    %v475 = vunpack.c.l.b16 %v264
    %v476 = vunpack.c.h.b16 %v264
    %v477 = vunpack.c.l.b16 %v265
    %v478 = vunpack.c.h.b16 %v265
    %v479 = vunpack.c.l.b16 %v266
    %v480 = vunpack.c.h.b16 %v266
    %v481 = vpack.c.b16 %v357, %v353
    %v482 = vpack.c.b16 %v358, %v354
    %v483 = vpack.c.b16 %v359, %v355
    %v484 = vpack.c.b16 %v360, %v356
    %v485 = vpack.c.b16 %v365, %v361
    %v486 = vpack.c.b16 %v366, %v362
    %v487 = vpack.c.b16 %v367, %v363
    %v488 = vpack.c.b16 %v368, %v364
    %v489 = vpack.c.b16 %v373, %v369
    %v490 = vpack.c.b16 %v374, %v370
    %v491 = vpack.c.b16 %v375, %v371
    %v492 = vpack.c.b16 %v376, %v372
    %v493 = vpack.c.b16 %v381, %v377
    %v494 = vpack.c.b16 %v382, %v378
    %v495 = vpack.c.b16 %v383, %v379
    %v496 = vpack.c.b16 %v384, %v380
    %v497 = vpack.c.b16 %v389, %v385
    %v498 = vpack.c.b16 %v390, %v386
    %v499 = vpack.c.b16 %v391, %v387
    %v500 = vpack.c.b16 %v392, %v388
    %v501 = vpack.c.b16 %v397, %v393
    %v502 = vpack.c.b16 %v398, %v394
    %v503 = vpack.c.b16 %v399, %v395
    %v504 = vpack.c.b16 %v400, %v396
    %v505 = vpack.c.b16 %v405, %v401
    %v506 = vpack.c.b16 %v406, %v402
    %v507 = vpack.c.b16 %v407, %v403
    %v508 = vpack.c.b16 %v408, %v404
    %v509 = vpack.c.b16 %v413, %v409
    %v510 = vpack.c.b16 %v414, %v410
    %v511 = vpack.c.b16 %v415, %v411
    %v512 = vpack.c.b16 %v416, %v412
    %v513 = vpack.c.b16 %v421, %v417
    %v514 = vpack.c.b16 %v422, %v418
    %v515 = vpack.c.b16 %v423, %v419
    %v516 = vpack.c.b16 %v424, %v420
    %v517 = vpack.c.b16 %v429, %v425
    %v518 = vpack.c.b16 %v430, %v426
    %v519 = vpack.c.b16 %v431, %v427
    %v520 = vpack.c.b16 %v432, %v428
    %v521 = vpack.c.b16 %v437, %v433
    %v522 = vpack.c.b16 %v438, %v434
    %v523 = vpack.c.b16 %v439, %v435
    %v524 = vpack.c.b16 %v440, %v436
    %v525 = vpack.c.b16 %v445, %v441
    %v526 = vpack.c.b16 %v446, %v442
    %v527 = vpack.c.b16 %v447, %v443
    %v528 = vpack.c.b16 %v448, %v444
    %v529 = vpack.c.b16 %v453, %v449
    %v530 = vpack.c.b16 %v454, %v450
    %v531 = vpack.c.b16 %v455, %v451
    %v532 = vpack.c.b16 %v456, %v452
    %v533 = vpack.c.b16 %v461, %v457
    %v534 = vpack.c.b16 %v462, %v458
    %v535 = vpack.c.b16 %v463, %v459
    %v536 = vpack.c.b16 %v464, %v460
    %v537 = vpack.c.b16 %v469, %v465
    %v538 = vpack.c.b16 %v470, %v466
    %v539 = vpack.c.b16 %v471, %v467
    %v540 = vpack.c.b16 %v472, %v468
    %v541 = vpack.c.b16 %v477, %v473
    %v542 = vpack.c.b16 %v478, %v474
    %v543 = vpack.c.b16 %v479, %v475
    %v544 = vpack.c.b16 %v480, %v476
    %609 = vmatprep.subr.bf16.mxu0 %v510
    %610 = vmatpush1.bf16.msra.mxu0 %v509
    %611 = vmatprep.subr.bf16.mxu0 %v506
    %612 = vmatpush1.bf16.msra.mxu0 %v505
    %613 = vmatprep.subr.bf16.mxu0 %v502
    %614 = vmatpush1.bf16.msra.mxu0 %v501
    %615 = vmatprep.subr.bf16.mxu0 %v498
    %616 = vmatpush1.bf16.msra.mxu0 %v497
    %617 = vmatprep.subr.bf16.mxu0 %v494
    %618 = vmatpush1.bf16.msra.mxu0 %v493
    %619 = vmatprep.subr.bf16.mxu0 %v490
    %620 = vmatpush1.bf16.msra.mxu0 %v489
    %621 = vmatprep.subr.bf16.mxu0 %v486
    %622 = vmatpush1.bf16.msra.mxu0 %v485
    %623 = vmatprep.subr.bf16.mxu0 %v482
    %624 = vmatpush1.bf16.msra.mxu0 %v481
    %625 = vmatprep.subr.bf16.mxu0 %v542
    %626 = vmatpush2.bf16.msra.mxu0 %v541
    %627 = vmatprep.subr.bf16.mxu0 %v538
    %628 = vmatpush2.bf16.msra.mxu0 %v537
    %629 = vmatprep.subr.bf16.mxu0 %v534
    %630 = vmatpush2.bf16.msra.mxu0 %v533
    %631 = vmatprep.subr.bf16.mxu0 %v530
    %632 = vmatpush2.bf16.msra.mxu0 %v529
    %633 = vmatprep.subr.bf16.mxu0 %v526
    %634 = vmatpush2.bf16.msra.mxu0 %v525
    %635 = vmatprep.subr.bf16.mxu0 %v522
    %636 = vmatpush2.bf16.msra.mxu0 %v521
    %637 = vmatprep.subr.bf16.mxu0 %v518
    %638 = vmatpush2.bf16.msra.mxu0 %v517
    %639 = vmatprep.subr.bf16.mxu0 %v514
    %640 = vmatpush2.bf16.msra.mxu0 %v513
    %641 = vmatprep.mubr.bf16.mxu0 %v202
    %642 = vmatmul.mubr.bf16.gmra.mxu0 %v201
    %v643 = vpop.f32.mrf.mxu0
    %v644 = vadd.f32 %v272, %v643
    %v645 = vpop.f32.mrf.mxu0
    %v646 = vadd.f32 %v276, %v645
    %v647 = vpop.f32.mrf.mxu0
    %v648 = vpop.f32.mrf.mxu0
    %649 = vdwg.mxu0
    %650 = vmatprep.subr.bf16.mxu0 %v512
    %651 = vmatpush1.bf16.msra.mxu0 %v511
    %652 = vmatprep.subr.bf16.mxu0 %v508
    %653 = vmatpush1.bf16.msra.mxu0 %v507
    %654 = vmatprep.subr.bf16.mxu0 %v504
    %655 = vmatpush1.bf16.msra.mxu0 %v503
    %656 = vmatprep.subr.bf16.mxu0 %v500
    %657 = vmatpush1.bf16.msra.mxu0 %v499
    %658 = vmatprep.subr.bf16.mxu0 %v496
    %659 = vmatpush1.bf16.msra.mxu0 %v495
    %660 = vmatprep.subr.bf16.mxu0 %v492
    %661 = vmatpush1.bf16.msra.mxu0 %v491
    %662 = vmatprep.subr.bf16.mxu0 %v488
    %663 = vmatpush1.bf16.msra.mxu0 %v487
    %664 = vmatprep.subr.bf16.mxu0 %v484
    %665 = vmatpush1.bf16.msra.mxu0 %v483
    %666 = vmatprep.subr.bf16.mxu0 %v544
    %667 = vmatpush2.bf16.msra.mxu0 %v543
    %668 = vmatprep.subr.bf16.mxu0 %v540
    %669 = vmatpush2.bf16.msra.mxu0 %v539
    %670 = vmatprep.subr.bf16.mxu0 %v536
    %671 = vmatpush2.bf16.msra.mxu0 %v535
    %672 = vmatprep.subr.bf16.mxu0 %v532
    %673 = vmatpush2.bf16.msra.mxu0 %v531
    %674 = vmatprep.subr.bf16.mxu0 %v528
    %675 = vmatpush2.bf16.msra.mxu0 %v527
    %676 = vmatprep.subr.bf16.mxu0 %v524
    %677 = vmatpush2.bf16.msra.mxu0 %v523
    %678 = vmatprep.subr.bf16.mxu0 %v520
    %679 = vmatpush2.bf16.msra.mxu0 %v519
    %680 = vmatprep.subr.bf16.mxu0 %v516
    %681 = vmatpush2.bf16.msra.mxu0 %v515
    %682 = vmatprep.mubr.bf16.mxu0 %v202
    %683 = vmatmul.mubr.bf16.gmra.mxu0 %v201
    %v684 = vpop.f32.mrf.mxu0
    %v685 = vadd.f32 %v280, %v684
    %v686 = vpop.f32.mrf.mxu0
    %v687 = vadd.f32 %v284, %v686
    %v688 = vpop.f32.mrf.mxu0
    %v689 = vpop.f32.mrf.mxu0
    %690 = vdwg.mxu0
    %v691 = vmax.f32 %v644, 0.0
    %v692 = vmax.f32 %v646, 0.0
    %v693 = vmax.f32 %v685, 0.0
    %v694 = vmax.f32 %v687, 0.0
    %v695 = vpack.c.bf16 %v691, %v691
    %v696 = vpack.c.bf16 %v692, %v692
    %v697 = vpack.c.bf16 %v693, %v693
    %v698 = vpack.c.bf16 %v694, %v694
    %v699 = vld [vmem:[#allocation10] sm:$0xff]
    %v700 = vld [vmem:[#allocation10 + $0x8] sm:$0xff]
    %v701 = vld [vmem:[#allocation10 + $0x10] sm:$0xff]
    %v702 = vld [vmem:[#allocation10 + $0x18] sm:$0xff]
    %v703 = vld [vmem:[#allocation10 + $0x20] sm:$0xff]
    %v704 = vld [vmem:[#allocation10 + $0x28] sm:$0xff]
    %v705 = vld [vmem:[#allocation10 + $0x30] sm:$0xff]
    %v706 = vld [vmem:[#allocation10 + $0x38] sm:$0xff]
    %v707 = vld [vmem:[#allocation10 + $0x40] sm:$0xff]
    %v708 = vld [vmem:[#allocation10 + $0x48] sm:$0xff]
    %v709 = vld [vmem:[#allocation10 + $0x50] sm:$0xff]
    %v710 = vld [vmem:[#allocation10 + $0x58] sm:$0xff]
    %v711 = vld [vmem:[#allocation10 + $0x60] sm:$0xff]
    %v712 = vld [vmem:[#allocation10 + $0x68] sm:$0xff]
    %v713 = vld [vmem:[#allocation10 + $0x70] sm:$0xff]
    %v714 = vld [vmem:[#allocation10 + $0x78] sm:$0xff]
    %v715 = vld [vmem:[#allocation10 + $0x80] sm:$0xff]
    %v716 = vld [vmem:[#allocation10 + $0x88] sm:$0xff]
    %v717 = vld [vmem:[#allocation10 + $0x90] sm:$0xff]
    %v718 = vld [vmem:[#allocation10 + $0x98] sm:$0xff]
    %v719 = vld [vmem:[#allocation10 + $0xa0] sm:$0xff]
    %v720 = vld [vmem:[#allocation10 + $0xa8] sm:$0xff]
    %v721 = vld [vmem:[#allocation10 + $0xb0] sm:$0xff]
    %v722 = vld [vmem:[#allocation10 + $0xb8] sm:$0xff]
    %v723 = vld [vmem:[#allocation10 + $0xc0] sm:$0xff]
    %v724 = vld [vmem:[#allocation10 + $0xc8] sm:$0xff]
    %v725 = vld [vmem:[#allocation10 + $0xd0] sm:$0xff]
    %v726 = vld [vmem:[#allocation10 + $0xd8] sm:$0xff]
    %v727 = vld [vmem:[#allocation10 + $0xe0] sm:$0xff]
    %v728 = vld [vmem:[#allocation10 + $0xe8] sm:$0xff]
    %v729 = vld [vmem:[#allocation10 + $0xf0] sm:$0xff]
    %v730 = vld [vmem:[#allocation10 + $0xf8] sm:$0xff]
    %v731 = vld [vmem:[#allocation10 + $0x100] sm:$0xff]
    %v732 = vld [vmem:[#allocation10 + $0x108] sm:$0xff]
    %v733 = vld [vmem:[#allocation10 + $0x110] sm:$0xff]
    %v734 = vld [vmem:[#allocation10 + $0x118] sm:$0xff]
    %v735 = vld [vmem:[#allocation10 + $0x120] sm:$0xff]
    %v736 = vld [vmem:[#allocation10 + $0x128] sm:$0xff]
    %v737 = vld [vmem:[#allocation10 + $0x130] sm:$0xff]
    %v738 = vld [vmem:[#allocation10 + $0x138] sm:$0xff]
    %v739 = vld [vmem:[#allocation10 + $0x140] sm:$0xff]
    %v740 = vld [vmem:[#allocation10 + $0x148] sm:$0xff]
    %v741 = vld [vmem:[#allocation10 + $0x150] sm:$0xff]
    %v742 = vld [vmem:[#allocation10 + $0x158] sm:$0xff]
    %v743 = vld [vmem:[#allocation10 + $0x160] sm:$0xff]
    %v744 = vld [vmem:[#allocation10 + $0x168] sm:$0xff]
    %v745 = vld [vmem:[#allocation10 + $0x170] sm:$0xff]
    %v746 = vld [vmem:[#allocation10 + $0x178] sm:$0xff]
    %v747 = vld [vmem:[#allocation10 + $0x180] sm:$0xff]
    %v748 = vld [vmem:[#allocation10 + $0x188] sm:$0xff]
    %v749 = vld [vmem:[#allocation10 + $0x190] sm:$0xff]
    %v750 = vld [vmem:[#allocation10 + $0x198] sm:$0xff]
    %v751 = vld [vmem:[#allocation10 + $0x1a0] sm:$0xff]
    %v752 = vld [vmem:[#allocation10 + $0x1a8] sm:$0xff]
    %v753 = vld [vmem:[#allocation10 + $0x1b0] sm:$0xff]
    %v754 = vld [vmem:[#allocation10 + $0x1b8] sm:$0xff]
    %v755 = vld [vmem:[#allocation10 + $0x1c0] sm:$0xff]
    %v756 = vld [vmem:[#allocation10 + $0x1c8] sm:$0xff]
    %v757 = vld [vmem:[#allocation10 + $0x1d0] sm:$0xff]
    %v758 = vld [vmem:[#allocation10 + $0x1d8] sm:$0xff]
    %v759 = vld [vmem:[#allocation10 + $0x1e0] sm:$0xff]
    %v760 = vld [vmem:[#allocation10 + $0x1e8] sm:$0xff]
    %v761 = vld [vmem:[#allocation10 + $0x1f0] sm:$0xff]
    %v762 = vld [vmem:[#allocation10 + $0x1f8] sm:$0xff]
    %v763 = vld [vmem:[#allocation10 + $0x200] sm:$0xff]
    %v764 = vld [vmem:[#allocation10 + $0x208] sm:$0xff]
    %v765 = vld [vmem:[#allocation10 + $0x210] sm:$0xff]
    %v766 = vld [vmem:[#allocation10 + $0x218] sm:$0xff]
    %v767 = vld [vmem:[#allocation10 + $0x220] sm:$0xff]
    %v768 = vld [vmem:[#allocation10 + $0x228] sm:$0xff]
    %v769 = vld [vmem:[#allocation10 + $0x230] sm:$0xff]
    %v770 = vld [vmem:[#allocation10 + $0x238] sm:$0xff]
    %v771 = vld [vmem:[#allocation10 + $0x240] sm:$0xff]
    %v772 = vld [vmem:[#allocation10 + $0x248] sm:$0xff]
    %v773 = vld [vmem:[#allocation10 + $0x250] sm:$0xff]
    %v774 = vld [vmem:[#allocation10 + $0x258] sm:$0xff]
    %v775 = vld [vmem:[#allocation10 + $0x260] sm:$0xff]
    %v776 = vld [vmem:[#allocation10 + $0x268] sm:$0xff]
    %v777 = vld [vmem:[#allocation10 + $0x270] sm:$0xff]
    %v778 = vld [vmem:[#allocation10 + $0x278] sm:$0xff]
    %v779 = vld [vmem:[#allocation10 + $0x280] sm:$0xff]
    %v780 = vld [vmem:[#allocation10 + $0x288] sm:$0xff]
    %v781 = vld [vmem:[#allocation10 + $0x290] sm:$0xff]
    %v782 = vld [vmem:[#allocation10 + $0x298] sm:$0xff]
    %v783 = vld [vmem:[#allocation10 + $0x2a0] sm:$0xff]
    %v784 = vld [vmem:[#allocation10 + $0x2a8] sm:$0xff]
    %v785 = vld [vmem:[#allocation10 + $0x2b0] sm:$0xff]
    %v786 = vld [vmem:[#allocation10 + $0x2b8] sm:$0xff]
    %v787 = vld [vmem:[#allocation10 + $0x2c0] sm:$0xff]
    %v788 = vld [vmem:[#allocation10 + $0x2c8] sm:$0xff]
    %v789 = vld [vmem:[#allocation10 + $0x2d0] sm:$0xff]
    %v790 = vld [vmem:[#allocation10 + $0x2d8] sm:$0xff]
    %v791 = vld [vmem:[#allocation10 + $0x2e0] sm:$0xff]
    %v792 = vld [vmem:[#allocation10 + $0x2e8] sm:$0xff]
    %v793 = vld [vmem:[#allocation10 + $0x2f0] sm:$0xff]
    %v794 = vld [vmem:[#allocation10 + $0x2f8] sm:$0xff]
    %v795 = vld [vmem:[#allocation10 + $0x300] sm:$0xff]
    %v796 = vld [vmem:[#allocation10 + $0x308] sm:$0xff]
    %v797 = vld [vmem:[#allocation10 + $0x310] sm:$0xff]
    %v798 = vld [vmem:[#allocation10 + $0x318] sm:$0xff]
    %v799 = vld [vmem:[#allocation10 + $0x320] sm:$0xff]
    %v800 = vld [vmem:[#allocation10 + $0x328] sm:$0xff]
    %v801 = vld [vmem:[#allocation10 + $0x330] sm:$0xff]
    %v802 = vld [vmem:[#allocation10 + $0x338] sm:$0xff]
    %v803 = vld [vmem:[#allocation10 + $0x340] sm:$0xff]
    %v804 = vld [vmem:[#allocation10 + $0x348] sm:$0xff]
    %v805 = vld [vmem:[#allocation10 + $0x350] sm:$0xff]
    %v806 = vld [vmem:[#allocation10 + $0x358] sm:$0xff]
    %v807 = vld [vmem:[#allocation10 + $0x360] sm:$0xff]
    %v808 = vld [vmem:[#allocation10 + $0x368] sm:$0xff]
    %v809 = vld [vmem:[#allocation10 + $0x370] sm:$0xff]
    %v810 = vld [vmem:[#allocation10 + $0x378] sm:$0xff]
    %v811 = vld [vmem:[#allocation10 + $0x380] sm:$0xff]
    %v812 = vld [vmem:[#allocation10 + $0x388] sm:$0xff]
    %v813 = vld [vmem:[#allocation10 + $0x390] sm:$0xff]
    %v814 = vld [vmem:[#allocation10 + $0x398] sm:$0xff]
    %v815 = vld [vmem:[#allocation10 + $0x3a0] sm:$0xff]
    %v816 = vld [vmem:[#allocation10 + $0x3a8] sm:$0xff]
    %v817 = vld [vmem:[#allocation10 + $0x3b0] sm:$0xff]
    %v818 = vld [vmem:[#allocation10 + $0x3b8] sm:$0xff]
    %v819 = vld [vmem:[#allocation10 + $0x3c0] sm:$0xff]
    %v820 = vld [vmem:[#allocation10 + $0x3c8] sm:$0xff]
    %v821 = vld [vmem:[#allocation10 + $0x3d0] sm:$0xff]
    %v822 = vld [vmem:[#allocation10 + $0x3d8] sm:$0xff]
    %v823 = vld [vmem:[#allocation10 + $0x3e0] sm:$0xff]
    %v824 = vld [vmem:[#allocation10 + $0x3e8] sm:$0xff]
    %v825 = vld [vmem:[#allocation10 + $0x3f0] sm:$0xff]
    %v826 = vld [vmem:[#allocation10 + $0x3f8] sm:$0xff]
    %v827 = vld [vmem:[#allocation10 + $0x400] sm:$0xff]
    %v828 = vld [vmem:[#allocation10 + $0x408] sm:$0xff]
    %v829 = vld [vmem:[#allocation10 + $0x410] sm:$0xff]
    %v830 = vld [vmem:[#allocation10 + $0x418] sm:$0xff]
    %v831 = vld [vmem:[#allocation10 + $0x420] sm:$0xff]
    %v832 = vld [vmem:[#allocation10 + $0x428] sm:$0xff]
    %v833 = vld [vmem:[#allocation10 + $0x430] sm:$0xff]
    %v834 = vld [vmem:[#allocation10 + $0x438] sm:$0xff]
    %v835 = vld [vmem:[#allocation10 + $0x440] sm:$0xff]
    %v836 = vld [vmem:[#allocation10 + $0x448] sm:$0xff]
    %v837 = vld [vmem:[#allocation10 + $0x450] sm:$0xff]
    %v838 = vld [vmem:[#allocation10 + $0x458] sm:$0xff]
    %v839 = vld [vmem:[#allocation10 + $0x460] sm:$0xff]
    %v840 = vld [vmem:[#allocation10 + $0x468] sm:$0xff]
    %v841 = vld [vmem:[#allocation10 + $0x470] sm:$0xff]
    %v842 = vld [vmem:[#allocation10 + $0x478] sm:$0xff]
    %v843 = vld [vmem:[#allocation10 + $0x480] sm:$0xff]
    %v844 = vld [vmem:[#allocation10 + $0x488] sm:$0xff]
    %v845 = vld [vmem:[#allocation10 + $0x490] sm:$0xff]
    %v846 = vld [vmem:[#allocation10 + $0x498] sm:$0xff]
    %v847 = vld [vmem:[#allocation10 + $0x4a0] sm:$0xff]
    %v848 = vld [vmem:[#allocation10 + $0x4a8] sm:$0xff]
    %v849 = vld [vmem:[#allocation10 + $0x4b0] sm:$0xff]
    %v850 = vld [vmem:[#allocation10 + $0x4b8] sm:$0xff]
    %v851 = vld [vmem:[#allocation10 + $0x4c0] sm:$0xff]
    %v852 = vld [vmem:[#allocation10 + $0x4c8] sm:$0xff]
    %v853 = vld [vmem:[#allocation10 + $0x4d0] sm:$0xff]
    %v854 = vld [vmem:[#allocation10 + $0x4d8] sm:$0xff]
    %v855 = vld [vmem:[#allocation10 + $0x4e0] sm:$0xff]
    %v856 = vld [vmem:[#allocation10 + $0x4e8] sm:$0xff]
    %v857 = vld [vmem:[#allocation10 + $0x4f0] sm:$0xff]
    %v858 = vld [vmem:[#allocation10 + $0x4f8] sm:$0xff]
    %v859 = vld [vmem:[#allocation10 + $0x500] sm:$0xff]
    %v860 = vld [vmem:[#allocation10 + $0x508] sm:$0xff]
    %v861 = vld [vmem:[#allocation10 + $0x510] sm:$0xff]
    %v862 = vld [vmem:[#allocation10 + $0x518] sm:$0xff]
    %v863 = vld [vmem:[#allocation10 + $0x520] sm:$0xff]
    %v864 = vld [vmem:[#allocation10 + $0x528] sm:$0xff]
    %v865 = vld [vmem:[#allocation10 + $0x530] sm:$0xff]
    %v866 = vld [vmem:[#allocation10 + $0x538] sm:$0xff]
    %v867 = vld [vmem:[#allocation10 + $0x540] sm:$0xff]
    %v868 = vld [vmem:[#allocation10 + $0x548] sm:$0xff]
    %v869 = vld [vmem:[#allocation10 + $0x550] sm:$0xff]
    %v870 = vld [vmem:[#allocation10 + $0x558] sm:$0xff]
    %v871 = vld [vmem:[#allocation10 + $0x560] sm:$0xff]
    %v872 = vld [vmem:[#allocation10 + $0x568] sm:$0xff]
    %v873 = vld [vmem:[#allocation10 + $0x570] sm:$0xff]
    %v874 = vld [vmem:[#allocation10 + $0x578] sm:$0xff]
    %v875 = vld [vmem:[#allocation10 + $0x580] sm:$0xff]
    %v876 = vld [vmem:[#allocation10 + $0x588] sm:$0xff]
    %v877 = vld [vmem:[#allocation10 + $0x590] sm:$0xff]
    %v878 = vld [vmem:[#allocation10 + $0x598] sm:$0xff]
    %v879 = vld [vmem:[#allocation10 + $0x5a0] sm:$0xff]
    %v880 = vld [vmem:[#allocation10 + $0x5a8] sm:$0xff]
    %v881 = vld [vmem:[#allocation10 + $0x5b0] sm:$0xff]
    %v882 = vld [vmem:[#allocation10 + $0x5b8] sm:$0xff]
    %v883 = vld [vmem:[#allocation10 + $0x5c0] sm:$0xff]
    %v884 = vld [vmem:[#allocation10 + $0x5c8] sm:$0xff]
    %v885 = vld [vmem:[#allocation10 + $0x5d0] sm:$0xff]
    %v886 = vld [vmem:[#allocation10 + $0x5d8] sm:$0xff]
    %v887 = vld [vmem:[#allocation10 + $0x5e0] sm:$0xff]
    %v888 = vld [vmem:[#allocation10 + $0x5e8] sm:$0xff]
    %v889 = vld [vmem:[#allocation10 + $0x5f0] sm:$0xff]
    %v890 = vld [vmem:[#allocation10 + $0x5f8] sm:$0xff]
    %v891 = vld [vmem:[#allocation10 + $0x600] sm:$0xff]
    %v892 = vld [vmem:[#allocation10 + $0x608] sm:$0xff]
    %v893 = vld [vmem:[#allocation10 + $0x610] sm:$0xff]
    %v894 = vld [vmem:[#allocation10 + $0x618] sm:$0xff]
    %v895 = vld [vmem:[#allocation10 + $0x620] sm:$0xff]
    %v896 = vld [vmem:[#allocation10 + $0x628] sm:$0xff]
    %v897 = vld [vmem:[#allocation10 + $0x630] sm:$0xff]
    %v898 = vld [vmem:[#allocation10 + $0x638] sm:$0xff]
    %v899 = vld [vmem:[#allocation10 + $0x640] sm:$0xff]
    %v900 = vld [vmem:[#allocation10 + $0x648] sm:$0xff]
    %v901 = vld [vmem:[#allocation10 + $0x650] sm:$0xff]
    %v902 = vld [vmem:[#allocation10 + $0x658] sm:$0xff]
    %v903 = vld [vmem:[#allocation10 + $0x660] sm:$0xff]
    %v904 = vld [vmem:[#allocation10 + $0x668] sm:$0xff]
    %v905 = vld [vmem:[#allocation10 + $0x670] sm:$0xff]
    %v906 = vld [vmem:[#allocation10 + $0x678] sm:$0xff]
    %v907 = vld [vmem:[#allocation10 + $0x680] sm:$0xff]
    %v908 = vld [vmem:[#allocation10 + $0x688] sm:$0xff]
    %v909 = vld [vmem:[#allocation10 + $0x690] sm:$0xff]
    %v910 = vld [vmem:[#allocation10 + $0x698] sm:$0xff]
    %v911 = vld [vmem:[#allocation10 + $0x6a0] sm:$0xff]
    %v912 = vld [vmem:[#allocation10 + $0x6a8] sm:$0xff]
    %v913 = vld [vmem:[#allocation10 + $0x6b0] sm:$0xff]
    %v914 = vld [vmem:[#allocation10 + $0x6b8] sm:$0xff]
    %v915 = vld [vmem:[#allocation10 + $0x6c0] sm:$0xff]
    %v916 = vld [vmem:[#allocation10 + $0x6c8] sm:$0xff]
    %v917 = vld [vmem:[#allocation10 + $0x6d0] sm:$0xff]
    %v918 = vld [vmem:[#allocation10 + $0x6d8] sm:$0xff]
    %v919 = vld [vmem:[#allocation10 + $0x6e0] sm:$0xff]
    %v920 = vld [vmem:[#allocation10 + $0x6e8] sm:$0xff]
    %v921 = vld [vmem:[#allocation10 + $0x6f0] sm:$0xff]
    %v922 = vld [vmem:[#allocation10 + $0x6f8] sm:$0xff]
    %v923 = vld [vmem:[#allocation10 + $0x700] sm:$0xff]
    %v924 = vld [vmem:[#allocation10 + $0x708] sm:$0xff]
    %v925 = vld [vmem:[#allocation10 + $0x710] sm:$0xff]
    %v926 = vld [vmem:[#allocation10 + $0x718] sm:$0xff]
    %v927 = vld [vmem:[#allocation10 + $0x720] sm:$0xff]
    %v928 = vld [vmem:[#allocation10 + $0x728] sm:$0xff]
    %v929 = vld [vmem:[#allocation10 + $0x730] sm:$0xff]
    %v930 = vld [vmem:[#allocation10 + $0x738] sm:$0xff]
    %v931 = vld [vmem:[#allocation10 + $0x740] sm:$0xff]
    %v932 = vld [vmem:[#allocation10 + $0x748] sm:$0xff]
    %v933 = vld [vmem:[#allocation10 + $0x750] sm:$0xff]
    %v934 = vld [vmem:[#allocation10 + $0x758] sm:$0xff]
    %v935 = vld [vmem:[#allocation10 + $0x760] sm:$0xff]
    %v936 = vld [vmem:[#allocation10 + $0x768] sm:$0xff]
    %v937 = vld [vmem:[#allocation10 + $0x770] sm:$0xff]
    %v938 = vld [vmem:[#allocation10 + $0x778] sm:$0xff]
    %v939 = vld [vmem:[#allocation10 + $0x780] sm:$0xff]
    %v940 = vld [vmem:[#allocation10 + $0x788] sm:$0xff]
    %v941 = vld [vmem:[#allocation10 + $0x790] sm:$0xff]
    %v942 = vld [vmem:[#allocation10 + $0x798] sm:$0xff]
    %v943 = vld [vmem:[#allocation10 + $0x7a0] sm:$0xff]
    %v944 = vld [vmem:[#allocation10 + $0x7a8] sm:$0xff]
    %v945 = vld [vmem:[#allocation10 + $0x7b0] sm:$0xff]
    %v946 = vld [vmem:[#allocation10 + $0x7b8] sm:$0xff]
    %v947 = vld [vmem:[#allocation10 + $0x7c0] sm:$0xff]
    %v948 = vld [vmem:[#allocation10 + $0x7c8] sm:$0xff]
    %v949 = vld [vmem:[#allocation10 + $0x7d0] sm:$0xff]
    %v950 = vld [vmem:[#allocation10 + $0x7d8] sm:$0xff]
    %v951 = vld [vmem:[#allocation10 + $0x7e0] sm:$0xff]
    %v952 = vld [vmem:[#allocation10 + $0x7e8] sm:$0xff]
    %v953 = vld [vmem:[#allocation10 + $0x7f0] sm:$0xff]
    %v954 = vld [vmem:[#allocation10 + $0x7f8] sm:$0xff]
    %v955 = vld [vmem:[%s6] sm:$0xff]
    %v957 = vlaneseq
    %v958 = vshrl.u32 %v957, 7
    %v959 = vsub.s32 0, %v958
    %v960 = vrot.slane %v955, %v959
    %v961 = vlaneseq
    %v962 = vshrl.u32 %v961, 7
    %v963 = vsub.s32 1, %v962
    %v964 = vrot.slane %v955, %v963
    %v965 = vlaneseq
    %v966 = vshrl.u32 %v965, 7
    %v967 = vsub.s32 2, %v966
    %v968 = vrot.slane %v955, %v967
    %v969 = vlaneseq
    %v970 = vshrl.u32 %v969, 7
    %v971 = vsub.s32 3, %v970
    %v972 = vrot.slane %v955, %v971
    %v973 = vlaneseq
    %v974 = vshrl.u32 %v973, 7
    %v975 = vsub.s32 4, %v974
    %v976 = vrot.slane %v955, %v975
    %v977 = vlaneseq
    %v978 = vshrl.u32 %v977, 7
    %v979 = vsub.s32 5, %v978
    %v980 = vrot.slane %v955, %v979
    %v981 = vlaneseq
    %v982 = vshrl.u32 %v981, 7
    %v983 = vsub.s32 6, %v982
    %v984 = vrot.slane %v955, %v983
    %v985 = vlaneseq
    %v986 = vshrl.u32 %v985, 7
    %v987 = vsub.s32 7, %v986
    %v988 = vrot.slane %v955, %v987
    %v1253 = vunpack.c.l.b16 %v699
    %v1254 = vunpack.c.h.b16 %v699
    %v1255 = vunpack.c.l.b16 %v700
    %v1256 = vunpack.c.h.b16 %v700
    %v1257 = vunpack.c.l.b16 %v701
    %v1258 = vunpack.c.h.b16 %v701
    %v1259 = vunpack.c.l.b16 %v702
    %v1260 = vunpack.c.h.b16 %v702
    %v1261 = vunpack.c.l.b16 %v703
    %v1262 = vunpack.c.h.b16 %v703
    %v1263 = vunpack.c.l.b16 %v704
    %v1264 = vunpack.c.h.b16 %v704
    %v1265 = vunpack.c.l.b16 %v705
    %v1266 = vunpack.c.h.b16 %v705
    %v1267 = vunpack.c.l.b16 %v706
    %v1268 = vunpack.c.h.b16 %v706
    %v1269 = vunpack.c.l.b16 %v707
    %v1270 = vunpack.c.h.b16 %v707
    %v1271 = vunpack.c.l.b16 %v708
    %v1272 = vunpack.c.h.b16 %v708
    %v1273 = vunpack.c.l.b16 %v709
    %v1274 = vunpack.c.h.b16 %v709
    %v1275 = vunpack.c.l.b16 %v710
    %v1276 = vunpack.c.h.b16 %v710
    %v1277 = vunpack.c.l.b16 %v711
    %v1278 = vunpack.c.h.b16 %v711
    %v1279 = vunpack.c.l.b16 %v712
    %v1280 = vunpack.c.h.b16 %v712
    %v1281 = vunpack.c.l.b16 %v713
    %v1282 = vunpack.c.h.b16 %v713
    %v1283 = vunpack.c.l.b16 %v714
    %v1284 = vunpack.c.h.b16 %v714
    %v1285 = vunpack.c.l.b16 %v715
    %v1286 = vunpack.c.h.b16 %v715
    %v1287 = vunpack.c.l.b16 %v716
    %v1288 = vunpack.c.h.b16 %v716
    %v1289 = vunpack.c.l.b16 %v717
    %v1290 = vunpack.c.h.b16 %v717
    %v1291 = vunpack.c.l.b16 %v718
    %v1292 = vunpack.c.h.b16 %v718
    %v1293 = vunpack.c.l.b16 %v719
    %v1294 = vunpack.c.h.b16 %v719
    %v1295 = vunpack.c.l.b16 %v720
    %v1296 = vunpack.c.h.b16 %v720
    %v1297 = vunpack.c.l.b16 %v721
    %v1298 = vunpack.c.h.b16 %v721
    %v1299 = vunpack.c.l.b16 %v722
    %v1300 = vunpack.c.h.b16 %v722
    %v1301 = vunpack.c.l.b16 %v723
    %v1302 = vunpack.c.h.b16 %v723
    %v1303 = vunpack.c.l.b16 %v724
    %v1304 = vunpack.c.h.b16 %v724
    %v1305 = vunpack.c.l.b16 %v725
    %v1306 = vunpack.c.h.b16 %v725
    %v1307 = vunpack.c.l.b16 %v726
    %v1308 = vunpack.c.h.b16 %v726
    %v1309 = vunpack.c.l.b16 %v727
    %v1310 = vunpack.c.h.b16 %v727
    %v1311 = vunpack.c.l.b16 %v728
    %v1312 = vunpack.c.h.b16 %v728
    %v1313 = vunpack.c.l.b16 %v729
    %v1314 = vunpack.c.h.b16 %v729
    %v1315 = vunpack.c.l.b16 %v730
    %v1316 = vunpack.c.h.b16 %v730
    %v1317 = vunpack.c.l.b16 %v731
    %v1318 = vunpack.c.h.b16 %v731
    %v1319 = vunpack.c.l.b16 %v732
    %v1320 = vunpack.c.h.b16 %v732
    %v1321 = vunpack.c.l.b16 %v733
    %v1322 = vunpack.c.h.b16 %v733
    %v1323 = vunpack.c.l.b16 %v734
    %v1324 = vunpack.c.h.b16 %v734
    %v1325 = vunpack.c.l.b16 %v735
    %v1326 = vunpack.c.h.b16 %v735
    %v1327 = vunpack.c.l.b16 %v736
    %v1328 = vunpack.c.h.b16 %v736
    %v1329 = vunpack.c.l.b16 %v737
    %v1330 = vunpack.c.h.b16 %v737
    %v1331 = vunpack.c.l.b16 %v738
    %v1332 = vunpack.c.h.b16 %v738
    %v1333 = vunpack.c.l.b16 %v739
    %v1334 = vunpack.c.h.b16 %v739
    %v1335 = vunpack.c.l.b16 %v740
    %v1336 = vunpack.c.h.b16 %v740
    %v1337 = vunpack.c.l.b16 %v741
    %v1338 = vunpack.c.h.b16 %v741
    %v1339 = vunpack.c.l.b16 %v742
    %v1340 = vunpack.c.h.b16 %v742
    %v1341 = vunpack.c.l.b16 %v743
    %v1342 = vunpack.c.h.b16 %v743
    %v1343 = vunpack.c.l.b16 %v744
    %v1344 = vunpack.c.h.b16 %v744
    %v1345 = vunpack.c.l.b16 %v745
    %v1346 = vunpack.c.h.b16 %v745
    %v1347 = vunpack.c.l.b16 %v746
    %v1348 = vunpack.c.h.b16 %v746
    %v1349 = vunpack.c.l.b16 %v747
    %v1350 = vunpack.c.h.b16 %v747
    %v1351 = vunpack.c.l.b16 %v748
    %v1352 = vunpack.c.h.b16 %v748
    %v1353 = vunpack.c.l.b16 %v749
    %v1354 = vunpack.c.h.b16 %v749
    %v1355 = vunpack.c.l.b16 %v750
    %v1356 = vunpack.c.h.b16 %v750
    %v1357 = vunpack.c.l.b16 %v751
    %v1358 = vunpack.c.h.b16 %v751
    %v1359 = vunpack.c.l.b16 %v752
    %v1360 = vunpack.c.h.b16 %v752
    %v1361 = vunpack.c.l.b16 %v753
    %v1362 = vunpack.c.h.b16 %v753
    %v1363 = vunpack.c.l.b16 %v754
    %v1364 = vunpack.c.h.b16 %v754
    %v1365 = vunpack.c.l.b16 %v755
    %v1366 = vunpack.c.h.b16 %v755
    %v1367 = vunpack.c.l.b16 %v756
    %v1368 = vunpack.c.h.b16 %v756
    %v1369 = vunpack.c.l.b16 %v757
    %v1370 = vunpack.c.h.b16 %v757
    %v1371 = vunpack.c.l.b16 %v758
    %v1372 = vunpack.c.h.b16 %v758
    %v1373 = vunpack.c.l.b16 %v759
    %v1374 = vunpack.c.h.b16 %v759
    %v1375 = vunpack.c.l.b16 %v760
    %v1376 = vunpack.c.h.b16 %v760
    %v1377 = vunpack.c.l.b16 %v761
    %v1378 = vunpack.c.h.b16 %v761
    %v1379 = vunpack.c.l.b16 %v762
    %v1380 = vunpack.c.h.b16 %v762
    %v1381 = vunpack.c.l.b16 %v763
    %v1382 = vunpack.c.h.b16 %v763
    %v1383 = vunpack.c.l.b16 %v764
    %v1384 = vunpack.c.h.b16 %v764
    %v1385 = vunpack.c.l.b16 %v765
    %v1386 = vunpack.c.h.b16 %v765
    %v1387 = vunpack.c.l.b16 %v766
    %v1388 = vunpack.c.h.b16 %v766
    %v1389 = vunpack.c.l.b16 %v767
    %v1390 = vunpack.c.h.b16 %v767
    %v1391 = vunpack.c.l.b16 %v768
    %v1392 = vunpack.c.h.b16 %v768
    %v1393 = vunpack.c.l.b16 %v769
    %v1394 = vunpack.c.h.b16 %v769
    %v1395 = vunpack.c.l.b16 %v770
    %v1396 = vunpack.c.h.b16 %v770
    %v1397 = vunpack.c.l.b16 %v771
    %v1398 = vunpack.c.h.b16 %v771
    %v1399 = vunpack.c.l.b16 %v772
    %v1400 = vunpack.c.h.b16 %v772
    %v1401 = vunpack.c.l.b16 %v773
    %v1402 = vunpack.c.h.b16 %v773
    %v1403 = vunpack.c.l.b16 %v774
    %v1404 = vunpack.c.h.b16 %v774
    %v1405 = vunpack.c.l.b16 %v775
    %v1406 = vunpack.c.h.b16 %v775
    %v1407 = vunpack.c.l.b16 %v776
    %v1408 = vunpack.c.h.b16 %v776
    %v1409 = vunpack.c.l.b16 %v777
    %v1410 = vunpack.c.h.b16 %v777
    %v1411 = vunpack.c.l.b16 %v778
    %v1412 = vunpack.c.h.b16 %v778
    %v1413 = vunpack.c.l.b16 %v779
    %v1414 = vunpack.c.h.b16 %v779
    %v1415 = vunpack.c.l.b16 %v780
    %v1416 = vunpack.c.h.b16 %v780
    %v1417 = vunpack.c.l.b16 %v781
    %v1418 = vunpack.c.h.b16 %v781
    %v1419 = vunpack.c.l.b16 %v782
    %v1420 = vunpack.c.h.b16 %v782
    %v1421 = vunpack.c.l.b16 %v783
    %v1422 = vunpack.c.h.b16 %v783
    %v1423 = vunpack.c.l.b16 %v784
    %v1424 = vunpack.c.h.b16 %v784
    %v1425 = vunpack.c.l.b16 %v785
    %v1426 = vunpack.c.h.b16 %v785
    %v1427 = vunpack.c.l.b16 %v786
    %v1428 = vunpack.c.h.b16 %v786
    %v1429 = vunpack.c.l.b16 %v787
    %v1430 = vunpack.c.h.b16 %v787
    %v1431 = vunpack.c.l.b16 %v788
    %v1432 = vunpack.c.h.b16 %v788
    %v1433 = vunpack.c.l.b16 %v789
    %v1434 = vunpack.c.h.b16 %v789
    %v1435 = vunpack.c.l.b16 %v790
    %v1436 = vunpack.c.h.b16 %v790
    %v1437 = vunpack.c.l.b16 %v791
    %v1438 = vunpack.c.h.b16 %v791
    %v1439 = vunpack.c.l.b16 %v792
    %v1440 = vunpack.c.h.b16 %v792
    %v1441 = vunpack.c.l.b16 %v793
    %v1442 = vunpack.c.h.b16 %v793
    %v1443 = vunpack.c.l.b16 %v794
    %v1444 = vunpack.c.h.b16 %v794
    %v1445 = vunpack.c.l.b16 %v795
    %v1446 = vunpack.c.h.b16 %v795
    %v1447 = vunpack.c.l.b16 %v796
    %v1448 = vunpack.c.h.b16 %v796
    %v1449 = vunpack.c.l.b16 %v797
    %v1450 = vunpack.c.h.b16 %v797
    %v1451 = vunpack.c.l.b16 %v798
    %v1452 = vunpack.c.h.b16 %v798
    %v1453 = vunpack.c.l.b16 %v799
    %v1454 = vunpack.c.h.b16 %v799
    %v1455 = vunpack.c.l.b16 %v800
    %v1456 = vunpack.c.h.b16 %v800
    %v1457 = vunpack.c.l.b16 %v801
    %v1458 = vunpack.c.h.b16 %v801
    %v1459 = vunpack.c.l.b16 %v802
    %v1460 = vunpack.c.h.b16 %v802
    %v1461 = vunpack.c.l.b16 %v803
    %v1462 = vunpack.c.h.b16 %v803
    %v1463 = vunpack.c.l.b16 %v804
    %v1464 = vunpack.c.h.b16 %v804
    %v1465 = vunpack.c.l.b16 %v805
    %v1466 = vunpack.c.h.b16 %v805
    %v1467 = vunpack.c.l.b16 %v806
    %v1468 = vunpack.c.h.b16 %v806
    %v1469 = vunpack.c.l.b16 %v807
    %v1470 = vunpack.c.h.b16 %v807
    %v1471 = vunpack.c.l.b16 %v808
    %v1472 = vunpack.c.h.b16 %v808
    %v1473 = vunpack.c.l.b16 %v809
    %v1474 = vunpack.c.h.b16 %v809
    %v1475 = vunpack.c.l.b16 %v810
    %v1476 = vunpack.c.h.b16 %v810
    %v1477 = vunpack.c.l.b16 %v811
    %v1478 = vunpack.c.h.b16 %v811
    %v1479 = vunpack.c.l.b16 %v812
    %v1480 = vunpack.c.h.b16 %v812
    %v1481 = vunpack.c.l.b16 %v813
    %v1482 = vunpack.c.h.b16 %v813
    %v1483 = vunpack.c.l.b16 %v814
    %v1484 = vunpack.c.h.b16 %v814
    %v1485 = vunpack.c.l.b16 %v815
    %v1486 = vunpack.c.h.b16 %v815
    %v1487 = vunpack.c.l.b16 %v816
    %v1488 = vunpack.c.h.b16 %v816
    %v1489 = vunpack.c.l.b16 %v817
    %v1490 = vunpack.c.h.b16 %v817
    %v1491 = vunpack.c.l.b16 %v818
    %v1492 = vunpack.c.h.b16 %v818
    %v1493 = vunpack.c.l.b16 %v819
    %v1494 = vunpack.c.h.b16 %v819
    %v1495 = vunpack.c.l.b16 %v820
    %v1496 = vunpack.c.h.b16 %v820
    %v1497 = vunpack.c.l.b16 %v821
    %v1498 = vunpack.c.h.b16 %v821
    %v1499 = vunpack.c.l.b16 %v822
    %v1500 = vunpack.c.h.b16 %v822
    %v1501 = vunpack.c.l.b16 %v823
    %v1502 = vunpack.c.h.b16 %v823
    %v1503 = vunpack.c.l.b16 %v824
    %v1504 = vunpack.c.h.b16 %v824
    %v1505 = vunpack.c.l.b16 %v825
    %v1506 = vunpack.c.h.b16 %v825
    %v1507 = vunpack.c.l.b16 %v826
    %v1508 = vunpack.c.h.b16 %v826
    %v1509 = vunpack.c.l.b16 %v827
    %v1510 = vunpack.c.h.b16 %v827
    %v1511 = vunpack.c.l.b16 %v828
    %v1512 = vunpack.c.h.b16 %v828
    %v1513 = vunpack.c.l.b16 %v829
    %v1514 = vunpack.c.h.b16 %v829
    %v1515 = vunpack.c.l.b16 %v830
    %v1516 = vunpack.c.h.b16 %v830
    %v1517 = vunpack.c.l.b16 %v831
    %v1518 = vunpack.c.h.b16 %v831
    %v1519 = vunpack.c.l.b16 %v832
    %v1520 = vunpack.c.h.b16 %v832
    %v1521 = vunpack.c.l.b16 %v833
    %v1522 = vunpack.c.h.b16 %v833
    %v1523 = vunpack.c.l.b16 %v834
    %v1524 = vunpack.c.h.b16 %v834
    %v1525 = vunpack.c.l.b16 %v835
    %v1526 = vunpack.c.h.b16 %v835
    %v1527 = vunpack.c.l.b16 %v836
    %v1528 = vunpack.c.h.b16 %v836
    %v1529 = vunpack.c.l.b16 %v837
    %v1530 = vunpack.c.h.b16 %v837
    %v1531 = vunpack.c.l.b16 %v838
    %v1532 = vunpack.c.h.b16 %v838
    %v1533 = vunpack.c.l.b16 %v839
    %v1534 = vunpack.c.h.b16 %v839
    %v1535 = vunpack.c.l.b16 %v840
    %v1536 = vunpack.c.h.b16 %v840
    %v1537 = vunpack.c.l.b16 %v841
    %v1538 = vunpack.c.h.b16 %v841
    %v1539 = vunpack.c.l.b16 %v842
    %v1540 = vunpack.c.h.b16 %v842
    %v1541 = vunpack.c.l.b16 %v843
    %v1542 = vunpack.c.h.b16 %v843
    %v1543 = vunpack.c.l.b16 %v844
    %v1544 = vunpack.c.h.b16 %v844
    %v1545 = vunpack.c.l.b16 %v845
    %v1546 = vunpack.c.h.b16 %v845
    %v1547 = vunpack.c.l.b16 %v846
    %v1548 = vunpack.c.h.b16 %v846
    %v1549 = vunpack.c.l.b16 %v847
    %v1550 = vunpack.c.h.b16 %v847
    %v1551 = vunpack.c.l.b16 %v848
    %v1552 = vunpack.c.h.b16 %v848
    %v1553 = vunpack.c.l.b16 %v849
    %v1554 = vunpack.c.h.b16 %v849
    %v1555 = vunpack.c.l.b16 %v850
    %v1556 = vunpack.c.h.b16 %v850
    %v1557 = vunpack.c.l.b16 %v851
    %v1558 = vunpack.c.h.b16 %v851
    %v1559 = vunpack.c.l.b16 %v852
    %v1560 = vunpack.c.h.b16 %v852
    %v1561 = vunpack.c.l.b16 %v853
    %v1562 = vunpack.c.h.b16 %v853
    %v1563 = vunpack.c.l.b16 %v854
    %v1564 = vunpack.c.h.b16 %v854
    %v1565 = vunpack.c.l.b16 %v855
    %v1566 = vunpack.c.h.b16 %v855
    %v1567 = vunpack.c.l.b16 %v856
    %v1568 = vunpack.c.h.b16 %v856
    %v1569 = vunpack.c.l.b16 %v857
    %v1570 = vunpack.c.h.b16 %v857
    %v1571 = vunpack.c.l.b16 %v858
    %v1572 = vunpack.c.h.b16 %v858
    %v1573 = vunpack.c.l.b16 %v859
    %v1574 = vunpack.c.h.b16 %v859
    %v1575 = vunpack.c.l.b16 %v860
    %v1576 = vunpack.c.h.b16 %v860
    %v1577 = vunpack.c.l.b16 %v861
    %v1578 = vunpack.c.h.b16 %v861
    %v1579 = vunpack.c.l.b16 %v862
    %v1580 = vunpack.c.h.b16 %v862
    %v1581 = vunpack.c.l.b16 %v863
    %v1582 = vunpack.c.h.b16 %v863
    %v1583 = vunpack.c.l.b16 %v864
    %v1584 = vunpack.c.h.b16 %v864
    %v1585 = vunpack.c.l.b16 %v865
    %v1586 = vunpack.c.h.b16 %v865
    %v1587 = vunpack.c.l.b16 %v866
    %v1588 = vunpack.c.h.b16 %v866
    %v1589 = vunpack.c.l.b16 %v867
    %v1590 = vunpack.c.h.b16 %v867
    %v1591 = vunpack.c.l.b16 %v868
    %v1592 = vunpack.c.h.b16 %v868
    %v1593 = vunpack.c.l.b16 %v869
    %v1594 = vunpack.c.h.b16 %v869
    %v1595 = vunpack.c.l.b16 %v870
    %v1596 = vunpack.c.h.b16 %v870
    %v1597 = vunpack.c.l.b16 %v871
    %v1598 = vunpack.c.h.b16 %v871
    %v1599 = vunpack.c.l.b16 %v872
    %v1600 = vunpack.c.h.b16 %v872
    %v1601 = vunpack.c.l.b16 %v873
    %v1602 = vunpack.c.h.b16 %v873
    %v1603 = vunpack.c.l.b16 %v874
    %v1604 = vunpack.c.h.b16 %v874
    %v1605 = vunpack.c.l.b16 %v875
    %v1606 = vunpack.c.h.b16 %v875
    %v1607 = vunpack.c.l.b16 %v876
    %v1608 = vunpack.c.h.b16 %v876
    %v1609 = vunpack.c.l.b16 %v877
    %v1610 = vunpack.c.h.b16 %v877
    %v1611 = vunpack.c.l.b16 %v878
    %v1612 = vunpack.c.h.b16 %v878
    %v1613 = vunpack.c.l.b16 %v879
    %v1614 = vunpack.c.h.b16 %v879
    %v1615 = vunpack.c.l.b16 %v880
    %v1616 = vunpack.c.h.b16 %v880
    %v1617 = vunpack.c.l.b16 %v881
    %v1618 = vunpack.c.h.b16 %v881
    %v1619 = vunpack.c.l.b16 %v882
    %v1620 = vunpack.c.h.b16 %v882
    %v1621 = vunpack.c.l.b16 %v883
    %v1622 = vunpack.c.h.b16 %v883
    %v1623 = vunpack.c.l.b16 %v884
    %v1624 = vunpack.c.h.b16 %v884
    %v1625 = vunpack.c.l.b16 %v885
    %v1626 = vunpack.c.h.b16 %v885
    %v1627 = vunpack.c.l.b16 %v886
    %v1628 = vunpack.c.h.b16 %v886
    %v1629 = vunpack.c.l.b16 %v887
    %v1630 = vunpack.c.h.b16 %v887
    %v1631 = vunpack.c.l.b16 %v888
    %v1632 = vunpack.c.h.b16 %v888
    %v1633 = vunpack.c.l.b16 %v889
    %v1634 = vunpack.c.h.b16 %v889
    %v1635 = vunpack.c.l.b16 %v890
    %v1636 = vunpack.c.h.b16 %v890
    %v1637 = vunpack.c.l.b16 %v891
    %v1638 = vunpack.c.h.b16 %v891
    %v1639 = vunpack.c.l.b16 %v892
    %v1640 = vunpack.c.h.b16 %v892
    %v1641 = vunpack.c.l.b16 %v893
    %v1642 = vunpack.c.h.b16 %v893
    %v1643 = vunpack.c.l.b16 %v894
    %v1644 = vunpack.c.h.b16 %v894
    %v1645 = vunpack.c.l.b16 %v895
    %v1646 = vunpack.c.h.b16 %v895
    %v1647 = vunpack.c.l.b16 %v896
    %v1648 = vunpack.c.h.b16 %v896
    %v1649 = vunpack.c.l.b16 %v897
    %v1650 = vunpack.c.h.b16 %v897
    %v1651 = vunpack.c.l.b16 %v898
    %v1652 = vunpack.c.h.b16 %v898
    %v1653 = vunpack.c.l.b16 %v899
    %v1654 = vunpack.c.h.b16 %v899
    %v1655 = vunpack.c.l.b16 %v900
    %v1656 = vunpack.c.h.b16 %v900
    %v1657 = vunpack.c.l.b16 %v901
    %v1658 = vunpack.c.h.b16 %v901
    %v1659 = vunpack.c.l.b16 %v902
    %v1660 = vunpack.c.h.b16 %v902
    %v1661 = vunpack.c.l.b16 %v903
    %v1662 = vunpack.c.h.b16 %v903
    %v1663 = vunpack.c.l.b16 %v904
    %v1664 = vunpack.c.h.b16 %v904
    %v1665 = vunpack.c.l.b16 %v905
    %v1666 = vunpack.c.h.b16 %v905
    %v1667 = vunpack.c.l.b16 %v906
    %v1668 = vunpack.c.h.b16 %v906
    %v1669 = vunpack.c.l.b16 %v907
    %v1670 = vunpack.c.h.b16 %v907
    %v1671 = vunpack.c.l.b16 %v908
    %v1672 = vunpack.c.h.b16 %v908
    %v1673 = vunpack.c.l.b16 %v909
    %v1674 = vunpack.c.h.b16 %v909
    %v1675 = vunpack.c.l.b16 %v910
    %v1676 = vunpack.c.h.b16 %v910
    %v1677 = vunpack.c.l.b16 %v911
    %v1678 = vunpack.c.h.b16 %v911
    %v1679 = vunpack.c.l.b16 %v912
    %v1680 = vunpack.c.h.b16 %v912
    %v1681 = vunpack.c.l.b16 %v913
    %v1682 = vunpack.c.h.b16 %v913
    %v1683 = vunpack.c.l.b16 %v914
    %v1684 = vunpack.c.h.b16 %v914
    %v1685 = vunpack.c.l.b16 %v915
    %v1686 = vunpack.c.h.b16 %v915
    %v1687 = vunpack.c.l.b16 %v916
    %v1688 = vunpack.c.h.b16 %v916
    %v1689 = vunpack.c.l.b16 %v917
    %v1690 = vunpack.c.h.b16 %v917
    %v1691 = vunpack.c.l.b16 %v918
    %v1692 = vunpack.c.h.b16 %v918
    %v1693 = vunpack.c.l.b16 %v919
    %v1694 = vunpack.c.h.b16 %v919
    %v1695 = vunpack.c.l.b16 %v920
    %v1696 = vunpack.c.h.b16 %v920
    %v1697 = vunpack.c.l.b16 %v921
    %v1698 = vunpack.c.h.b16 %v921
    %v1699 = vunpack.c.l.b16 %v922
    %v1700 = vunpack.c.h.b16 %v922
    %v1701 = vunpack.c.l.b16 %v923
    %v1702 = vunpack.c.h.b16 %v923
    %v1703 = vunpack.c.l.b16 %v924
    %v1704 = vunpack.c.h.b16 %v924
    %v1705 = vunpack.c.l.b16 %v925
    %v1706 = vunpack.c.h.b16 %v925
    %v1707 = vunpack.c.l.b16 %v926
    %v1708 = vunpack.c.h.b16 %v926
    %v1709 = vunpack.c.l.b16 %v927
    %v1710 = vunpack.c.h.b16 %v927
    %v1711 = vunpack.c.l.b16 %v928
    %v1712 = vunpack.c.h.b16 %v928
    %v1713 = vunpack.c.l.b16 %v929
    %v1714 = vunpack.c.h.b16 %v929
    %v1715 = vunpack.c.l.b16 %v930
    %v1716 = vunpack.c.h.b16 %v930
    %v1717 = vunpack.c.l.b16 %v931
    %v1718 = vunpack.c.h.b16 %v931
    %v1719 = vunpack.c.l.b16 %v932
    %v1720 = vunpack.c.h.b16 %v932
    %v1721 = vunpack.c.l.b16 %v933
    %v1722 = vunpack.c.h.b16 %v933
    %v1723 = vunpack.c.l.b16 %v934
    %v1724 = vunpack.c.h.b16 %v934
    %v1725 = vunpack.c.l.b16 %v935
    %v1726 = vunpack.c.h.b16 %v935
    %v1727 = vunpack.c.l.b16 %v936
    %v1728 = vunpack.c.h.b16 %v936
    %v1729 = vunpack.c.l.b16 %v937
    %v1730 = vunpack.c.h.b16 %v937
    %v1731 = vunpack.c.l.b16 %v938
    %v1732 = vunpack.c.h.b16 %v938
    %v1733 = vunpack.c.l.b16 %v939
    %v1734 = vunpack.c.h.b16 %v939
    %v1735 = vunpack.c.l.b16 %v940
    %v1736 = vunpack.c.h.b16 %v940
    %v1737 = vunpack.c.l.b16 %v941
    %v1738 = vunpack.c.h.b16 %v941
    %v1739 = vunpack.c.l.b16 %v942
    %v1740 = vunpack.c.h.b16 %v942
    %v1741 = vunpack.c.l.b16 %v943
    %v1742 = vunpack.c.h.b16 %v943
    %v1743 = vunpack.c.l.b16 %v944
    %v1744 = vunpack.c.h.b16 %v944
    %v1745 = vunpack.c.l.b16 %v945
    %v1746 = vunpack.c.h.b16 %v945
    %v1747 = vunpack.c.l.b16 %v946
    %v1748 = vunpack.c.h.b16 %v946
    %v1749 = vunpack.c.l.b16 %v947
    %v1750 = vunpack.c.h.b16 %v947
    %v1751 = vunpack.c.l.b16 %v948
    %v1752 = vunpack.c.h.b16 %v948
    %v1753 = vunpack.c.l.b16 %v949
    %v1754 = vunpack.c.h.b16 %v949
    %v1755 = vunpack.c.l.b16 %v950
    %v1756 = vunpack.c.h.b16 %v950
    %v1757 = vunpack.c.l.b16 %v951
    %v1758 = vunpack.c.h.b16 %v951
    %v1759 = vunpack.c.l.b16 %v952
    %v1760 = vunpack.c.h.b16 %v952
    %v1761 = vunpack.c.l.b16 %v953
    %v1762 = vunpack.c.h.b16 %v953
    %v1763 = vunpack.c.l.b16 %v954
    %v1764 = vunpack.c.h.b16 %v954
    %v1765 = vpack.c.b16 %v1261, %v1253
    %v1766 = vpack.c.b16 %v1262, %v1254
    %v1767 = vpack.c.b16 %v1263, %v1255
    %v1768 = vpack.c.b16 %v1264, %v1256
    %v1769 = vpack.c.b16 %v1265, %v1257
    %v1770 = vpack.c.b16 %v1266, %v1258
    %v1771 = vpack.c.b16 %v1267, %v1259
    %v1772 = vpack.c.b16 %v1268, %v1260
    %v1773 = vpack.c.b16 %v1277, %v1269
    %v1774 = vpack.c.b16 %v1278, %v1270
    %v1775 = vpack.c.b16 %v1279, %v1271
    %v1776 = vpack.c.b16 %v1280, %v1272
    %v1777 = vpack.c.b16 %v1281, %v1273
    %v1778 = vpack.c.b16 %v1282, %v1274
    %v1779 = vpack.c.b16 %v1283, %v1275
    %v1780 = vpack.c.b16 %v1284, %v1276
    %v1781 = vpack.c.b16 %v1293, %v1285
    %v1782 = vpack.c.b16 %v1294, %v1286
    %v1783 = vpack.c.b16 %v1295, %v1287
    %v1784 = vpack.c.b16 %v1296, %v1288
    %v1785 = vpack.c.b16 %v1297, %v1289
    %v1786 = vpack.c.b16 %v1298, %v1290
    %v1787 = vpack.c.b16 %v1299, %v1291
    %v1788 = vpack.c.b16 %v1300, %v1292
    %v1789 = vpack.c.b16 %v1309, %v1301
    %v1790 = vpack.c.b16 %v1310, %v1302
    %v1791 = vpack.c.b16 %v1311, %v1303
    %v1792 = vpack.c.b16 %v1312, %v1304
    %v1793 = vpack.c.b16 %v1313, %v1305
    %v1794 = vpack.c.b16 %v1314, %v1306
    %v1795 = vpack.c.b16 %v1315, %v1307
    %v1796 = vpack.c.b16 %v1316, %v1308
    %v1797 = vpack.c.b16 %v1325, %v1317
    %v1798 = vpack.c.b16 %v1326, %v1318
    %v1799 = vpack.c.b16 %v1327, %v1319
    %v1800 = vpack.c.b16 %v1328, %v1320
    %v1801 = vpack.c.b16 %v1329, %v1321
    %v1802 = vpack.c.b16 %v1330, %v1322
    %v1803 = vpack.c.b16 %v1331, %v1323
    %v1804 = vpack.c.b16 %v1332, %v1324
    %v1805 = vpack.c.b16 %v1341, %v1333
    %v1806 = vpack.c.b16 %v1342, %v1334
    %v1807 = vpack.c.b16 %v1343, %v1335
    %v1808 = vpack.c.b16 %v1344, %v1336
    %v1809 = vpack.c.b16 %v1345, %v1337
    %v1810 = vpack.c.b16 %v1346, %v1338
    %v1811 = vpack.c.b16 %v1347, %v1339
    %v1812 = vpack.c.b16 %v1348, %v1340
    %v1813 = vpack.c.b16 %v1357, %v1349
    %v1814 = vpack.c.b16 %v1358, %v1350
    %v1815 = vpack.c.b16 %v1359, %v1351
    %v1816 = vpack.c.b16 %v1360, %v1352
    %v1817 = vpack.c.b16 %v1361, %v1353
    %v1818 = vpack.c.b16 %v1362, %v1354
    %v1819 = vpack.c.b16 %v1363, %v1355
    %v1820 = vpack.c.b16 %v1364, %v1356
    %v1821 = vpack.c.b16 %v1373, %v1365
    %v1822 = vpack.c.b16 %v1374, %v1366
    %v1823 = vpack.c.b16 %v1375, %v1367
    %v1824 = vpack.c.b16 %v1376, %v1368
    %v1825 = vpack.c.b16 %v1377, %v1369
    %v1826 = vpack.c.b16 %v1378, %v1370
    %v1827 = vpack.c.b16 %v1379, %v1371
    %v1828 = vpack.c.b16 %v1380, %v1372
    %v1829 = vpack.c.b16 %v1389, %v1381
    %v1830 = vpack.c.b16 %v1390, %v1382
    %v1831 = vpack.c.b16 %v1391, %v1383
    %v1832 = vpack.c.b16 %v1392, %v1384
    %v1833 = vpack.c.b16 %v1393, %v1385
    %v1834 = vpack.c.b16 %v1394, %v1386
    %v1835 = vpack.c.b16 %v1395, %v1387
    %v1836 = vpack.c.b16 %v1396, %v1388
    %v1837 = vpack.c.b16 %v1405, %v1397
    %v1838 = vpack.c.b16 %v1406, %v1398
    %v1839 = vpack.c.b16 %v1407, %v1399
    %v1840 = vpack.c.b16 %v1408, %v1400
    %v1841 = vpack.c.b16 %v1409, %v1401
    %v1842 = vpack.c.b16 %v1410, %v1402
    %v1843 = vpack.c.b16 %v1411, %v1403
    %v1844 = vpack.c.b16 %v1412, %v1404
    %v1845 = vpack.c.b16 %v1421, %v1413
    %v1846 = vpack.c.b16 %v1422, %v1414
    %v1847 = vpack.c.b16 %v1423, %v1415
    %v1848 = vpack.c.b16 %v1424, %v1416
    %v1849 = vpack.c.b16 %v1425, %v1417
    %v1850 = vpack.c.b16 %v1426, %v1418
    %v1851 = vpack.c.b16 %v1427, %v1419
    %v1852 = vpack.c.b16 %v1428, %v1420
    %v1853 = vpack.c.b16 %v1437, %v1429
    %v1854 = vpack.c.b16 %v1438, %v1430
    %v1855 = vpack.c.b16 %v1439, %v1431
    %v1856 = vpack.c.b16 %v1440, %v1432
    %v1857 = vpack.c.b16 %v1441, %v1433
    %v1858 = vpack.c.b16 %v1442, %v1434
    %v1859 = vpack.c.b16 %v1443, %v1435
    %v1860 = vpack.c.b16 %v1444, %v1436
    %v1861 = vpack.c.b16 %v1453, %v1445
    %v1862 = vpack.c.b16 %v1454, %v1446
    %v1863 = vpack.c.b16 %v1455, %v1447
    %v1864 = vpack.c.b16 %v1456, %v1448
    %v1865 = vpack.c.b16 %v1457, %v1449
    %v1866 = vpack.c.b16 %v1458, %v1450
    %v1867 = vpack.c.b16 %v1459, %v1451
    %v1868 = vpack.c.b16 %v1460, %v1452
    %v1869 = vpack.c.b16 %v1469, %v1461
    %v1870 = vpack.c.b16 %v1470, %v1462
    %v1871 = vpack.c.b16 %v1471, %v1463
    %v1872 = vpack.c.b16 %v1472, %v1464
    %v1873 = vpack.c.b16 %v1473, %v1465
    %v1874 = vpack.c.b16 %v1474, %v1466
    %v1875 = vpack.c.b16 %v1475, %v1467
    %v1876 = vpack.c.b16 %v1476, %v1468
    %v1877 = vpack.c.b16 %v1485, %v1477
    %v1878 = vpack.c.b16 %v1486, %v1478
    %v1879 = vpack.c.b16 %v1487, %v1479
    %v1880 = vpack.c.b16 %v1488, %v1480
    %v1881 = vpack.c.b16 %v1489, %v1481
    %v1882 = vpack.c.b16 %v1490, %v1482
    %v1883 = vpack.c.b16 %v1491, %v1483
    %v1884 = vpack.c.b16 %v1492, %v1484
    %v1885 = vpack.c.b16 %v1501, %v1493
    %v1886 = vpack.c.b16 %v1502, %v1494
    %v1887 = vpack.c.b16 %v1503, %v1495
    %v1888 = vpack.c.b16 %v1504, %v1496
    %v1889 = vpack.c.b16 %v1505, %v1497
    %v1890 = vpack.c.b16 %v1506, %v1498
    %v1891 = vpack.c.b16 %v1507, %v1499
    %v1892 = vpack.c.b16 %v1508, %v1500
    %v1893 = vpack.c.b16 %v1517, %v1509
    %v1894 = vpack.c.b16 %v1518, %v1510
    %v1895 = vpack.c.b16 %v1519, %v1511
    %v1896 = vpack.c.b16 %v1520, %v1512
    %v1897 = vpack.c.b16 %v1521, %v1513
    %v1898 = vpack.c.b16 %v1522, %v1514
    %v1899 = vpack.c.b16 %v1523, %v1515
    %v1900 = vpack.c.b16 %v1524, %v1516
    %v1901 = vpack.c.b16 %v1533, %v1525
    %v1902 = vpack.c.b16 %v1534, %v1526
    %v1903 = vpack.c.b16 %v1535, %v1527
    %v1904 = vpack.c.b16 %v1536, %v1528
    %v1905 = vpack.c.b16 %v1537, %v1529
    %v1906 = vpack.c.b16 %v1538, %v1530
    %v1907 = vpack.c.b16 %v1539, %v1531
    %v1908 = vpack.c.b16 %v1540, %v1532
    %v1909 = vpack.c.b16 %v1549, %v1541
    %v1910 = vpack.c.b16 %v1550, %v1542
    %v1911 = vpack.c.b16 %v1551, %v1543
    %v1912 = vpack.c.b16 %v1552, %v1544
    %v1913 = vpack.c.b16 %v1553, %v1545
    %v1914 = vpack.c.b16 %v1554, %v1546
    %v1915 = vpack.c.b16 %v1555, %v1547
    %v1916 = vpack.c.b16 %v1556, %v1548
    %v1917 = vpack.c.b16 %v1565, %v1557
    %v1918 = vpack.c.b16 %v1566, %v1558
    %v1919 = vpack.c.b16 %v1567, %v1559
    %v1920 = vpack.c.b16 %v1568, %v1560
    %v1921 = vpack.c.b16 %v1569, %v1561
    %v1922 = vpack.c.b16 %v1570, %v1562
    %v1923 = vpack.c.b16 %v1571, %v1563
    %v1924 = vpack.c.b16 %v1572, %v1564
    %v1925 = vpack.c.b16 %v1581, %v1573
    %v1926 = vpack.c.b16 %v1582, %v1574
    %v1927 = vpack.c.b16 %v1583, %v1575
    %v1928 = vpack.c.b16 %v1584, %v1576
    %v1929 = vpack.c.b16 %v1585, %v1577
    %v1930 = vpack.c.b16 %v1586, %v1578
    %v1931 = vpack.c.b16 %v1587, %v1579
    %v1932 = vpack.c.b16 %v1588, %v1580
    %v1933 = vpack.c.b16 %v1597, %v1589
    %v1934 = vpack.c.b16 %v1598, %v1590
    %v1935 = vpack.c.b16 %v1599, %v1591
    %v1936 = vpack.c.b16 %v1600, %v1592
    %v1937 = vpack.c.b16 %v1601, %v1593
    %v1938 = vpack.c.b16 %v1602, %v1594
    %v1939 = vpack.c.b16 %v1603, %v1595
    %v1940 = vpack.c.b16 %v1604, %v1596
    %v1941 = vpack.c.b16 %v1613, %v1605
    %v1942 = vpack.c.b16 %v1614, %v1606
    %v1943 = vpack.c.b16 %v1615, %v1607
    %v1944 = vpack.c.b16 %v1616, %v1608
    %v1945 = vpack.c.b16 %v1617, %v1609
    %v1946 = vpack.c.b16 %v1618, %v1610
    %v1947 = vpack.c.b16 %v1619, %v1611
    %v1948 = vpack.c.b16 %v1620, %v1612
    %v1949 = vpack.c.b16 %v1629, %v1621
    %v1950 = vpack.c.b16 %v1630, %v1622
    %v1951 = vpack.c.b16 %v1631, %v1623
    %v1952 = vpack.c.b16 %v1632, %v1624
    %v1953 = vpack.c.b16 %v1633, %v1625
    %v1954 = vpack.c.b16 %v1634, %v1626
    %v1955 = vpack.c.b16 %v1635, %v1627
    %v1956 = vpack.c.b16 %v1636, %v1628
    %v1957 = vpack.c.b16 %v1645, %v1637
    %v1958 = vpack.c.b16 %v1646, %v1638
    %v1959 = vpack.c.b16 %v1647, %v1639
    %v1960 = vpack.c.b16 %v1648, %v1640
    %v1961 = vpack.c.b16 %v1649, %v1641
    %v1962 = vpack.c.b16 %v1650, %v1642
    %v1963 = vpack.c.b16 %v1651, %v1643
    %v1964 = vpack.c.b16 %v1652, %v1644
    %v1965 = vpack.c.b16 %v1661, %v1653
    %v1966 = vpack.c.b16 %v1662, %v1654
    %v1967 = vpack.c.b16 %v1663, %v1655
    %v1968 = vpack.c.b16 %v1664, %v1656
    %v1969 = vpack.c.b16 %v1665, %v1657
    %v1970 = vpack.c.b16 %v1666, %v1658
    %v1971 = vpack.c.b16 %v1667, %v1659
    %v1972 = vpack.c.b16 %v1668, %v1660
    %v1973 = vpack.c.b16 %v1677, %v1669
    %v1974 = vpack.c.b16 %v1678, %v1670
    %v1975 = vpack.c.b16 %v1679, %v1671
    %v1976 = vpack.c.b16 %v1680, %v1672
    %v1977 = vpack.c.b16 %v1681, %v1673
    %v1978 = vpack.c.b16 %v1682, %v1674
    %v1979 = vpack.c.b16 %v1683, %v1675
    %v1980 = vpack.c.b16 %v1684, %v1676
    %v1981 = vpack.c.b16 %v1693, %v1685
    %v1982 = vpack.c.b16 %v1694, %v1686
    %v1983 = vpack.c.b16 %v1695, %v1687
    %v1984 = vpack.c.b16 %v1696, %v1688
    %v1985 = vpack.c.b16 %v1697, %v1689
    %v1986 = vpack.c.b16 %v1698, %v1690
    %v1987 = vpack.c.b16 %v1699, %v1691
    %v1988 = vpack.c.b16 %v1700, %v1692
    %v1989 = vpack.c.b16 %v1709, %v1701
    %v1990 = vpack.c.b16 %v1710, %v1702
    %v1991 = vpack.c.b16 %v1711, %v1703
    %v1992 = vpack.c.b16 %v1712, %v1704
    %v1993 = vpack.c.b16 %v1713, %v1705
    %v1994 = vpack.c.b16 %v1714, %v1706
    %v1995 = vpack.c.b16 %v1715, %v1707
    %v1996 = vpack.c.b16 %v1716, %v1708
    %v1997 = vpack.c.b16 %v1725, %v1717
    %v1998 = vpack.c.b16 %v1726, %v1718
    %v1999 = vpack.c.b16 %v1727, %v1719
    %v2000 = vpack.c.b16 %v1728, %v1720
    %v2001 = vpack.c.b16 %v1729, %v1721
    %v2002 = vpack.c.b16 %v1730, %v1722
    %v2003 = vpack.c.b16 %v1731, %v1723
    %v2004 = vpack.c.b16 %v1732, %v1724
    %v2005 = vpack.c.b16 %v1741, %v1733
    %v2006 = vpack.c.b16 %v1742, %v1734
    %v2007 = vpack.c.b16 %v1743, %v1735
    %v2008 = vpack.c.b16 %v1744, %v1736
    %v2009 = vpack.c.b16 %v1745, %v1737
    %v2010 = vpack.c.b16 %v1746, %v1738
    %v2011 = vpack.c.b16 %v1747, %v1739
    %v2012 = vpack.c.b16 %v1748, %v1740
    %v2013 = vpack.c.b16 %v1757, %v1749
    %v2014 = vpack.c.b16 %v1758, %v1750
    %v2015 = vpack.c.b16 %v1759, %v1751
    %v2016 = vpack.c.b16 %v1760, %v1752
    %v2017 = vpack.c.b16 %v1761, %v1753
    %v2018 = vpack.c.b16 %v1762, %v1754
    %v2019 = vpack.c.b16 %v1763, %v1755
    %v2020 = vpack.c.b16 %v1764, %v1756
    %2277 = vmatprep.subr.bf16.mxu0 %v1822
    %2278 = vmatpush1.bf16.msra.mxu0 %v1821
    %2279 = vmatprep.subr.bf16.mxu0 %v1814
    %2280 = vmatpush1.bf16.msra.mxu0 %v1813
    %2281 = vmatprep.subr.bf16.mxu0 %v1806
    %2282 = vmatpush1.bf16.msra.mxu0 %v1805
    %2283 = vmatprep.subr.bf16.mxu0 %v1798
    %2284 = vmatpush1.bf16.msra.mxu0 %v1797
    %2285 = vmatprep.subr.bf16.mxu0 %v1790
    %2286 = vmatpush1.bf16.msra.mxu0 %v1789
    %2287 = vmatprep.subr.bf16.mxu0 %v1782
    %2288 = vmatpush1.bf16.msra.mxu0 %v1781
    %2289 = vmatprep.subr.bf16.mxu0 %v1774
    %2290 = vmatpush1.bf16.msra.mxu0 %v1773
    %2291 = vmatprep.subr.bf16.mxu0 %v1766
    %2292 = vmatpush1.bf16.msra.mxu0 %v1765
    %2293 = vmatprep.subr.bf16.mxu0 %v1886
    %2294 = vmatpush2.bf16.msra.mxu0 %v1885
    %2295 = vmatprep.subr.bf16.mxu0 %v1878
    %2296 = vmatpush2.bf16.msra.mxu0 %v1877
    %2297 = vmatprep.subr.bf16.mxu0 %v1870
    %2298 = vmatpush2.bf16.msra.mxu0 %v1869
    %2299 = vmatprep.subr.bf16.mxu0 %v1862
    %2300 = vmatpush2.bf16.msra.mxu0 %v1861
    %2301 = vmatprep.subr.bf16.mxu0 %v1854
    %2302 = vmatpush2.bf16.msra.mxu0 %v1853
    %2303 = vmatprep.subr.bf16.mxu0 %v1846
    %2304 = vmatpush2.bf16.msra.mxu0 %v1845
    %2305 = vmatprep.subr.bf16.mxu0 %v1838
    %2306 = vmatpush2.bf16.msra.mxu0 %v1837
    %2307 = vmatprep.subr.bf16.mxu0 %v1830
    %2308 = vmatpush2.bf16.msra.mxu0 %v1829
    %2309 = vmatprep.mubr.bf16.mxu0 %v696
    %2310 = vmatmul.mubr.bf16.gmra.mxu0 %v695
    %v2311 = vpop.f32.mrf.mxu0
    %v2312 = vadd.f32 %v960, %v2311
    %v2313 = vpop.f32.mrf.mxu0
    %v2314 = vadd.f32 %v964, %v2313
    %v2315 = vpop.f32.mrf.mxu0
    %v2316 = vpop.f32.mrf.mxu0
    %2317 = vdwg.mxu0
    %2318 = vmatprep.subr.bf16.mxu0 %v1950
    %2319 = vmatpush1.bf16.msra.mxu0 %v1949
    %2320 = vmatprep.subr.bf16.mxu0 %v1942
    %2321 = vmatpush1.bf16.msra.mxu0 %v1941
    %2322 = vmatprep.subr.bf16.mxu0 %v1934
    %2323 = vmatpush1.bf16.msra.mxu0 %v1933
    %2324 = vmatprep.subr.bf16.mxu0 %v1926
    %2325 = vmatpush1.bf16.msra.mxu0 %v1925
    %2326 = vmatprep.subr.bf16.mxu0 %v1918
    %2327 = vmatpush1.bf16.msra.mxu0 %v1917
    %2328 = vmatprep.subr.bf16.mxu0 %v1910
    %2329 = vmatpush1.bf16.msra.mxu0 %v1909
    %2330 = vmatprep.subr.bf16.mxu0 %v1902
    %2331 = vmatpush1.bf16.msra.mxu0 %v1901
    %2332 = vmatprep.subr.bf16.mxu0 %v1894
    %2333 = vmatpush1.bf16.msra.mxu0 %v1893
    %2334 = vmatprep.subr.bf16.mxu0 %v2014
    %2335 = vmatpush2.bf16.msra.mxu0 %v2013
    %2336 = vmatprep.subr.bf16.mxu0 %v2006
    %2337 = vmatpush2.bf16.msra.mxu0 %v2005
    %2338 = vmatprep.subr.bf16.mxu0 %v1998
    %2339 = vmatpush2.bf16.msra.mxu0 %v1997
    %2340 = vmatprep.subr.bf16.mxu0 %v1990
    %2341 = vmatpush2.bf16.msra.mxu0 %v1989
    %2342 = vmatprep.subr.bf16.mxu0 %v1982
    %2343 = vmatpush2.bf16.msra.mxu0 %v1981
    %2344 = vmatprep.subr.bf16.mxu0 %v1974
    %2345 = vmatpush2.bf16.msra.mxu0 %v1973
    %2346 = vmatprep.subr.bf16.mxu0 %v1966
    %2347 = vmatpush2.bf16.msra.mxu0 %v1965
    %2348 = vmatprep.subr.bf16.mxu0 %v1958
    %2349 = vmatpush2.bf16.msra.mxu0 %v1957
    %2350 = vmatprep.mubr.bf16.mxu0 %v698
    %2351 = vmatmul.mubr.bf16.gmra.mxu0 %v697
    %v2352 = vpop.f32.mrf.mxu0
    %v2353 = vadd.f32 %v2312, %v2352
    %v2354 = vpop.f32.mrf.mxu0
    %v2355 = vadd.f32 %v2314, %v2354
    %v2356 = vpop.f32.mrf.mxu0
    %v2357 = vpop.f32.mrf.mxu0
    %2358 = vdwg.mxu0
    %2359 = vmatprep.subr.bf16.mxu0 %v1824
    %2360 = vmatpush1.bf16.msra.mxu0 %v1823
    %2361 = vmatprep.subr.bf16.mxu0 %v1816
    %2362 = vmatpush1.bf16.msra.mxu0 %v1815
    %2363 = vmatprep.subr.bf16.mxu0 %v1808
    %2364 = vmatpush1.bf16.msra.mxu0 %v1807
    %2365 = vmatprep.subr.bf16.mxu0 %v1800
    %2366 = vmatpush1.bf16.msra.mxu0 %v1799
    %2367 = vmatprep.subr.bf16.mxu0 %v1792
    %2368 = vmatpush1.bf16.msra.mxu0 %v1791
    %2369 = vmatprep.subr.bf16.mxu0 %v1784
    %2370 = vmatpush1.bf16.msra.mxu0 %v1783
    %2371 = vmatprep.subr.bf16.mxu0 %v1776
    %2372 = vmatpush1.bf16.msra.mxu0 %v1775
    %2373 = vmatprep.subr.bf16.mxu0 %v1768
    %2374 = vmatpush1.bf16.msra.mxu0 %v1767
    %2375 = vmatprep.subr.bf16.mxu0 %v1888
    %2376 = vmatpush2.bf16.msra.mxu0 %v1887
    %2377 = vmatprep.subr.bf16.mxu0 %v1880
    %2378 = vmatpush2.bf16.msra.mxu0 %v1879
    %2379 = vmatprep.subr.bf16.mxu0 %v1872
    %2380 = vmatpush2.bf16.msra.mxu0 %v1871
    %2381 = vmatprep.subr.bf16.mxu0 %v1864
    %2382 = vmatpush2.bf16.msra.mxu0 %v1863
    %2383 = vmatprep.subr.bf16.mxu0 %v1856
    %2384 = vmatpush2.bf16.msra.mxu0 %v1855
    %2385 = vmatprep.subr.bf16.mxu0 %v1848
    %2386 = vmatpush2.bf16.msra.mxu0 %v1847
    %2387 = vmatprep.subr.bf16.mxu0 %v1840
    %2388 = vmatpush2.bf16.msra.mxu0 %v1839
    %2389 = vmatprep.subr.bf16.mxu0 %v1832
    %2390 = vmatpush2.bf16.msra.mxu0 %v1831
    %2391 = vmatprep.mubr.bf16.mxu0 %v696
    %2392 = vmatmul.mubr.bf16.gmra.mxu0 %v695
    %v2393 = vpop.f32.mrf.mxu0
    %v2394 = vadd.f32 %v968, %v2393
    %v2395 = vpop.f32.mrf.mxu0
    %v2396 = vadd.f32 %v972, %v2395
    %v2397 = vpop.f32.mrf.mxu0
    %v2398 = vpop.f32.mrf.mxu0
    %2399 = vdwg.mxu0
    %2400 = vmatprep.subr.bf16.mxu0 %v1952
    %2401 = vmatpush1.bf16.msra.mxu0 %v1951
    %2402 = vmatprep.subr.bf16.mxu0 %v1944
    %2403 = vmatpush1.bf16.msra.mxu0 %v1943
    %2404 = vmatprep.subr.bf16.mxu0 %v1936
    %2405 = vmatpush1.bf16.msra.mxu0 %v1935
    %2406 = vmatprep.subr.bf16.mxu0 %v1928
    %2407 = vmatpush1.bf16.msra.mxu0 %v1927
    %2408 = vmatprep.subr.bf16.mxu0 %v1920
    %2409 = vmatpush1.bf16.msra.mxu0 %v1919
    %2410 = vmatprep.subr.bf16.mxu0 %v1912
    %2411 = vmatpush1.bf16.msra.mxu0 %v1911
    %2412 = vmatprep.subr.bf16.mxu0 %v1904
    %2413 = vmatpush1.bf16.msra.mxu0 %v1903
    %2414 = vmatprep.subr.bf16.mxu0 %v1896
    %2415 = vmatpush1.bf16.msra.mxu0 %v1895
    %2416 = vmatprep.subr.bf16.mxu0 %v2016
    %2417 = vmatpush2.bf16.msra.mxu0 %v2015
    %2418 = vmatprep.subr.bf16.mxu0 %v2008
    %2419 = vmatpush2.bf16.msra.mxu0 %v2007
    %2420 = vmatprep.subr.bf16.mxu0 %v2000
    %2421 = vmatpush2.bf16.msra.mxu0 %v1999
    %2422 = vmatprep.subr.bf16.mxu0 %v1992
    %2423 = vmatpush2.bf16.msra.mxu0 %v1991
    %2424 = vmatprep.subr.bf16.mxu0 %v1984
    %2425 = vmatpush2.bf16.msra.mxu0 %v1983
    %2426 = vmatprep.subr.bf16.mxu0 %v1976
    %2427 = vmatpush2.bf16.msra.mxu0 %v1975
    %2428 = vmatprep.subr.bf16.mxu0 %v1968
    %2429 = vmatpush2.bf16.msra.mxu0 %v1967
    %2430 = vmatprep.subr.bf16.mxu0 %v1960
    %2431 = vmatpush2.bf16.msra.mxu0 %v1959
    %2432 = vmatprep.mubr.bf16.mxu0 %v698
    %2433 = vmatmul.mubr.bf16.gmra.mxu0 %v697
    %v2434 = vpop.f32.mrf.mxu0
    %v2435 = vadd.f32 %v2394, %v2434
    %v2436 = vpop.f32.mrf.mxu0
    %v2437 = vadd.f32 %v2396, %v2436
    %v2438 = vpop.f32.mrf.mxu0
    %v2439 = vpop.f32.mrf.mxu0
    %2440 = vdwg.mxu0
    %2441 = vmatprep.subr.bf16.mxu0 %v1826
    %2442 = vmatpush1.bf16.msra.mxu0 %v1825
    %2443 = vmatprep.subr.bf16.mxu0 %v1818
    %2444 = vmatpush1.bf16.msra.mxu0 %v1817
    %2445 = vmatprep.subr.bf16.mxu0 %v1810
    %2446 = vmatpush1.bf16.msra.mxu0 %v1809
    %2447 = vmatprep.subr.bf16.mxu0 %v1802
    %2448 = vmatpush1.bf16.msra.mxu0 %v1801
    %2449 = vmatprep.subr.bf16.mxu0 %v1794
    %2450 = vmatpush1.bf16.msra.mxu0 %v1793
    %2451 = vmatprep.subr.bf16.mxu0 %v1786
    %2452 = vmatpush1.bf16.msra.mxu0 %v1785
    %2453 = vmatprep.subr.bf16.mxu0 %v1778
    %2454 = vmatpush1.bf16.msra.mxu0 %v1777
    %2455 = vmatprep.subr.bf16.mxu0 %v1770
    %2456 = vmatpush1.bf16.msra.mxu0 %v1769
    %2457 = vmatprep.subr.bf16.mxu0 %v1890
    %2458 = vmatpush2.bf16.msra.mxu0 %v1889
    %2459 = vmatprep.subr.bf16.mxu0 %v1882
    %2460 = vmatpush2.bf16.msra.mxu0 %v1881
    %2461 = vmatprep.subr.bf16.mxu0 %v1874
    %2462 = vmatpush2.bf16.msra.mxu0 %v1873
    %2463 = vmatprep.subr.bf16.mxu0 %v1866
    %2464 = vmatpush2.bf16.msra.mxu0 %v1865
    %2465 = vmatprep.subr.bf16.mxu0 %v1858
    %2466 = vmatpush2.bf16.msra.mxu0 %v1857
    %2467 = vmatprep.subr.bf16.mxu0 %v1850
    %2468 = vmatpush2.bf16.msra.mxu0 %v1849
    %2469 = vmatprep.subr.bf16.mxu0 %v1842
    %2470 = vmatpush2.bf16.msra.mxu0 %v1841
    %2471 = vmatprep.subr.bf16.mxu0 %v1834
    %2472 = vmatpush2.bf16.msra.mxu0 %v1833
    %2473 = vmatprep.mubr.bf16.mxu0 %v696
    %2474 = vmatmul.mubr.bf16.gmra.mxu0 %v695
    %v2475 = vpop.f32.mrf.mxu0
    %v2476 = vadd.f32 %v976, %v2475
    %v2477 = vpop.f32.mrf.mxu0
    %v2478 = vadd.f32 %v980, %v2477
    %v2479 = vpop.f32.mrf.mxu0
    %v2480 = vpop.f32.mrf.mxu0
    %2481 = vdwg.mxu0
    %2482 = vmatprep.subr.bf16.mxu0 %v1954
    %2483 = vmatpush1.bf16.msra.mxu0 %v1953
    %2484 = vmatprep.subr.bf16.mxu0 %v1946
    %2485 = vmatpush1.bf16.msra.mxu0 %v1945
    %2486 = vmatprep.subr.bf16.mxu0 %v1938
    %2487 = vmatpush1.bf16.msra.mxu0 %v1937
    %2488 = vmatprep.subr.bf16.mxu0 %v1930
    %2489 = vmatpush1.bf16.msra.mxu0 %v1929
    %2490 = vmatprep.subr.bf16.mxu0 %v1922
    %2491 = vmatpush1.bf16.msra.mxu0 %v1921
    %2492 = vmatprep.subr.bf16.mxu0 %v1914
    %2493 = vmatpush1.bf16.msra.mxu0 %v1913
    %2494 = vmatprep.subr.bf16.mxu0 %v1906
    %2495 = vmatpush1.bf16.msra.mxu0 %v1905
    %2496 = vmatprep.subr.bf16.mxu0 %v1898
    %2497 = vmatpush1.bf16.msra.mxu0 %v1897
    %2498 = vmatprep.subr.bf16.mxu0 %v2018
    %2499 = vmatpush2.bf16.msra.mxu0 %v2017
    %2500 = vmatprep.subr.bf16.mxu0 %v2010
    %2501 = vmatpush2.bf16.msra.mxu0 %v2009
    %2502 = vmatprep.subr.bf16.mxu0 %v2002
    %2503 = vmatpush2.bf16.msra.mxu0 %v2001
    %2504 = vmatprep.subr.bf16.mxu0 %v1994
    %2505 = vmatpush2.bf16.msra.mxu0 %v1993
    %2506 = vmatprep.subr.bf16.mxu0 %v1986
    %2507 = vmatpush2.bf16.msra.mxu0 %v1985
    %2508 = vmatprep.subr.bf16.mxu0 %v1978
    %2509 = vmatpush2.bf16.msra.mxu0 %v1977
    %2510 = vmatprep.subr.bf16.mxu0 %v1970
    %2511 = vmatpush2.bf16.msra.mxu0 %v1969
    %2512 = vmatprep.subr.bf16.mxu0 %v1962
    %2513 = vmatpush2.bf16.msra.mxu0 %v1961
    %2514 = vmatprep.mubr.bf16.mxu0 %v698
    %2515 = vmatmul.mubr.bf16.gmra.mxu0 %v697
    %v2516 = vpop.f32.mrf.mxu0
    %v2517 = vadd.f32 %v2476, %v2516
    %v2518 = vpop.f32.mrf.mxu0
    %v2519 = vadd.f32 %v2478, %v2518
    %v2520 = vpop.f32.mrf.mxu0
    %v2521 = vpop.f32.mrf.mxu0
    %2522 = vdwg.mxu0
    %2523 = vmatprep.subr.bf16.mxu0 %v1828
    %2524 = vmatpush1.bf16.msra.mxu0 %v1827
    %2525 = vmatprep.subr.bf16.mxu0 %v1820
    %2526 = vmatpush1.bf16.msra.mxu0 %v1819
    %2527 = vmatprep.subr.bf16.mxu0 %v1812
    %2528 = vmatpush1.bf16.msra.mxu0 %v1811
    %2529 = vmatprep.subr.bf16.mxu0 %v1804
    %2530 = vmatpush1.bf16.msra.mxu0 %v1803
    %2531 = vmatprep.subr.bf16.mxu0 %v1796
    %2532 = vmatpush1.bf16.msra.mxu0 %v1795
    %2533 = vmatprep.subr.bf16.mxu0 %v1788
    %2534 = vmatpush1.bf16.msra.mxu0 %v1787
    %2535 = vmatprep.subr.bf16.mxu0 %v1780
    %2536 = vmatpush1.bf16.msra.mxu0 %v1779
    %2537 = vmatprep.subr.bf16.mxu0 %v1772
    %2538 = vmatpush1.bf16.msra.mxu0 %v1771
    %2539 = vmatprep.subr.bf16.mxu0 %v1892
    %2540 = vmatpush2.bf16.msra.mxu0 %v1891
    %2541 = vmatprep.subr.bf16.mxu0 %v1884
    %2542 = vmatpush2.bf16.msra.mxu0 %v1883
    %2543 = vmatprep.subr.bf16.mxu0 %v1876
    %2544 = vmatpush2.bf16.msra.mxu0 %v1875
    %2545 = vmatprep.subr.bf16.mxu0 %v1868
    %2546 = vmatpush2.bf16.msra.mxu0 %v1867
    %2547 = vmatprep.subr.bf16.mxu0 %v1860
    %2548 = vmatpush2.bf16.msra.mxu0 %v1859
    %2549 = vmatprep.subr.bf16.mxu0 %v1852
    %2550 = vmatpush2.bf16.msra.mxu0 %v1851
    %2551 = vmatprep.subr.bf16.mxu0 %v1844
    %2552 = vmatpush2.bf16.msra.mxu0 %v1843
    %2553 = vmatprep.subr.bf16.mxu0 %v1836
    %2554 = vmatpush2.bf16.msra.mxu0 %v1835
    %2555 = vmatprep.mubr.bf16.mxu0 %v696
    %2556 = vmatmul.mubr.bf16.gmra.mxu0 %v695
    %v2557 = vpop.f32.mrf.mxu0
    %v2558 = vadd.f32 %v984, %v2557
    %v2559 = vpop.f32.mrf.mxu0
    %v2560 = vadd.f32 %v988, %v2559
    %v2561 = vpop.f32.mrf.mxu0
    %v2562 = vpop.f32.mrf.mxu0
    %2563 = vdwg.mxu0
    %2564 = vmatprep.subr.bf16.mxu0 %v1956
    %2565 = vmatpush1.bf16.msra.mxu0 %v1955
    %2566 = vmatprep.subr.bf16.mxu0 %v1948
    %2567 = vmatpush1.bf16.msra.mxu0 %v1947
    %2568 = vmatprep.subr.bf16.mxu0 %v1940
    %2569 = vmatpush1.bf16.msra.mxu0 %v1939
    %2570 = vmatprep.subr.bf16.mxu0 %v1932
    %2571 = vmatpush1.bf16.msra.mxu0 %v1931
    %2572 = vmatprep.subr.bf16.mxu0 %v1924
    %2573 = vmatpush1.bf16.msra.mxu0 %v1923
    %2574 = vmatprep.subr.bf16.mxu0 %v1916
    %2575 = vmatpush1.bf16.msra.mxu0 %v1915
    %2576 = vmatprep.subr.bf16.mxu0 %v1908
    %2577 = vmatpush1.bf16.msra.mxu0 %v1907
    %2578 = vmatprep.subr.bf16.mxu0 %v1900
    %2579 = vmatpush1.bf16.msra.mxu0 %v1899
    %2580 = vmatprep.subr.bf16.mxu0 %v2020
    %2581 = vmatpush2.bf16.msra.mxu0 %v2019
    %2582 = vmatprep.subr.bf16.mxu0 %v2012
    %2583 = vmatpush2.bf16.msra.mxu0 %v2011
    %2584 = vmatprep.subr.bf16.mxu0 %v2004
    %2585 = vmatpush2.bf16.msra.mxu0 %v2003
    %2586 = vmatprep.subr.bf16.mxu0 %v1996
    %2587 = vmatpush2.bf16.msra.mxu0 %v1995
    %2588 = vmatprep.subr.bf16.mxu0 %v1988
    %2589 = vmatpush2.bf16.msra.mxu0 %v1987
    %2590 = vmatprep.subr.bf16.mxu0 %v1980
    %2591 = vmatpush2.bf16.msra.mxu0 %v1979
    %2592 = vmatprep.subr.bf16.mxu0 %v1972
    %2593 = vmatpush2.bf16.msra.mxu0 %v1971
    %2594 = vmatprep.subr.bf16.mxu0 %v1964
    %2595 = vmatpush2.bf16.msra.mxu0 %v1963
    %2596 = vmatprep.mubr.bf16.mxu0 %v698
    %2597 = vmatmul.mubr.bf16.gmra.mxu0 %v697
    %v2598 = vpop.f32.mrf.mxu0
    %v2599 = vadd.f32 %v2558, %v2598
    %v2600 = vpop.f32.mrf.mxu0
    %v2601 = vadd.f32 %v2560, %v2600
    %v2602 = vpop.f32.mrf.mxu0
    %v2603 = vpop.f32.mrf.mxu0
    %2604 = vdwg.mxu0
    %v2605 = vtanh.pop %v2353
    %v2606 = vtanh.pop %v2355
    %v2607 = vtanh.pop %v2435
    %v2608 = vtanh.pop %v2437
    %v2609 = vtanh.pop %v2517
    %v2610 = vtanh.pop %v2519
    %v2611 = vtanh.pop %v2599
    %v2612 = vtanh.pop %v2601
    %2613 = vst [vmem:[#allocation11] sm:$0xff] %v2605
    %2614 = vst [vmem:[#allocation11 + $0x8] sm:$0xff] %v2606
    %2615 = vst [vmem:[#allocation11 + $0x10] sm:$0xff] %v2607
    %2616 = vst [vmem:[#allocation11 + $0x18] sm:$0xff] %v2608
    %2617 = vst [vmem:[#allocation11 + $0x20] sm:$0xff] %v2609
    %2618 = vst [vmem:[#allocation11 + $0x28] sm:$0xff] %v2610
    %2619 = vst [vmem:[#allocation11 + $0x30] sm:$0xff] %v2611
    %2620 = vst [vmem:[#allocation11 + $0x38] sm:$0xff] %v2612
    // Predicated region
    $region50: #{tpu_custom_call.1} parent=1 // pred_check
      _
    $region51: #{tpu_custom_call.1} parent=1 // pred_check_branch
      %2622 = sbr.rel (0) target = $region53
    $region52: #{tpu_custom_call.1} parent=1 // pred_region
      %s2624 = ssub.s32 1024, 1024
      %2625 = vsyncadd [#allocation4], %s2624
      %s2627 = sshll.u32 [#allocation11], 4
      %s2628 = int_to_ptr.vmem [resolvable:$true] %s2627
      %2630 = dma.vmem_to_hbm [thread:$0]  %s2628, 1024, %s7, [#allocation4]
    $region53: #{tpu_custom_call.1} parent=1 // pred_fallthru
      _
    // Predicated region
    $region54: #{tpu_custom_call.1} parent=1 // pred_check
      _
    $region55: #{tpu_custom_call.1} parent=1 // pred_check_branch
      %2632 = sbr.rel (0) target = $region57
    $region56: #{tpu_custom_call.1} parent=1 // pred_region
      %2633 = dma.done [#allocation4], 1024
    $region57: #{tpu_custom_call.1} parent=1 // pred_fallthru
      _
    %2634 = vsyncpa [#allocation3], 1
    %2635 = vsyncpa [#allocation6], 1
    %2636 = vsyncpa [#allocation9], 1
    %2637 = vsyncpa [#allocation4], 1

// kernel: tpu_custom_call.1
$region0: #{tpu_custom_call.1}
  #allocation0 [shape = 'u32[]', space=smem, size = 0x4, offset = 0x4, fixed_abs, tag = 'smem constant byte address 0x4 - core index']
  #allocation1 [shape = 'u32[144,128]{1,0:T(1,128)}', space=vmem, size = 0x12000, scoped, tag = 'internal scratch']
  %s0 = inlined_call_operand.hbm [shape: f32[8,64], index: 0, kind: input, shape index: {}]
  %s1 = inlined_call_operand.hbm [shape: bf16[64,256], index: 1, kind: input, shape index: {}]
  %s2 = inlined_call_operand.vmem [shape: f32[1,256], index: 2, kind: input, shape index: {}]
  %s3 = inlined_call_operand.hbm [shape: bf16[256,512], index: 3, kind: input, shape index: {}]
  %s4 = inlined_call_operand.hbm [shape: f32[1,512], index: 4, kind: input, shape index: {}]
  %s5 = inlined_call_operand.hbm [shape: bf16[512,1024], index: 5, kind: input, shape index: {}]
  %s6 = inlined_call_operand.vmem [shape: f32[1,1024], index: 6, kind: input, shape index: {}]
  %s7 = inlined_call_operand.hbm [shape: f32[8,1024], index: 7, kind: output, shape index: {}]
  %s8 = sld [smem:[#allocation0]]
  $region58: #{tpu_custom_call.1} parent=0
    _
  %s10 = ssub.s32 1, %s8
  %s11 = scalar_select 0, %s10, %s8
  $region1: #{tpu_custom_call.1} parent=0
    #allocation2 [shape = 'u8[4096]{0}', space=vmem, size = 0x1000, scoped, tag = 'input window, operand 0, single buffered']
    #allocation3 [shape = 's32[1]{0}', space=sflag, size = 0x4, scoped, tag = 'scoped memory for tpu_custom_call.1']
    #allocation4 [shape = 's32[1]{0}', space=sflag, size = 0x4, scoped, tag = 'scoped memory for tpu_custom_call.1']
    #allocation5 [shape = 'u8[32768]{0}', space=vmem, size = 0x8000, scoped, tag = 'input window, operand 1, single buffered']
    #allocation6 [shape = 's32[1]{0}', space=sflag, size = 0x4, scoped, tag = 'scoped memory for tpu_custom_call.1']
    #allocation7 [shape = 'u8[262144]{0}', space=vmem, size = 0x40000, scoped, tag = 'input window, operand 3, single buffered']
    #allocation8 [shape = 'u8[2048]{0}', space=vmem, size = 0x800, scoped, tag = 'input window, operand 4, single buffered']
    #allocation9 [shape = 's32[1]{0}', space=sflag, size = 0x4, scoped, tag = 'scoped memory for tpu_custom_call.1']
    #allocation10 [shape = 'u8[1048576]{0}', space=vmem, size = 0x100000, scoped, tag = 'input window, operand 5, single buffered']
    #allocation11 [shape = 'u8[32768]{0}', space=vmem, size = 0x8000, scoped, tag = 'output window, operand 0, single buffered']
    %12 = vsyncpa [#allocation3], 0
    %13 = vsyncpa [#allocation6], 0
    %14 = vsyncpa [#allocation9], 0
    %15 = vsyncpa [#allocation4], 0
    // Predicated region
    $region2: #{tpu_custom_call.1} parent=1 // pred_check
      _
    $region3: #{tpu_custom_call.1} parent=1 // pred_check_branch
      %17 = sbr.rel (0) target = $region5
    $region4: #{tpu_custom_call.1} parent=1 // pred_region
      %s19 = ssub.s32 128, 128
      %20 = vsyncadd [#allocation3], %s19
      %s22 = sshll.u32 [#allocation2], 4
      %s23 = int_to_ptr.vmem [resolvable:$true] %s22
      %25 = dma.hbm_to_vmem [thread:$0]  %s0, 128, %s23, [#allocation3]
    $region5: #{tpu_custom_call.1} parent=1 // pred_fallthru
      _
    // Predicated region
    $region6: #{tpu_custom_call.1} parent=1 // pred_check
      _
    $region7: #{tpu_custom_call.1} parent=1 // pred_check_branch
      %27 = sbr.rel (0) target = $region9
    $region8: #{tpu_custom_call.1} parent=1 // pred_region
      %s29 = ssub.s32 1024, 1024
      %30 = vsyncadd [#allocation6], %s29
      %s31 = sshll.u32 [#allocation5], 4
      %s32 = int_to_ptr.vmem [resolvable:$true] %s31
      %37 = dma.hbm_to_vmem [thread:$0]  %s1, 1024, %s32, [#allocation6], 128, 128, 8
    $region9: #{tpu_custom_call.1} parent=1 // pred_fallthru
      _
    // Predicated region
    $region10: #{tpu_custom_call.1} parent=1 // pred_check
      _
    $region11: #{tpu_custom_call.1} parent=1 // pred_check_branch
      %39 = sbr.rel (0) target = $region13
    $region12: #{tpu_custom_call.1} parent=1 // pred_region
      _
    $region13: #{tpu_custom_call.1} parent=1 // pred_fallthru
      _
    // Predicated region
    $region14: #{tpu_custom_call.1} parent=1 // pred_check
      _
    $region15: #{tpu_custom_call.1} parent=1 // pred_check_branch
      %41 = sbr.rel (0) target = $region17
    $region16: #{tpu_custom_call.1} parent=1 // pred_region
      %s43 = ssub.s32 8192, 8192
      %44 = vsyncadd [#allocation6], %s43
      %s45 = sshll.u32 [#allocation7], 4
      %s46 = int_to_ptr.vmem [resolvable:$true] %s45
      %51 = dma.hbm_to_vmem [thread:$0]  %s3, 8192, %s46, [#allocation6], 256, 256, 16
    $region17: #{tpu_custom_call.1} parent=1 // pred_fallthru
      _
    // Predicated region
    $region18: #{tpu_custom_call.1} parent=1 // pred_check
      _
    $region19: #{tpu_custom_call.1} parent=1 // pred_check_branch
      %53 = sbr.rel (0) target = $region21
    $region20: #{tpu_custom_call.1} parent=1 // pred_region
      %s55 = ssub.s32 64, 64
      %56 = vsyncadd [#allocation9], %s55
      %s58 = sshll.u32 [#allocation8], 4
      %s59 = int_to_ptr.vmem [resolvable:$true] %s58
      %61 = dma.hbm_to_vmem [thread:$0]  %s4, 64, %s59, [#allocation9]
    $region21: #{tpu_custom_call.1} parent=1 // pred_fallthru
      _
    // Predicated region
    $region22: #{tpu_custom_call.1} parent=1 // pred_check
      _
    $region23: #{tpu_custom_call.1} parent=1 // pred_check_branch
      %63 = sbr.rel (0) target = $region25
    $region24: #{tpu_custom_call.1} parent=1 // pred_region
      %s65 = ssub.s32 32768, 32768
      %66 = vsyncadd [#allocation9], %s65
      %s67 = sshll.u32 [#allocation10], 4
      %s68 = int_to_ptr.vmem [resolvable:$true] %s67
      %73 = dma.hbm_to_vmem [thread:$0]  %s5, 32768, %s68, [#allocation9], 512, 512, 32
    $region25: #{tpu_custom_call.1} parent=1 // pred_fallthru
      _
    // Predicated region
    $region26: #{tpu_custom_call.1} parent=1 // pred_check
      _
    $region27: #{tpu_custom_call.1} parent=1 // pred_check_branch
      %75 = sbr.rel (0) target = $region29
    $region28: #{tpu_custom_call.1} parent=1 // pred_region
      _
    $region29: #{tpu_custom_call.1} parent=1 // pred_fallthru
      _
    // Predicated region
    $region30: #{tpu_custom_call.1} parent=1 // pred_check
      _
    $region31: #{tpu_custom_call.1} parent=1 // pred_check_branch
      %77 = sbr.rel (0) target = $region33
    $region32: #{tpu_custom_call.1} parent=1 // pred_region
      %78 = dma.done [#allocation3], 128
    $region33: #{tpu_custom_call.1} parent=1 // pred_fallthru
      _
    // Predicated region
    $region34: #{tpu_custom_call.1} parent=1 // pred_check
      _
    $region35: #{tpu_custom_call.1} parent=1 // pred_check_branch
      %80 = sbr.rel (0) target = $region37
    $region36: #{tpu_custom_call.1} parent=1 // pred_region
      %81 = dma.done [#allocation6], 1024
    $region37: #{tpu_custom_call.1} parent=1 // pred_fallthru
      _
    // Predicated region
    $region38: #{tpu_custom_call.1} parent=1 // pred_check
      _
    $region39: #{tpu_custom_call.1} parent=1 // pred_check_branch
      %83 = sbr.rel (0) target = $region41
    $region40: #{tpu_custom_call.1} parent=1 // pred_region
      %84 = dma.done [#allocation6], 8192
    $region41: #{tpu_custom_call.1} parent=1 // pred_fallthru
      _
    // Predicated region
    $region42: #{tpu_custom_call.1} parent=1 // pred_check
      _
    $region43: #{tpu_custom_call.1} parent=1 // pred_check_branch
      %86 = sbr.rel (0) target = $region45
    $region44: #{tpu_custom_call.1} parent=1 // pred_region
      %87 = dma.done [#allocation9], 64
    $region45: #{tpu_custom_call.1} parent=1 // pred_fallthru
      _
    // Predicated region
    $region46: #{tpu_custom_call.1} parent=1 // pred_check
      _
    $region47: #{tpu_custom_call.1} parent=1 // pred_check_branch
      %89 = sbr.rel (0) target = $region49
    $region48: #{tpu_custom_call.1} parent=1 // pred_region
      %90 = dma.done [#allocation9], 32768
    $region49: #{tpu_custom_call.1} parent=1 // pred_fallthru
      _
    %v92 = vld [vmem:[#allocation2] sm:$0xff]
    %v93 = vpack.c.bf16 %v92, %v92
    %v94 = vld [vmem:[#allocation5] sm:$0xff]
    %v95 = vld [vmem:[#allocation5 + $0x8] sm:$0xff]
    %v96 = vld [vmem:[#allocation5 + $0x10] sm:$0xff]
    %v97 = vld [vmem:[#allocation5 + $0x18] sm:$0xff]
    %v98 = vld [vmem:[#allocation5 + $0x20] sm:$0xff]
    %v99 = vld [vmem:[#allocation5 + $0x28] sm:$0xff]
    %v100 = vld [vmem:[#allocation5 + $0x30] sm:$0xff]
    %v101 = vld [vmem:[#allocation5 + $0x38] sm:$0xff]
    %v102 = vld [vmem:[%s2] sm:$0x3]
    %v104 = vlaneseq
    %v105 = vshrl.u32 %v104, 7
    %v106 = vsub.s32 0, %v105
    %v107 = vrot.slane %v102, %v106
    %v108 = vlaneseq
    %v109 = vshrl.u32 %v108, 7
    %v110 = vsub.s32 1, %v109
    %v111 = vrot.slane %v102, %v110
    %v122 = vunpack.c.l.b16 %v94
    %v123 = vunpack.c.h.b16 %v94
    %v124 = vunpack.c.l.b16 %v95
    %v125 = vunpack.c.h.b16 %v95
    %v126 = vunpack.c.l.b16 %v96
    %v127 = vunpack.c.h.b16 %v96
    %v128 = vunpack.c.l.b16 %v97
    %v129 = vunpack.c.h.b16 %v97
    %v130 = vunpack.c.l.b16 %v98
    %v131 = vunpack.c.h.b16 %v98
    %v132 = vunpack.c.l.b16 %v99
    %v133 = vunpack.c.h.b16 %v99
    %v134 = vunpack.c.l.b16 %v100
    %v135 = vunpack.c.h.b16 %v100
    %v136 = vunpack.c.l.b16 %v101
    %v137 = vunpack.c.h.b16 %v101
    %v138 = vpack.c.b16 %v124, %v122
    %v139 = vpack.c.b16 %v125, %v123
    %v140 = vpack.c.b16 %v128, %v126
    %v141 = vpack.c.b16 %v129, %v127
    %v142 = vpack.c.b16 %v132, %v130
    %v143 = vpack.c.b16 %v133, %v131
    %v144 = vpack.c.b16 %v136, %v134
    %v145 = vpack.c.b16 %v137, %v135
    %vm154 = vcmask 523264
    %v156 = vsel %vm154, %v93, 0
    %158 = vmatprep.subr.bf16.mxu0 0
    %159 = vmatpush1.bf16.msra.mxu0 0
    %160 = vmatprep.subr.bf16.mxu0 0
    %161 = vmatpush1.bf16.msra.mxu0 0
    %162 = vmatprep.subr.bf16.mxu0 0
    %163 = vmatpush1.bf16.msra.mxu0 0
    %164 = vmatprep.subr.bf16.mxu0 0
    %165 = vmatpush1.bf16.msra.mxu0 0
    %166 = vmatprep.subr.bf16.mxu0 %v145
    %167 = vmatpush1.bf16.msra.mxu0 %v144
    %168 = vmatprep.subr.bf16.mxu0 %v143
    %169 = vmatpush1.bf16.msra.mxu0 %v142
    %170 = vmatprep.subr.bf16.mxu0 %v141
    %171 = vmatpush1.bf16.msra.mxu0 %v140
    %172 = vmatprep.subr.bf16.mxu0 %v139
    %173 = vmatpush1.bf16.msra.mxu0 %v138
    %174 = vmatprep.subr.bf16.mxu0 0
    %175 = vmatpush2.bf16.msra.mxu0 0
    %176 = vmatprep.subr.bf16.mxu0 0
    %177 = vmatpush2.bf16.msra.mxu0 0
    %178 = vmatprep.subr.bf16.mxu0 0
    %179 = vmatpush2.bf16.msra.mxu0 0
    %180 = vmatprep.subr.bf16.mxu0 0
    %181 = vmatpush2.bf16.msra.mxu0 0
    %182 = vmatprep.subr.bf16.mxu0 0
    %183 = vmatpush2.bf16.msra.mxu0 0
    %184 = vmatprep.subr.bf16.mxu0 0
    %185 = vmatpush2.bf16.msra.mxu0 0
    %186 = vmatprep.subr.bf16.mxu0 0
    %187 = vmatpush2.bf16.msra.mxu0 0
    %188 = vmatprep.subr.bf16.mxu0 0
    %189 = vmatpush2.bf16.msra.mxu0 0
    %190 = vmatprep.mubr.bf16.mxu0 0
    %191 = vmatmul.mubr.bf16.gmra.mxu0 %v156
    %v192 = vpop.f32.mrf.mxu0
    %v193 = vadd.f32 %v107, %v192
    %v194 = vpop.f32.mrf.mxu0
    %v195 = vadd.f32 %v111, %v194
    %v196 = vpop.f32.mrf.mxu0
    %v197 = vpop.f32.mrf.mxu0
    %198 = vdwg.mxu0
    %v199 = vmax.f32 %v193, 0.0
    %v200 = vmax.f32 %v195, 0.0
    %v201 = vpack.c.bf16 %v199, %v199
    %v202 = vpack.c.bf16 %v200, %v200
    %v203 = vld [vmem:[#allocation7] sm:$0xff]
    %v204 = vld [vmem:[#allocation7 + $0x8] sm:$0xff]
    %v205 = vld [vmem:[#allocation7 + $0x10] sm:$0xff]
    %v206 = vld [vmem:[#allocation7 + $0x18] sm:$0xff]
    %v207 = vld [vmem:[#allocation7 + $0x20] sm:$0xff]
    %v208 = vld [vmem:[#allocation7 + $0x28] sm:$0xff]
    %v209 = vld [vmem:[#allocation7 + $0x30] sm:$0xff]
    %v210 = vld [vmem:[#allocation7 + $0x38] sm:$0xff]
    %v211 = vld [vmem:[#allocation7 + $0x40] sm:$0xff]
    %v212 = vld [vmem:[#allocation7 + $0x48] sm:$0xff]
    %v213 = vld [vmem:[#allocation7 + $0x50] sm:$0xff]
    %v214 = vld [vmem:[#allocation7 + $0x58] sm:$0xff]
    %v215 = vld [vmem:[#allocation7 + $0x60] sm:$0xff]
    %v216 = vld [vmem:[#allocation7 + $0x68] sm:$0xff]
    %v217 = vld [vmem:[#allocation7 + $0x70] sm:$0xff]
    %v218 = vld [vmem:[#allocation7 + $0x78] sm:$0xff]
    %v219 = vld [vmem:[#allocation7 + $0x80] sm:$0xff]
    %v220 = vld [vmem:[#allocation7 + $0x88] sm:$0xff]
    %v221 = vld [vmem:[#allocation7 + $0x90] sm:$0xff]
    %v222 = vld [vmem:[#allocation7 + $0x98] sm:$0xff]
    %v223 = vld [vmem:[#allocation7 + $0xa0] sm:$0xff]
    %v224 = vld [vmem:[#allocation7 + $0xa8] sm:$0xff]
    %v225 = vld [vmem:[#allocation7 + $0xb0] sm:$0xff]
    %v226 = vld [vmem:[#allocation7 + $0xb8] sm:$0xff]
    %v227 = vld [vmem:[#allocation7 + $0xc0] sm:$0xff]
    %v228 = vld [vmem:[#allocation7 + $0xc8] sm:$0xff]
    %v229 = vld [vmem:[#allocation7 + $0xd0] sm:$0xff]
    %v230 = vld [vmem:[#allocation7 + $0xd8] sm:$0xff]
    %v231 = vld [vmem:[#allocation7 + $0xe0] sm:$0xff]
    %v232 = vld [vmem:[#allocation7 + $0xe8] sm:$0xff]
    %v233 = vld [vmem:[#allocation7 + $0xf0] sm:$0xff]
    %v234 = vld [vmem:[#allocation7 + $0xf8] sm:$0xff]
    %v235 = vld [vmem:[#allocation7 + $0x100] sm:$0xff]
    %v236 = vld [vmem:[#allocation7 + $0x108] sm:$0xff]
    %v237 = vld [vmem:[#allocation7 + $0x110] sm:$0xff]
    %v238 = vld [vmem:[#allocation7 + $0x118] sm:$0xff]
    %v239 = vld [vmem:[#allocation7 + $0x120] sm:$0xff]
    %v240 = vld [vmem:[#allocation7 + $0x128] sm:$0xff]
    %v241 = vld [vmem:[#allocation7 + $0x130] sm:$0xff]
    %v242 = vld [vmem:[#allocation7 + $0x138] sm:$0xff]
    %v243 = vld [vmem:[#allocation7 + $0x140] sm:$0xff]
    %v244 = vld [vmem:[#allocation7 + $0x148] sm:$0xff]
    %v245 = vld [vmem:[#allocation7 + $0x150] sm:$0xff]
    %v246 = vld [vmem:[#allocation7 + $0x158] sm:$0xff]
    %v247 = vld [vmem:[#allocation7 + $0x160] sm:$0xff]
    %v248 = vld [vmem:[#allocation7 + $0x168] sm:$0xff]
    %v249 = vld [vmem:[#allocation7 + $0x170] sm:$0xff]
    %v250 = vld [vmem:[#allocation7 + $0x178] sm:$0xff]
    %v251 = vld [vmem:[#allocation7 + $0x180] sm:$0xff]
    %v252 = vld [vmem:[#allocation7 + $0x188] sm:$0xff]
    %v253 = vld [vmem:[#allocation7 + $0x190] sm:$0xff]
    %v254 = vld [vmem:[#allocation7 + $0x198] sm:$0xff]
    %v255 = vld [vmem:[#allocation7 + $0x1a0] sm:$0xff]
    %v256 = vld [vmem:[#allocation7 + $0x1a8] sm:$0xff]
    %v257 = vld [vmem:[#allocation7 + $0x1b0] sm:$0xff]
    %v258 = vld [vmem:[#allocation7 + $0x1b8] sm:$0xff]
    %v259 = vld [vmem:[#allocation7 + $0x1c0] sm:$0xff]
    %v260 = vld [vmem:[#allocation7 + $0x1c8] sm:$0xff]
    %v261 = vld [vmem:[#allocation7 + $0x1d0] sm:$0xff]
    %v262 = vld [vmem:[#allocation7 + $0x1d8] sm:$0xff]
    %v263 = vld [vmem:[#allocation7 + $0x1e0] sm:$0xff]
    %v264 = vld [vmem:[#allocation7 + $0x1e8] sm:$0xff]
    %v265 = vld [vmem:[#allocation7 + $0x1f0] sm:$0xff]
    %v266 = vld [vmem:[#allocation7 + $0x1f8] sm:$0xff]
    %v267 = vld [vmem:[#allocation8] sm:$0xf]
    %v269 = vlaneseq
    %v270 = vshrl.u32 %v269, 7
    %v271 = vsub.s32 0, %v270
    %v272 = vrot.slane %v267, %v271
    %v273 = vlaneseq
    %v274 = vshrl.u32 %v273, 7
    %v275 = vsub.s32 1, %v274
    %v276 = vrot.slane %v267, %v275
    %v277 = vlaneseq
    %v278 = vshrl.u32 %v277, 7
    %v279 = vsub.s32 2, %v278
    %v280 = vrot.slane %v267, %v279
    %v281 = vlaneseq
    %v282 = vshrl.u32 %v281, 7
    %v283 = vsub.s32 3, %v282
    %v284 = vrot.slane %v267, %v283
    %v353 = vunpack.c.l.b16 %v203
    %v354 = vunpack.c.h.b16 %v203
    %v355 = vunpack.c.l.b16 %v204
    %v356 = vunpack.c.h.b16 %v204
    %v357 = vunpack.c.l.b16 %v205
    %v358 = vunpack.c.h.b16 %v205
    %v359 = vunpack.c.l.b16 %v206
    %v360 = vunpack.c.h.b16 %v206
    %v361 = vunpack.c.l.b16 %v207
    %v362 = vunpack.c.h.b16 %v207
    %v363 = vunpack.c.l.b16 %v208
    %v364 = vunpack.c.h.b16 %v208
    %v365 = vunpack.c.l.b16 %v209
    %v366 = vunpack.c.h.b16 %v209
    %v367 = vunpack.c.l.b16 %v210
    %v368 = vunpack.c.h.b16 %v210
    %v369 = vunpack.c.l.b16 %v211
    %v370 = vunpack.c.h.b16 %v211
    %v371 = vunpack.c.l.b16 %v212
    %v372 = vunpack.c.h.b16 %v212
    %v373 = vunpack.c.l.b16 %v213
    %v374 = vunpack.c.h.b16 %v213
    %v375 = vunpack.c.l.b16 %v214
    %v376 = vunpack.c.h.b16 %v214
    %v377 = vunpack.c.l.b16 %v215
    %v378 = vunpack.c.h.b16 %v215
    %v379 = vunpack.c.l.b16 %v216
    %v380 = vunpack.c.h.b16 %v216
    %v381 = vunpack.c.l.b16 %v217
    %v382 = vunpack.c.h.b16 %v217
    %v383 = vunpack.c.l.b16 %v218
    %v384 = vunpack.c.h.b16 %v218
    %v385 = vunpack.c.l.b16 %v219
    %v386 = vunpack.c.h.b16 %v219
    %v387 = vunpack.c.l.b16 %v220
    %v388 = vunpack.c.h.b16 %v220
    %v389 = vunpack.c.l.b16 %v221
    %v390 = vunpack.c.h.b16 %v221
    %v391 = vunpack.c.l.b16 %v222
    %v392 = vunpack.c.h.b16 %v222
    %v393 = vunpack.c.l.b16 %v223
    %v394 = vunpack.c.h.b16 %v223
    %v395 = vunpack.c.l.b16 %v224
    %v396 = vunpack.c.h.b16 %v224
    %v397 = vunpack.c.l.b16 %v225
    %v398 = vunpack.c.h.b16 %v225
    %v399 = vunpack.c.l.b16 %v226
    %v400 = vunpack.c.h.b16 %v226
    %v401 = vunpack.c.l.b16 %v227
    %v402 = vunpack.c.h.b16 %v227
    %v403 = vunpack.c.l.b16 %v228
    %v404 = vunpack.c.h.b16 %v228
    %v405 = vunpack.c.l.b16 %v229
    %v406 = vunpack.c.h.b16 %v229
    %v407 = vunpack.c.l.b16 %v230
    %v408 = vunpack.c.h.b16 %v230
    %v409 = vunpack.c.l.b16 %v231
    %v410 = vunpack.c.h.b16 %v231
    %v411 = vunpack.c.l.b16 %v232
    %v412 = vunpack.c.h.b16 %v232
    %v413 = vunpack.c.l.b16 %v233
    %v414 = vunpack.c.h.b16 %v233
    %v415 = vunpack.c.l.b16 %v234
    %v416 = vunpack.c.h.b16 %v234
    %v417 = vunpack.c.l.b16 %v235
    %v418 = vunpack.c.h.b16 %v235
    %v419 = vunpack.c.l.b16 %v236
    %v420 = vunpack.c.h.b16 %v236
    %v421 = vunpack.c.l.b16 %v237
    %v422 = vunpack.c.h.b16 %v237
    %v423 = vunpack.c.l.b16 %v238
    %v424 = vunpack.c.h.b16 %v238
    %v425 = vunpack.c.l.b16 %v239
    %v426 = vunpack.c.h.b16 %v239
    %v427 = vunpack.c.l.b16 %v240
    %v428 = vunpack.c.h.b16 %v240
    %v429 = vunpack.c.l.b16 %v241
    %v430 = vunpack.c.h.b16 %v241
    %v431 = vunpack.c.l.b16 %v242
    %v432 = vunpack.c.h.b16 %v242
    %v433 = vunpack.c.l.b16 %v243
    %v434 = vunpack.c.h.b16 %v243
    %v435 = vunpack.c.l.b16 %v244
    %v436 = vunpack.c.h.b16 %v244
    %v437 = vunpack.c.l.b16 %v245
    %v438 = vunpack.c.h.b16 %v245
    %v439 = vunpack.c.l.b16 %v246
    %v440 = vunpack.c.h.b16 %v246
    %v441 = vunpack.c.l.b16 %v247
    %v442 = vunpack.c.h.b16 %v247
    %v443 = vunpack.c.l.b16 %v248
    %v444 = vunpack.c.h.b16 %v248
    %v445 = vunpack.c.l.b16 %v249
    %v446 = vunpack.c.h.b16 %v249
    %v447 = vunpack.c.l.b16 %v250
    %v448 = vunpack.c.h.b16 %v250
    %v449 = vunpack.c.l.b16 %v251
    %v450 = vunpack.c.h.b16 %v251
    %v451 = vunpack.c.l.b16 %v252
    %v452 = vunpack.c.h.b16 %v252
    %v453 = vunpack.c.l.b16 %v253
    %v454 = vunpack.c.h.b16 %v253
    %v455 = vunpack.c.l.b16 %v254
    %v456 = vunpack.c.h.b16 %v254
    %v457 = vunpack.c.l.b16 %v255
    %v458 = vunpack.c.h.b16 %v255
    %v459 = vunpack.c.l.b16 %v256
    %v460 = vunpack.c.h.b16 %v256
    %v461 = vunpack.c.l.b16 %v257
    %v462 = vunpack.c.h.b16 %v257
    %v463 = vunpack.c.l.b16 %v258
    %v464 = vunpack.c.h.b16 %v258
    %v465 = vunpack.c.l.b16 %v259
    %v466 = vunpack.c.h.b16 %v259
    %v467 = vunpack.c.l.b16 %v260
    %v468 = vunpack.c.h.b16 %v260
    %v469 = vunpack.c.l.b16 %v261
    %v470 = vunpack.c.h.b16 %v261
    %v471 = vunpack.c.l.b16 %v262
    %v472 = vunpack.c.h.b16 %v262
    %v473 = vunpack.c.l.b16 %v263
    %v474 = vunpack.c.h.b16 %v263
    %v475 = vunpack.c.l.b16 %v264
    %v476 = vunpack.c.h.b16 %v264
    %v477 = vunpack.c.l.b16 %v265
    %v478 = vunpack.c.h.b16 %v265
    %v479 = vunpack.c.l.b16 %v266
    %v480 = vunpack.c.h.b16 %v266
    %v481 = vpack.c.b16 %v357, %v353
    %v482 = vpack.c.b16 %v358, %v354
    %v483 = vpack.c.b16 %v359, %v355
    %v484 = vpack.c.b16 %v360, %v356
    %v485 = vpack.c.b16 %v365, %v361
    %v486 = vpack.c.b16 %v366, %v362
    %v487 = vpack.c.b16 %v367, %v363
    %v488 = vpack.c.b16 %v368, %v364
    %v489 = vpack.c.b16 %v373, %v369
    %v490 = vpack.c.b16 %v374, %v370
    %v491 = vpack.c.b16 %v375, %v371
    %v492 = vpack.c.b16 %v376, %v372
    %v493 = vpack.c.b16 %v381, %v377
    %v494 = vpack.c.b16 %v382, %v378
    %v495 = vpack.c.b16 %v383, %v379
    %v496 = vpack.c.b16 %v384, %v380
    %v497 = vpack.c.b16 %v389, %v385
    %v498 = vpack.c.b16 %v390, %v386
    %v499 = vpack.c.b16 %v391, %v387
    %v500 = vpack.c.b16 %v392, %v388
    %v501 = vpack.c.b16 %v397, %v393
    %v502 = vpack.c.b16 %v398, %v394
    %v503 = vpack.c.b16 %v399, %v395
    %v504 = vpack.c.b16 %v400, %v396
    %v505 = vpack.c.b16 %v405, %v401
    %v506 = vpack.c.b16 %v406, %v402
    %v507 = vpack.c.b16 %v407, %v403
    %v508 = vpack.c.b16 %v408, %v404
    %v509 = vpack.c.b16 %v413, %v409
    %v510 = vpack.c.b16 %v414, %v410
    %v511 = vpack.c.b16 %v415, %v411
    %v512 = vpack.c.b16 %v416, %v412
    %v513 = vpack.c.b16 %v421, %v417
    %v514 = vpack.c.b16 %v422, %v418
    %v515 = vpack.c.b16 %v423, %v419
    %v516 = vpack.c.b16 %v424, %v420
    %v517 = vpack.c.b16 %v429, %v425
    %v518 = vpack.c.b16 %v430, %v426
    %v519 = vpack.c.b16 %v431, %v427
    %v520 = vpack.c.b16 %v432, %v428
    %v521 = vpack.c.b16 %v437, %v433
    %v522 = vpack.c.b16 %v438, %v434
    %v523 = vpack.c.b16 %v439, %v435
    %v524 = vpack.c.b16 %v440, %v436
    %v525 = vpack.c.b16 %v445, %v441
    %v526 = vpack.c.b16 %v446, %v442
    %v527 = vpack.c.b16 %v447, %v443
    %v528 = vpack.c.b16 %v448, %v444
    %v529 = vpack.c.b16 %v453, %v449
    %v530 = vpack.c.b16 %v454, %v450
    %v531 = vpack.c.b16 %v455, %v451
    %v532 = vpack.c.b16 %v456, %v452
    %v533 = vpack.c.b16 %v461, %v457
    %v534 = vpack.c.b16 %v462, %v458
    %v535 = vpack.c.b16 %v463, %v459
    %v536 = vpack.c.b16 %v464, %v460
    %v537 = vpack.c.b16 %v469, %v465
    %v538 = vpack.c.b16 %v470, %v466
    %v539 = vpack.c.b16 %v471, %v467
    %v540 = vpack.c.b16 %v472, %v468
    %v541 = vpack.c.b16 %v477, %v473
    %v542 = vpack.c.b16 %v478, %v474
    %v543 = vpack.c.b16 %v479, %v475
    %v544 = vpack.c.b16 %v480, %v476
    %609 = vmatprep.subr.bf16.mxu0 %v510
    %610 = vmatpush1.bf16.msra.mxu0 %v509
    %611 = vmatprep.subr.bf16.mxu0 %v506
    %612 = vmatpush1.bf16.msra.mxu0 %v505
    %613 = vmatprep.subr.bf16.mxu0 %v502
    %614 = vmatpush1.bf16.msra.mxu0 %v501
    %615 = vmatprep.subr.bf16.mxu0 %v498
    %616 = vmatpush1.bf16.msra.mxu0 %v497
    %617 = vmatprep.subr.bf16.mxu0 %v494
    %618 = vmatpush1.bf16.msra.mxu0 %v493
    %619 = vmatprep.subr.bf16.mxu0 %v490
    %620 = vmatpush1.bf16.msra.mxu0 %v489
    %621 = vmatprep.subr.bf16.mxu0 %v486
    %622 = vmatpush1.bf16.msra.mxu0 %v485
    %623 = vmatprep.subr.bf16.mxu0 %v482
    %624 = vmatpush1.bf16.msra.mxu0 %v481
    %625 = vmatprep.subr.bf16.mxu0 %v542
    %626 = vmatpush2.bf16.msra.mxu0 %v541
    %627 = vmatprep.subr.bf16.mxu0 %v538
    %628 = vmatpush2.bf16.msra.mxu0 %v537
    %629 = vmatprep.subr.bf16.mxu0 %v534
    %630 = vmatpush2.bf16.msra.mxu0 %v533
    %631 = vmatprep.subr.bf16.mxu0 %v530
    %632 = vmatpush2.bf16.msra.mxu0 %v529
    %633 = vmatprep.subr.bf16.mxu0 %v526
    %634 = vmatpush2.bf16.msra.mxu0 %v525
    %635 = vmatprep.subr.bf16.mxu0 %v522
    %636 = vmatpush2.bf16.msra.mxu0 %v521
    %637 = vmatprep.subr.bf16.mxu0 %v518
    %638 = vmatpush2.bf16.msra.mxu0 %v517
    %639 = vmatprep.subr.bf16.mxu0 %v514
    %640 = vmatpush2.bf16.msra.mxu0 %v513
    %641 = vmatprep.mubr.bf16.mxu0 %v202
    %642 = vmatmul.mubr.bf16.gmra.mxu0 %v201
    %v643 = vpop.f32.mrf.mxu0
    %v644 = vadd.f32 %v272, %v643
    %v645 = vpop.f32.mrf.mxu0
    %v646 = vadd.f32 %v276, %v645
    %v647 = vpop.f32.mrf.mxu0
    %v648 = vpop.f32.mrf.mxu0
    %649 = vdwg.mxu0
    %650 = vmatprep.subr.bf16.mxu0 %v512
    %651 = vmatpush1.bf16.msra.mxu0 %v511
    %652 = vmatprep.subr.bf16.mxu0 %v508
    %653 = vmatpush1.bf16.msra.mxu0 %v507
    %654 = vmatprep.subr.bf16.mxu0 %v504
    %655 = vmatpush1.bf16.msra.mxu0 %v503
    %656 = vmatprep.subr.bf16.mxu0 %v500
    %657 = vmatpush1.bf16.msra.mxu0 %v499
    %658 = vmatprep.subr.bf16.mxu0 %v496
    %659 = vmatpush1.bf16.msra.mxu0 %v495
    %660 = vmatprep.subr.bf16.mxu0 %v492
    %661 = vmatpush1.bf16.msra.mxu0 %v491
    %662 = vmatprep.subr.bf16.mxu0 %v488
    %663 = vmatpush1.bf16.msra.mxu0 %v487
    %664 = vmatprep.subr.bf16.mxu0 %v484
    %665 = vmatpush1.bf16.msra.mxu0 %v483
    %666 = vmatprep.subr.bf16.mxu0 %v544
    %667 = vmatpush2.bf16.msra.mxu0 %v543
    %668 = vmatprep.subr.bf16.mxu0 %v540
    %669 = vmatpush2.bf16.msra.mxu0 %v539
    %670 = vmatprep.subr.bf16.mxu0 %v536
    %671 = vmatpush2.bf16.msra.mxu0 %v535
    %672 = vmatprep.subr.bf16.mxu0 %v532
    %673 = vmatpush2.bf16.msra.mxu0 %v531
    %674 = vmatprep.subr.bf16.mxu0 %v528
    %675 = vmatpush2.bf16.msra.mxu0 %v527
    %676 = vmatprep.subr.bf16.mxu0 %v524
    %677 = vmatpush2.bf16.msra.mxu0 %v523
    %678 = vmatprep.subr.bf16.mxu0 %v520
    %679 = vmatpush2.bf16.msra.mxu0 %v519
    %680 = vmatprep.subr.bf16.mxu0 %v516
    %681 = vmatpush2.bf16.msra.mxu0 %v515
    %682 = vmatprep.mubr.bf16.mxu0 %v202
    %683 = vmatmul.mubr.bf16.gmra.mxu0 %v201
    %v684 = vpop.f32.mrf.mxu0
    %v685 = vadd.f32 %v280, %v684
    %v686 = vpop.f32.mrf.mxu0
    %v687 = vadd.f32 %v284, %v686
    %v688 = vpop.f32.mrf.mxu0
    %v689 = vpop.f32.mrf.mxu0
    %690 = vdwg.mxu0
    %v691 = vmax.f32 %v644, 0.0
    %v692 = vmax.f32 %v646, 0.0
    %v693 = vmax.f32 %v685, 0.0
    %v694 = vmax.f32 %v687, 0.0
    %v695 = vpack.c.bf16 %v691, %v691
    %v696 = vpack.c.bf16 %v692, %v692
    %v697 = vpack.c.bf16 %v693, %v693
    %v698 = vpack.c.bf16 %v694, %v694
    %v699 = vld [vmem:[#allocation10] sm:$0xff]
    %v700 = vld [vmem:[#allocation10 + $0x8] sm:$0xff]
    %v701 = vld [vmem:[#allocation10 + $0x10] sm:$0xff]
    %v702 = vld [vmem:[#allocation10 + $0x18] sm:$0xff]
    %v703 = vld [vmem:[#allocation10 + $0x20] sm:$0xff]
    %v704 = vld [vmem:[#allocation10 + $0x28] sm:$0xff]
    %v705 = vld [vmem:[#allocation10 + $0x30] sm:$0xff]
    %v706 = vld [vmem:[#allocation10 + $0x38] sm:$0xff]
    %v707 = vld [vmem:[#allocation10 + $0x40] sm:$0xff]
    %v708 = vld [vmem:[#allocation10 + $0x48] sm:$0xff]
    %v709 = vld [vmem:[#allocation10 + $0x50] sm:$0xff]
    %v710 = vld [vmem:[#allocation10 + $0x58] sm:$0xff]
    %v711 = vld [vmem:[#allocation10 + $0x60] sm:$0xff]
    %v712 = vld [vmem:[#allocation10 + $0x68] sm:$0xff]
    %v713 = vld [vmem:[#allocation10 + $0x70] sm:$0xff]
    %v714 = vld [vmem:[#allocation10 + $0x78] sm:$0xff]
    %v715 = vld [vmem:[#allocation10 + $0x80] sm:$0xff]
    %v716 = vld [vmem:[#allocation10 + $0x88] sm:$0xff]
    %v717 = vld [vmem:[#allocation10 + $0x90] sm:$0xff]
    %v718 = vld [vmem:[#allocation10 + $0x98] sm:$0xff]
    %v719 = vld [vmem:[#allocation10 + $0xa0] sm:$0xff]
    %v720 = vld [vmem:[#allocation10 + $0xa8] sm:$0xff]
    %v721 = vld [vmem:[#allocation10 + $0xb0] sm:$0xff]
    %v722 = vld [vmem:[#allocation10 + $0xb8] sm:$0xff]
    %v723 = vld [vmem:[#allocation10 + $0xc0] sm:$0xff]
    %v724 = vld [vmem:[#allocation10 + $0xc8] sm:$0xff]
    %v725 = vld [vmem:[#allocation10 + $0xd0] sm:$0xff]
    %v726 = vld [vmem:[#allocation10 + $0xd8] sm:$0xff]
    %v727 = vld [vmem:[#allocation10 + $0xe0] sm:$0xff]
    %v728 = vld [vmem:[#allocation10 + $0xe8] sm:$0xff]
    %v729 = vld [vmem:[#allocation10 + $0xf0] sm:$0xff]
    %v730 = vld [vmem:[#allocation10 + $0xf8] sm:$0xff]
    %v731 = vld [vmem:[#allocation10 + $0x100] sm:$0xff]
    %v732 = vld [vmem:[#allocation10 + $0x108] sm:$0xff]
    %v733 = vld [vmem:[#allocation10 + $0x110] sm:$0xff]
    %v734 = vld [vmem:[#allocation10 + $0x118] sm:$0xff]
    %v735 = vld [vmem:[#allocation10 + $0x120] sm:$0xff]
    %v736 = vld [vmem:[#allocation10 + $0x128] sm:$0xff]
    %v737 = vld [vmem:[#allocation10 + $0x130] sm:$0xff]
    %v738 = vld [vmem:[#allocation10 + $0x138] sm:$0xff]
    %v739 = vld [vmem:[#allocation10 + $0x140] sm:$0xff]
    %v740 = vld [vmem:[#allocation10 + $0x148] sm:$0xff]
    %v741 = vld [vmem:[#allocation10 + $0x150] sm:$0xff]
    %v742 = vld [vmem:[#allocation10 + $0x158] sm:$0xff]
    %v743 = vld [vmem:[#allocation10 + $0x160] sm:$0xff]
    %v744 = vld [vmem:[#allocation10 + $0x168] sm:$0xff]
    %v745 = vld [vmem:[#allocation10 + $0x170] sm:$0xff]
    %v746 = vld [vmem:[#allocation10 + $0x178] sm:$0xff]
    %v747 = vld [vmem:[#allocation10 + $0x180] sm:$0xff]
    %v748 = vld [vmem:[#allocation10 + $0x188] sm:$0xff]
    %v749 = vld [vmem:[#allocation10 + $0x190] sm:$0xff]
    %v750 = vld [vmem:[#allocation10 + $0x198] sm:$0xff]
    %v751 = vld [vmem:[#allocation10 + $0x1a0] sm:$0xff]
    %v752 = vld [vmem:[#allocation10 + $0x1a8] sm:$0xff]
    %v753 = vld [vmem:[#allocation10 + $0x1b0] sm:$0xff]
    %v754 = vld [vmem:[#allocation10 + $0x1b8] sm:$0xff]
    %v755 = vld [vmem:[#allocation10 + $0x1c0] sm:$0xff]
    %v756 = vld [vmem:[#allocation10 + $0x1c8] sm:$0xff]
    %v757 = vld [vmem:[#allocation10 + $0x1d0] sm:$0xff]
    %v758 = vld [vmem:[#allocation10 + $0x1d8] sm:$0xff]
    %v759 = vld [vmem:[#allocation10 + $0x1e0] sm:$0xff]
    %v760 = vld [vmem:[#allocation10 + $0x1e8] sm:$0xff]
    %v761 = vld [vmem:[#allocation10 + $0x1f0] sm:$0xff]
    %v762 = vld [vmem:[#allocation10 + $0x1f8] sm:$0xff]
    %v763 = vld [vmem:[#allocation10 + $0x200] sm:$0xff]
    %v764 = vld [vmem:[#allocation10 + $0x208] sm:$0xff]
    %v765 = vld [vmem:[#allocation10 + $0x210] sm:$0xff]
    %v766 = vld [vmem:[#allocation10 + $0x218] sm:$0xff]
    %v767 = vld [vmem:[#allocation10 + $0x220] sm:$0xff]
    %v768 = vld [vmem:[#allocation10 + $0x228] sm:$0xff]
    %v769 = vld [vmem:[#allocation10 + $0x230] sm:$0xff]
    %v770 = vld [vmem:[#allocation10 + $0x238] sm:$0xff]
    %v771 = vld [vmem:[#allocation10 + $0x240] sm:$0xff]
    %v772 = vld [vmem:[#allocation10 + $0x248] sm:$0xff]
    %v773 = vld [vmem:[#allocation10 + $0x250] sm:$0xff]
    %v774 = vld [vmem:[#allocation10 + $0x258] sm:$0xff]
    %v775 = vld [vmem:[#allocation10 + $0x260] sm:$0xff]
    %v776 = vld [vmem:[#allocation10 + $0x268] sm:$0xff]
    %v777 = vld [vmem:[#allocation10 + $0x270] sm:$0xff]
    %v778 = vld [vmem:[#allocation10 + $0x278] sm:$0xff]
    %v779 = vld [vmem:[#allocation10 + $0x280] sm:$0xff]
    %v780 = vld [vmem:[#allocation10 + $0x288] sm:$0xff]
    %v781 = vld [vmem:[#allocation10 + $0x290] sm:$0xff]
    %v782 = vld [vmem:[#allocation10 + $0x298] sm:$0xff]
    %v783 = vld [vmem:[#allocation10 + $0x2a0] sm:$0xff]
    %v784 = vld [vmem:[#allocation10 + $0x2a8] sm:$0xff]
    %v785 = vld [vmem:[#allocation10 + $0x2b0] sm:$0xff]
    %v786 = vld [vmem:[#allocation10 + $0x2b8] sm:$0xff]
    %v787 = vld [vmem:[#allocation10 + $0x2c0] sm:$0xff]
    %v788 = vld [vmem:[#allocation10 + $0x2c8] sm:$0xff]
    %v789 = vld [vmem:[#allocation10 + $0x2d0] sm:$0xff]
    %v790 = vld [vmem:[#allocation10 + $0x2d8] sm:$0xff]
    %v791 = vld [vmem:[#allocation10 + $0x2e0] sm:$0xff]
    %v792 = vld [vmem:[#allocation10 + $0x2e8] sm:$0xff]
    %v793 = vld [vmem:[#allocation10 + $0x2f0] sm:$0xff]
    %v794 = vld [vmem:[#allocation10 + $0x2f8] sm:$0xff]
    %v795 = vld [vmem:[#allocation10 + $0x300] sm:$0xff]
    %v796 = vld [vmem:[#allocation10 + $0x308] sm:$0xff]
    %v797 = vld [vmem:[#allocation10 + $0x310] sm:$0xff]
    %v798 = vld [vmem:[#allocation10 + $0x318] sm:$0xff]
    %v799 = vld [vmem:[#allocation10 + $0x320] sm:$0xff]
    %v800 = vld [vmem:[#allocation10 + $0x328] sm:$0xff]
    %v801 = vld [vmem:[#allocation10 + $0x330] sm:$0xff]
    %v802 = vld [vmem:[#allocation10 + $0x338] sm:$0xff]
    %v803 = vld [vmem:[#allocation10 + $0x340] sm:$0xff]
    %v804 = vld [vmem:[#allocation10 + $0x348] sm:$0xff]
    %v805 = vld [vmem:[#allocation10 + $0x350] sm:$0xff]
    %v806 = vld [vmem:[#allocation10 + $0x358] sm:$0xff]
    %v807 = vld [vmem:[#allocation10 + $0x360] sm:$0xff]
    %v808 = vld [vmem:[#allocation10 + $0x368] sm:$0xff]
    %v809 = vld [vmem:[#allocation10 + $0x370] sm:$0xff]
    %v810 = vld [vmem:[#allocation10 + $0x378] sm:$0xff]
    %v811 = vld [vmem:[#allocation10 + $0x380] sm:$0xff]
    %v812 = vld [vmem:[#allocation10 + $0x388] sm:$0xff]
    %v813 = vld [vmem:[#allocation10 + $0x390] sm:$0xff]
    %v814 = vld [vmem:[#allocation10 + $0x398] sm:$0xff]
    %v815 = vld [vmem:[#allocation10 + $0x3a0] sm:$0xff]
    %v816 = vld [vmem:[#allocation10 + $0x3a8] sm:$0xff]
    %v817 = vld [vmem:[#allocation10 + $0x3b0] sm:$0xff]
    %v818 = vld [vmem:[#allocation10 + $0x3b8] sm:$0xff]
    %v819 = vld [vmem:[#allocation10 + $0x3c0] sm:$0xff]
    %v820 = vld [vmem:[#allocation10 + $0x3c8] sm:$0xff]
    %v821 = vld [vmem:[#allocation10 + $0x3d0] sm:$0xff]
    %v822 = vld [vmem:[#allocation10 + $0x3d8] sm:$0xff]
    %v823 = vld [vmem:[#allocation10 + $0x3e0] sm:$0xff]
    %v824 = vld [vmem:[#allocation10 + $0x3e8] sm:$0xff]
    %v825 = vld [vmem:[#allocation10 + $0x3f0] sm:$0xff]
    %v826 = vld [vmem:[#allocation10 + $0x3f8] sm:$0xff]
    %v827 = vld [vmem:[#allocation10 + $0x400] sm:$0xff]
    %v828 = vld [vmem:[#allocation10 + $0x408] sm:$0xff]
    %v829 = vld [vmem:[#allocation10 + $0x410] sm:$0xff]
    %v830 = vld [vmem:[#allocation10 + $0x418] sm:$0xff]
    %v831 = vld [vmem:[#allocation10 + $0x420] sm:$0xff]
    %v832 = vld [vmem:[#allocation10 + $0x428] sm:$0xff]
    %v833 = vld [vmem:[#allocation10 + $0x430] sm:$0xff]
    %v834 = vld [vmem:[#allocation10 + $0x438] sm:$0xff]
    %v835 = vld [vmem:[#allocation10 + $0x440] sm:$0xff]
    %v836 = vld [vmem:[#allocation10 + $0x448] sm:$0xff]
    %v837 = vld [vmem:[#allocation10 + $0x450] sm:$0xff]
    %v838 = vld [vmem:[#allocation10 + $0x458] sm:$0xff]
    %v839 = vld [vmem:[#allocation10 + $0x460] sm:$0xff]
    %v840 = vld [vmem:[#allocation10 + $0x468] sm:$0xff]
    %v841 = vld [vmem:[#allocation10 + $0x470] sm:$0xff]
    %v842 = vld [vmem:[#allocation10 + $0x478] sm:$0xff]
    %v843 = vld [vmem:[#allocation10 + $0x480] sm:$0xff]
    %v844 = vld [vmem:[#allocation10 + $0x488] sm:$0xff]
    %v845 = vld [vmem:[#allocation10 + $0x490] sm:$0xff]
    %v846 = vld [vmem:[#allocation10 + $0x498] sm:$0xff]
    %v847 = vld [vmem:[#allocation10 + $0x4a0] sm:$0xff]
    %v848 = vld [vmem:[#allocation10 + $0x4a8] sm:$0xff]
    %v849 = vld [vmem:[#allocation10 + $0x4b0] sm:$0xff]
    %v850 = vld [vmem:[#allocation10 + $0x4b8] sm:$0xff]
    %v851 = vld [vmem:[#allocation10 + $0x4c0] sm:$0xff]
    %v852 = vld [vmem:[#allocation10 + $0x4c8] sm:$0xff]
    %v853 = vld [vmem:[#allocation10 + $0x4d0] sm:$0xff]
    %v854 = vld [vmem:[#allocation10 + $0x4d8] sm:$0xff]
    %v855 = vld [vmem:[#allocation10 + $0x4e0] sm:$0xff]
    %v856 = vld [vmem:[#allocation10 + $0x4e8] sm:$0xff]
    %v857 = vld [vmem:[#allocation10 + $0x4f0] sm:$0xff]
    %v858 = vld [vmem:[#allocation10 + $0x4f8] sm:$0xff]
    %v859 = vld [vmem:[#allocation10 + $0x500] sm:$0xff]
    %v860 = vld [vmem:[#allocation10 + $0x508] sm:$0xff]
    %v861 = vld [vmem:[#allocation10 + $0x510] sm:$0xff]
    %v862 = vld [vmem:[#allocation10 + $0x518] sm:$0xff]
    %v863 = vld [vmem:[#allocation10 + $0x520] sm:$0xff]
    %v864 = vld [vmem:[#allocation10 + $0x528] sm:$0xff]
    %v865 = vld [vmem:[#allocation10 + $0x530] sm:$0xff]
    %v866 = vld [vmem:[#allocation10 + $0x538] sm:$0xff]
    %v867 = vld [vmem:[#allocation10 + $0x540] sm:$0xff]
    %v868 = vld [vmem:[#allocation10 + $0x548] sm:$0xff]
    %v869 = vld [vmem:[#allocation10 + $0x550] sm:$0xff]
    %v870 = vld [vmem:[#allocation10 + $0x558] sm:$0xff]
    %v871 = vld [vmem:[#allocation10 + $0x560] sm:$0xff]
    %v872 = vld [vmem:[#allocation10 + $0x568] sm:$0xff]
    %v873 = vld [vmem:[#allocation10 + $0x570] sm:$0xff]
    %v874 = vld [vmem:[#allocation10 + $0x578] sm:$0xff]
    %v875 = vld [vmem:[#allocation10 + $0x580] sm:$0xff]
    %v876 = vld [vmem:[#allocation10 + $0x588] sm:$0xff]
    %v877 = vld [vmem:[#allocation10 + $0x590] sm:$0xff]
    %v878 = vld [vmem:[#allocation10 + $0x598] sm:$0xff]
    %v879 = vld [vmem:[#allocation10 + $0x5a0] sm:$0xff]
    %v880 = vld [vmem:[#allocation10 + $0x5a8] sm:$0xff]
    %v881 = vld [vmem:[#allocation10 + $0x5b0] sm:$0xff]
    %v882 = vld [vmem:[#allocation10 + $0x5b8] sm:$0xff]
    %v883 = vld [vmem:[#allocation10 + $0x5c0] sm:$0xff]
    %v884 = vld [vmem:[#allocation10 + $0x5c8] sm:$0xff]
    %v885 = vld [vmem:[#allocation10 + $0x5d0] sm:$0xff]
    %v886 = vld [vmem:[#allocation10 + $0x5d8] sm:$0xff]
    %v887 = vld [vmem:[#allocation10 + $0x5e0] sm:$0xff]
    %v888 = vld [vmem:[#allocation10 + $0x5e8] sm:$0xff]
    %v889 = vld [vmem:[#allocation10 + $0x5f0] sm:$0xff]
    %v890 = vld [vmem:[#allocation10 + $0x5f8] sm:$0xff]
    %v891 = vld [vmem:[#allocation10 + $0x600] sm:$0xff]
    %v892 = vld [vmem:[#allocation10 + $0x608] sm:$0xff]
    %v893 = vld [vmem:[#allocation10 + $0x610] sm:$0xff]
    %v894 = vld [vmem:[#allocation10 + $0x618] sm:$0xff]
    %v895 = vld [vmem:[#allocation10 + $0x620] sm:$0xff]
    %v896 = vld [vmem:[#allocation10 + $0x628] sm:$0xff]
    %v897 = vld [vmem:[#allocation10 + $0x630] sm:$0xff]
    %v898 = vld [vmem:[#allocation10 + $0x638] sm:$0xff]
    %v899 = vld [vmem:[#allocation10 + $0x640] sm:$0xff]
    %v900 = vld [vmem:[#allocation10 + $0x648] sm:$0xff]
    %v901 = vld [vmem:[#allocation10 + $0x650] sm:$0xff]
    %v902 = vld [vmem:[#allocation10 + $0x658] sm:$0xff]
    %v903 = vld [vmem:[#allocation10 + $0x660] sm:$0xff]
    %v904 = vld [vmem:[#allocation10 + $0x668] sm:$0xff]
    %v905 = vld [vmem:[#allocation10 + $0x670] sm:$0xff]
    %v906 = vld [vmem:[#allocation10 + $0x678] sm:$0xff]
    %v907 = vld [vmem:[#allocation10 + $0x680] sm:$0xff]
    %v908 = vld [vmem:[#allocation10 + $0x688] sm:$0xff]
    %v909 = vld [vmem:[#allocation10 + $0x690] sm:$0xff]
    %v910 = vld [vmem:[#allocation10 + $0x698] sm:$0xff]
    %v911 = vld [vmem:[#allocation10 + $0x6a0] sm:$0xff]
    %v912 = vld [vmem:[#allocation10 + $0x6a8] sm:$0xff]
    %v913 = vld [vmem:[#allocation10 + $0x6b0] sm:$0xff]
    %v914 = vld [vmem:[#allocation10 + $0x6b8] sm:$0xff]
    %v915 = vld [vmem:[#allocation10 + $0x6c0] sm:$0xff]
    %v916 = vld [vmem:[#allocation10 + $0x6c8] sm:$0xff]
    %v917 = vld [vmem:[#allocation10 + $0x6d0] sm:$0xff]
    %v918 = vld [vmem:[#allocation10 + $0x6d8] sm:$0xff]
    %v919 = vld [vmem:[#allocation10 + $0x6e0] sm:$0xff]
    %v920 = vld [vmem:[#allocation10 + $0x6e8] sm:$0xff]
    %v921 = vld [vmem:[#allocation10 + $0x6f0] sm:$0xff]
    %v922 = vld [vmem:[#allocation10 + $0x6f8] sm:$0xff]
    %v923 = vld [vmem:[#allocation10 + $0x700] sm:$0xff]
    %v924 = vld [vmem:[#allocation10 + $0x708] sm:$0xff]
    %v925 = vld [vmem:[#allocation10 + $0x710] sm:$0xff]
    %v926 = vld [vmem:[#allocation10 + $0x718] sm:$0xff]
    %v927 = vld [vmem:[#allocation10 + $0x720] sm:$0xff]
    %v928 = vld [vmem:[#allocation10 + $0x728] sm:$0xff]
    %v929 = vld [vmem:[#allocation10 + $0x730] sm:$0xff]
    %v930 = vld [vmem:[#allocation10 + $0x738] sm:$0xff]
    %v931 = vld [vmem:[#allocation10 + $0x740] sm:$0xff]
    %v932 = vld [vmem:[#allocation10 + $0x748] sm:$0xff]
    %v933 = vld [vmem:[#allocation10 + $0x750] sm:$0xff]
    %v934 = vld [vmem:[#allocation10 + $0x758] sm:$0xff]
    %v935 = vld [vmem:[#allocation10 + $0x760] sm:$0xff]
    %v936 = vld [vmem:[#allocation10 + $0x768] sm:$0xff]
    %v937 = vld [vmem:[#allocation10 + $0x770] sm:$0xff]
    %v938 = vld [vmem:[#allocation10 + $0x778] sm:$0xff]
    %v939 = vld [vmem:[#allocation10 + $0x780] sm:$0xff]
    %v940 = vld [vmem:[#allocation10 + $0x788] sm:$0xff]
    %v941 = vld [vmem:[#allocation10 + $0x790] sm:$0xff]
    %v942 = vld [vmem:[#allocation10 + $0x798] sm:$0xff]
    %v943 = vld [vmem:[#allocation10 + $0x7a0] sm:$0xff]
    %v944 = vld [vmem:[#allocation10 + $0x7a8] sm:$0xff]
    %v945 = vld [vmem:[#allocation10 + $0x7b0] sm:$0xff]
    %v946 = vld [vmem:[#allocation10 + $0x7b8] sm:$0xff]
    %v947 = vld [vmem:[#allocation10 + $0x7c0] sm:$0xff]
    %v948 = vld [vmem:[#allocation10 + $0x7c8] sm:$0xff]
    %v949 = vld [vmem:[#allocation10 + $0x7d0] sm:$0xff]
    %v950 = vld [vmem:[#allocation10 + $0x7d8] sm:$0xff]
    %v951 = vld [vmem:[#allocation10 + $0x7e0] sm:$0xff]
    %v952 = vld [vmem:[#allocation10 + $0x7e8] sm:$0xff]
    %v953 = vld [vmem:[#allocation10 + $0x7f0] sm:$0xff]
    %v954 = vld [vmem:[#allocation10 + $0x7f8] sm:$0xff]
    %v955 = vld [vmem:[%s6] sm:$0xff]
    %v957 = vlaneseq
    %v958 = vshrl.u32 %v957, 7
    %v959 = vsub.s32 0, %v958
    %v960 = vrot.slane %v955, %v959
    %v961 = vlaneseq
    %v962 = vshrl.u32 %v961, 7
    %v963 = vsub.s32 1, %v962
    %v964 = vrot.slane %v955, %v963
    %v965 = vlaneseq
    %v966 = vshrl.u32 %v965, 7
    %v967 = vsub.s32 2, %v966
    %v968 = vrot.slane %v955, %v967
    %v969 = vlaneseq
    %v970 = vshrl.u32 %v969, 7
    %v971 = vsub.s32 3, %v970
    %v972 = vrot.slane %v955, %v971
    %v973 = vlaneseq
    %v974 = vshrl.u32 %v973, 7
    %v975 = vsub.s32 4, %v974
    %v976 = vrot.slane %v955, %v975
    %v977 = vlaneseq
    %v978 = vshrl.u32 %v977, 7
    %v979 = vsub.s32 5, %v978
    %v980 = vrot.slane %v955, %v979
    %v981 = vlaneseq
    %v982 = vshrl.u32 %v981, 7
    %v983 = vsub.s32 6, %v982
    %v984 = vrot.slane %v955, %v983
    %v985 = vlaneseq
    %v986 = vshrl.u32 %v985, 7
    %v987 = vsub.s32 7, %v986
    %v988 = vrot.slane %v955, %v987
    %v1253 = vunpack.c.l.b16 %v699
    %v1254 = vunpack.c.h.b16 %v699
    %v1255 = vunpack.c.l.b16 %v700
    %v1256 = vunpack.c.h.b16 %v700
    %v1257 = vunpack.c.l.b16 %v701
    %v1258 = vunpack.c.h.b16 %v701
    %v1259 = vunpack.c.l.b16 %v702
    %v1260 = vunpack.c.h.b16 %v702
    %v1261 = vunpack.c.l.b16 %v703
    %v1262 = vunpack.c.h.b16 %v703
    %v1263 = vunpack.c.l.b16 %v704
    %v1264 = vunpack.c.h.b16 %v704
    %v1265 = vunpack.c.l.b16 %v705
    %v1266 = vunpack.c.h.b16 %v705
    %v1267 = vunpack.c.l.b16 %v706
    %v1268 = vunpack.c.h.b16 %v706
    %v1269 = vunpack.c.l.b16 %v707
    %v1270 = vunpack.c.h.b16 %v707
    %v1271 = vunpack.c.l.b16 %v708
    %v1272 = vunpack.c.h.b16 %v708
    %v1273 = vunpack.c.l.b16 %v709
    %v1274 = vunpack.c.h.b16 %v709
    %v1275 = vunpack.c.l.b16 %v710
    %v1276 = vunpack.c.h.b16 %v710
    %v1277 = vunpack.c.l.b16 %v711
    %v1278 = vunpack.c.h.b16 %v711
    %v1279 = vunpack.c.l.b16 %v712
    %v1280 = vunpack.c.h.b16 %v712
    %v1281 = vunpack.c.l.b16 %v713
    %v1282 = vunpack.c.h.b16 %v713
    %v1283 = vunpack.c.l.b16 %v714
    %v1284 = vunpack.c.h.b16 %v714
    %v1285 = vunpack.c.l.b16 %v715
    %v1286 = vunpack.c.h.b16 %v715
    %v1287 = vunpack.c.l.b16 %v716
    %v1288 = vunpack.c.h.b16 %v716
    %v1289 = vunpack.c.l.b16 %v717
    %v1290 = vunpack.c.h.b16 %v717
    %v1291 = vunpack.c.l.b16 %v718
    %v1292 = vunpack.c.h.b16 %v718
    %v1293 = vunpack.c.l.b16 %v719
    %v1294 = vunpack.c.h.b16 %v719
    %v1295 = vunpack.c.l.b16 %v720
    %v1296 = vunpack.c.h.b16 %v720
    %v1297 = vunpack.c.l.b16 %v721
    %v1298 = vunpack.c.h.b16 %v721
    %v1299 = vunpack.c.l.b16 %v722
    %v1300 = vunpack.c.h.b16 %v722
    %v1301 = vunpack.c.l.b16 %v723
    %v1302 = vunpack.c.h.b16 %v723
    %v1303 = vunpack.c.l.b16 %v724
    %v1304 = vunpack.c.h.b16 %v724
    %v1305 = vunpack.c.l.b16 %v725
    %v1306 = vunpack.c.h.b16 %v725
    %v1307 = vunpack.c.l.b16 %v726
    %v1308 = vunpack.c.h.b16 %v726
    %v1309 = vunpack.c.l.b16 %v727
    %v1310 = vunpack.c.h.b16 %v727
    %v1311 = vunpack.c.l.b16 %v728
    %v1312 = vunpack.c.h.b16 %v728
    %v1313 = vunpack.c.l.b16 %v729
    %v1314 = vunpack.c.h.b16 %v729
    %v1315 = vunpack.c.l.b16 %v730
    %v1316 = vunpack.c.h.b16 %v730
    %v1317 = vunpack.c.l.b16 %v731
    %v1318 = vunpack.c.h.b16 %v731
    %v1319 = vunpack.c.l.b16 %v732
    %v1320 = vunpack.c.h.b16 %v732
    %v1321 = vunpack.c.l.b16 %v733
    %v1322 = vunpack.c.h.b16 %v733
    %v1323 = vunpack.c.l.b16 %v734
    %v1324 = vunpack.c.h.b16 %v734
    %v1325 = vunpack.c.l.b16 %v735
    %v1326 = vunpack.c.h.b16 %v735
    %v1327 = vunpack.c.l.b16 %v736
    %v1328 = vunpack.c.h.b16 %v736
    %v1329 = vunpack.c.l.b16 %v737
    %v1330 = vunpack.c.h.b16 %v737
    %v1331 = vunpack.c.l.b16 %v738
    %v1332 = vunpack.c.h.b16 %v738
    %v1333 = vunpack.c.l.b16 %v739
    %v1334 = vunpack.c.h.b16 %v739
    %v1335 = vunpack.c.l.b16 %v740
    %v1336 = vunpack.c.h.b16 %v740
    %v1337 = vunpack.c.l.b16 %v741
    %v1338 = vunpack.c.h.b16 %v741
    %v1339 = vunpack.c.l.b16 %v742
    %v1340 = vunpack.c.h.b16 %v742
    %v1341 = vunpack.c.l.b16 %v743
    %v1342 = vunpack.c.h.b16 %v743
    %v1343 = vunpack.c.l.b16 %v744
    %v1344 = vunpack.c.h.b16 %v744
    %v1345 = vunpack.c.l.b16 %v745
    %v1346 = vunpack.c.h.b16 %v745
    %v1347 = vunpack.c.l.b16 %v746
    %v1348 = vunpack.c.h.b16 %v746
    %v1349 = vunpack.c.l.b16 %v747
    %v1350 = vunpack.c.h.b16 %v747
    %v1351 = vunpack.c.l.b16 %v748
    %v1352 = vunpack.c.h.b16 %v748
    %v1353 = vunpack.c.l.b16 %v749
    %v1354 = vunpack.c.h.b16 %v749
    %v1355 = vunpack.c.l.b16 %v750
    %v1356 = vunpack.c.h.b16 %v750
    %v1357 = vunpack.c.l.b16 %v751
    %v1358 = vunpack.c.h.b16 %v751
    %v1359 = vunpack.c.l.b16 %v752
    %v1360 = vunpack.c.h.b16 %v752
    %v1361 = vunpack.c.l.b16 %v753
    %v1362 = vunpack.c.h.b16 %v753
    %v1363 = vunpack.c.l.b16 %v754
    %v1364 = vunpack.c.h.b16 %v754
    %v1365 = vunpack.c.l.b16 %v755
    %v1366 = vunpack.c.h.b16 %v755
    %v1367 = vunpack.c.l.b16 %v756
    %v1368 = vunpack.c.h.b16 %v756
    %v1369 = vunpack.c.l.b16 %v757
    %v1370 = vunpack.c.h.b16 %v757
    %v1371 = vunpack.c.l.b16 %v758
    %v1372 = vunpack.c.h.b16 %v758
    %v1373 = vunpack.c.l.b16 %v759
    %v1374 = vunpack.c.h.b16 %v759
    %v1375 = vunpack.c.l.b16 %v760
    %v1376 = vunpack.c.h.b16 %v760
    %v1377 = vunpack.c.l.b16 %v761
    %v1378 = vunpack.c.h.b16 %v761
    %v1379 = vunpack.c.l.b16 %v762
    %v1380 = vunpack.c.h.b16 %v762
    %v1381 = vunpack.c.l.b16 %v763
    %v1382 = vunpack.c.h.b16 %v763
    %v1383 = vunpack.c.l.b16 %v764
    %v1384 = vunpack.c.h.b16 %v764
    %v1385 = vunpack.c.l.b16 %v765
    %v1386 = vunpack.c.h.b16 %v765
    %v1387 = vunpack.c.l.b16 %v766
    %v1388 = vunpack.c.h.b16 %v766
    %v1389 = vunpack.c.l.b16 %v767
    %v1390 = vunpack.c.h.b16 %v767
    %v1391 = vunpack.c.l.b16 %v768
    %v1392 = vunpack.c.h.b16 %v768
    %v1393 = vunpack.c.l.b16 %v769
    %v1394 = vunpack.c.h.b16 %v769
    %v1395 = vunpack.c.l.b16 %v770
    %v1396 = vunpack.c.h.b16 %v770
    %v1397 = vunpack.c.l.b16 %v771
    %v1398 = vunpack.c.h.b16 %v771
    %v1399 = vunpack.c.l.b16 %v772
    %v1400 = vunpack.c.h.b16 %v772
    %v1401 = vunpack.c.l.b16 %v773
    %v1402 = vunpack.c.h.b16 %v773
    %v1403 = vunpack.c.l.b16 %v774
    %v1404 = vunpack.c.h.b16 %v774
    %v1405 = vunpack.c.l.b16 %v775
    %v1406 = vunpack.c.h.b16 %v775
    %v1407 = vunpack.c.l.b16 %v776
    %v1408 = vunpack.c.h.b16 %v776
    %v1409 = vunpack.c.l.b16 %v777
    %v1410 = vunpack.c.h.b16 %v777
    %v1411 = vunpack.c.l.b16 %v778
    %v1412 = vunpack.c.h.b16 %v778
    %v1413 = vunpack.c.l.b16 %v779
    %v1414 = vunpack.c.h.b16 %v779
    %v1415 = vunpack.c.l.b16 %v780
    %v1416 = vunpack.c.h.b16 %v780
    %v1417 = vunpack.c.l.b16 %v781
    %v1418 = vunpack.c.h.b16 %v781
    %v1419 = vunpack.c.l.b16 %v782
    %v1420 = vunpack.c.h.b16 %v782
    %v1421 = vunpack.c.l.b16 %v783
    %v1422 = vunpack.c.h.b16 %v783
    %v1423 = vunpack.c.l.b16 %v784
    %v1424 = vunpack.c.h.b16 %v784
    %v1425 = vunpack.c.l.b16 %v785
    %v1426 = vunpack.c.h.b16 %v785
    %v1427 = vunpack.c.l.b16 %v786
    %v1428 = vunpack.c.h.b16 %v786
    %v1429 = vunpack.c.l.b16 %v787
    %v1430 = vunpack.c.h.b16 %v787
    %v1431 = vunpack.c.l.b16 %v788
    %v1432 = vunpack.c.h.b16 %v788
    %v1433 = vunpack.c.l.b16 %v789
    %v1434 = vunpack.c.h.b16 %v789
    %v1435 = vunpack.c.l.b16 %v790
    %v1436 = vunpack.c.h.b16 %v790
    %v1437 = vunpack.c.l.b16 %v791
    %v1438 = vunpack.c.h.b16 %v791
    %v1439 = vunpack.c.l.b16 %v792
    %v1440 = vunpack.c.h.b16 %v792
    %v1441 = vunpack.c.l.b16 %v793
    %v1442 = vunpack.c.h.b16 %v793
    %v1443 = vunpack.c.l.b16 %v794
    %v1444 = vunpack.c.h.b16 %v794
    %v1445 = vunpack.c.l.b16 %v795
    %v1446 = vunpack.c.h.b16 %v795
    %v1447 = vunpack.c.l.b16 %v796
    %v1448 = vunpack.c.h.b16 %v796
    %v1449 = vunpack.c.l.b16 %v797
    %v1450 = vunpack.c.h.b16 %v797
    %v1451 = vunpack.c.l.b16 %v798
    %v1452 = vunpack.c.h.b16 %v798
    %v1453 = vunpack.c.l.b16 %v799
    %v1454 = vunpack.c.h.b16 %v799
    %v1455 = vunpack.c.l.b16 %v800
    %v1456 = vunpack.c.h.b16 %v800
    %v1457 = vunpack.c.l.b16 %v801
    %v1458 = vunpack.c.h.b16 %v801
    %v1459 = vunpack.c.l.b16 %v802
    %v1460 = vunpack.c.h.b16 %v802
    %v1461 = vunpack.c.l.b16 %v803
    %v1462 = vunpack.c.h.b16 %v803
    %v1463 = vunpack.c.l.b16 %v804
    %v1464 = vunpack.c.h.b16 %v804
    %v1465 = vunpack.c.l.b16 %v805
    %v1466 = vunpack.c.h.b16 %v805
    %v1467 = vunpack.c.l.b16 %v806
    %v1468 = vunpack.c.h.b16 %v806
    %v1469 = vunpack.c.l.b16 %v807
    %v1470 = vunpack.c.h.b16 %v807
    %v1471 = vunpack.c.l.b16 %v808
    %v1472 = vunpack.c.h.b16 %v808
    %v1473 = vunpack.c.l.b16 %v809
    %v1474 = vunpack.c.h.b16 %v809
    %v1475 = vunpack.c.l.b16 %v810
    %v1476 = vunpack.c.h.b16 %v810
    %v1477 = vunpack.c.l.b16 %v811
    %v1478 = vunpack.c.h.b16 %v811
    %v1479 = vunpack.c.l.b16 %v812
    %v1480 = vunpack.c.h.b16 %v812
    %v1481 = vunpack.c.l.b16 %v813
    %v1482 = vunpack.c.h.b16 %v813
    %v1483 = vunpack.c.l.b16 %v814
    %v1484 = vunpack.c.h.b16 %v814
    %v1485 = vunpack.c.l.b16 %v815
    %v1486 = vunpack.c.h.b16 %v815
    %v1487 = vunpack.c.l.b16 %v816
    %v1488 = vunpack.c.h.b16 %v816
    %v1489 = vunpack.c.l.b16 %v817
    %v1490 = vunpack.c.h.b16 %v817
    %v1491 = vunpack.c.l.b16 %v818
    %v1492 = vunpack.c.h.b16 %v818
    %v1493 = vunpack.c.l.b16 %v819
    %v1494 = vunpack.c.h.b16 %v819
    %v1495 = vunpack.c.l.b16 %v820
    %v1496 = vunpack.c.h.b16 %v820
    %v1497 = vunpack.c.l.b16 %v821
    %v1498 = vunpack.c.h.b16 %v821
    %v1499 = vunpack.c.l.b16 %v822
    %v1500 = vunpack.c.h.b16 %v822
    %v1501 = vunpack.c.l.b16 %v823
    %v1502 = vunpack.c.h.b16 %v823
    %v1503 = vunpack.c.l.b16 %v824
    %v1504 = vunpack.c.h.b16 %v824
    %v1505 = vunpack.c.l.b16 %v825
    %v1506 = vunpack.c.h.b16 %v825
    %v1507 = vunpack.c.l.b16 %v826
    %v1508 = vunpack.c.h.b16 %v826
    %v1509 = vunpack.c.l.b16 %v827
    %v1510 = vunpack.c.h.b16 %v827
    %v1511 = vunpack.c.l.b16 %v828
    %v1512 = vunpack.c.h.b16 %v828
    %v1513 = vunpack.c.l.b16 %v829
    %v1514 = vunpack.c.h.b16 %v829
    %v1515 = vunpack.c.l.b16 %v830
    %v1516 = vunpack.c.h.b16 %v830
    %v1517 = vunpack.c.l.b16 %v831
    %v1518 = vunpack.c.h.b16 %v831
    %v1519 = vunpack.c.l.b16 %v832
    %v1520 = vunpack.c.h.b16 %v832
    %v1521 = vunpack.c.l.b16 %v833
    %v1522 = vunpack.c.h.b16 %v833
    %v1523 = vunpack.c.l.b16 %v834
    %v1524 = vunpack.c.h.b16 %v834
    %v1525 = vunpack.c.l.b16 %v835
    %v1526 = vunpack.c.h.b16 %v835
    %v1527 = vunpack.c.l.b16 %v836
    %v1528 = vunpack.c.h.b16 %v836
    %v1529 = vunpack.c.l.b16 %v837
    %v1530 = vunpack.c.h.b16 %v837
    %v1531 = vunpack.c.l.b16 %v838
    %v1532 = vunpack.c.h.b16 %v838
    %v1533 = vunpack.c.l.b16 %v839
    %v1534 = vunpack.c.h.b16 %v839
    %v1535 = vunpack.c.l.b16 %v840
    %v1536 = vunpack.c.h.b16 %v840
    %v1537 = vunpack.c.l.b16 %v841
    %v1538 = vunpack.c.h.b16 %v841
    %v1539 = vunpack.c.l.b16 %v842
    %v1540 = vunpack.c.h.b16 %v842
    %v1541 = vunpack.c.l.b16 %v843
    %v1542 = vunpack.c.h.b16 %v843
    %v1543 = vunpack.c.l.b16 %v844
    %v1544 = vunpack.c.h.b16 %v844
    %v1545 = vunpack.c.l.b16 %v845
    %v1546 = vunpack.c.h.b16 %v845
    %v1547 = vunpack.c.l.b16 %v846
    %v1548 = vunpack.c.h.b16 %v846
    %v1549 = vunpack.c.l.b16 %v847
    %v1550 = vunpack.c.h.b16 %v847
    %v1551 = vunpack.c.l.b16 %v848
    %v1552 = vunpack.c.h.b16 %v848
    %v1553 = vunpack.c.l.b16 %v849
    %v1554 = vunpack.c.h.b16 %v849
    %v1555 = vunpack.c.l.b16 %v850
    %v1556 = vunpack.c.h.b16 %v850
    %v1557 = vunpack.c.l.b16 %v851
    %v1558 = vunpack.c.h.b16 %v851
    %v1559 = vunpack.c.l.b16 %v852
    %v1560 = vunpack.c.h.b16 %v852
    %v1561 = vunpack.c.l.b16 %v853
    %v1562 = vunpack.c.h.b16 %v853
    %v1563 = vunpack.c.l.b16 %v854
    %v1564 = vunpack.c.h.b16 %v854
    %v1565 = vunpack.c.l.b16 %v855
    %v1566 = vunpack.c.h.b16 %v855
    %v1567 = vunpack.c.l.b16 %v856
    %v1568 = vunpack.c.h.b16 %v856
    %v1569 = vunpack.c.l.b16 %v857
    %v1570 = vunpack.c.h.b16 %v857
    %v1571 = vunpack.c.l.b16 %v858
    %v1572 = vunpack.c.h.b16 %v858
    %v1573 = vunpack.c.l.b16 %v859
    %v1574 = vunpack.c.h.b16 %v859
    %v1575 = vunpack.c.l.b16 %v860
    %v1576 = vunpack.c.h.b16 %v860
    %v1577 = vunpack.c.l.b16 %v861
    %v1578 = vunpack.c.h.b16 %v861
    %v1579 = vunpack.c.l.b16 %v862
    %v1580 = vunpack.c.h.b16 %v862
    %v1581 = vunpack.c.l.b16 %v863
    %v1582 = vunpack.c.h.b16 %v863
    %v1583 = vunpack.c.l.b16 %v864
    %v1584 = vunpack.c.h.b16 %v864
    %v1585 = vunpack.c.l.b16 %v865
    %v1586 = vunpack.c.h.b16 %v865
    %v1587 = vunpack.c.l.b16 %v866
    %v1588 = vunpack.c.h.b16 %v866
    %v1589 = vunpack.c.l.b16 %v867
    %v1590 = vunpack.c.h.b16 %v867
    %v1591 = vunpack.c.l.b16 %v868
    %v1592 = vunpack.c.h.b16 %v868
    %v1593 = vunpack.c.l.b16 %v869
    %v1594 = vunpack.c.h.b16 %v869
    %v1595 = vunpack.c.l.b16 %v870
    %v1596 = vunpack.c.h.b16 %v870
    %v1597 = vunpack.c.l.b16 %v871
    %v1598 = vunpack.c.h.b16 %v871
    %v1599 = vunpack.c.l.b16 %v872
    %v1600 = vunpack.c.h.b16 %v872
    %v1601 = vunpack.c.l.b16 %v873
    %v1602 = vunpack.c.h.b16 %v873
    %v1603 = vunpack.c.l.b16 %v874
    %v1604 = vunpack.c.h.b16 %v874
    %v1605 = vunpack.c.l.b16 %v875
    %v1606 = vunpack.c.h.b16 %v875
    %v1607 = vunpack.c.l.b16 %v876
    %v1608 = vunpack.c.h.b16 %v876
    %v1609 = vunpack.c.l.b16 %v877
    %v1610 = vunpack.c.h.b16 %v877
    %v1611 = vunpack.c.l.b16 %v878
    %v1612 = vunpack.c.h.b16 %v878
    %v1613 = vunpack.c.l.b16 %v879
    %v1614 = vunpack.c.h.b16 %v879
    %v1615 = vunpack.c.l.b16 %v880
    %v1616 = vunpack.c.h.b16 %v880
    %v1617 = vunpack.c.l.b16 %v881
    %v1618 = vunpack.c.h.b16 %v881
    %v1619 = vunpack.c.l.b16 %v882
    %v1620 = vunpack.c.h.b16 %v882
    %v1621 = vunpack.c.l.b16 %v883
    %v1622 = vunpack.c.h.b16 %v883
    %v1623 = vunpack.c.l.b16 %v884
    %v1624 = vunpack.c.h.b16 %v884
    %v1625 = vunpack.c.l.b16 %v885
    %v1626 = vunpack.c.h.b16 %v885
    %v1627 = vunpack.c.l.b16 %v886
    %v1628 = vunpack.c.h.b16 %v886
    %v1629 = vunpack.c.l.b16 %v887
    %v1630 = vunpack.c.h.b16 %v887
    %v1631 = vunpack.c.l.b16 %v888
    %v1632 = vunpack.c.h.b16 %v888
    %v1633 = vunpack.c.l.b16 %v889
    %v1634 = vunpack.c.h.b16 %v889
    %v1635 = vunpack.c.l.b16 %v890
    %v1636 = vunpack.c.h.b16 %v890
    %v1637 = vunpack.c.l.b16 %v891
    %v1638 = vunpack.c.h.b16 %v891
    %v1639 = vunpack.c.l.b16 %v892
    %v1640 = vunpack.c.h.b16 %v892
    %v1641 = vunpack.c.l.b16 %v893
    %v1642 = vunpack.c.h.b16 %v893
    %v1643 = vunpack.c.l.b16 %v894
    %v1644 = vunpack.c.h.b16 %v894
    %v1645 = vunpack.c.l.b16 %v895
    %v1646 = vunpack.c.h.b16 %v895
    %v1647 = vunpack.c.l.b16 %v896
    %v1648 = vunpack.c.h.b16 %v896
    %v1649 = vunpack.c.l.b16 %v897
    %v1650 = vunpack.c.h.b16 %v897
    %v1651 = vunpack.c.l.b16 %v898
    %v1652 = vunpack.c.h.b16 %v898
    %v1653 = vunpack.c.l.b16 %v899
    %v1654 = vunpack.c.h.b16 %v899
    %v1655 = vunpack.c.l.b16 %v900
    %v1656 = vunpack.c.h.b16 %v900
    %v1657 = vunpack.c.l.b16 %v901
    %v1658 = vunpack.c.h.b16 %v901
    %v1659 = vunpack.c.l.b16 %v902
    %v1660 = vunpack.c.h.b16 %v902
    %v1661 = vunpack.c.l.b16 %v903
    %v1662 = vunpack.c.h.b16 %v903
    %v1663 = vunpack.c.l.b16 %v904
    %v1664 = vunpack.c.h.b16 %v904
    %v1665 = vunpack.c.l.b16 %v905
    %v1666 = vunpack.c.h.b16 %v905
    %v1667 = vunpack.c.l.b16 %v906
    %v1668 = vunpack.c.h.b16 %v906
    %v1669 = vunpack.c.l.b16 %v907
    %v1670 = vunpack.c.h.b16 %v907
    %v1671 = vunpack.c.l.b16 %v908
    %v1672 = vunpack.c.h.b16 %v908
    %v1673 = vunpack.c.l.b16 %v909
    %v1674 = vunpack.c.h.b16 %v909
    %v1675 = vunpack.c.l.b16 %v910
    %v1676 = vunpack.c.h.b16 %v910
    %v1677 = vunpack.c.l.b16 %v911
    %v1678 = vunpack.c.h.b16 %v911
    %v1679 = vunpack.c.l.b16 %v912
    %v1680 = vunpack.c.h.b16 %v912
    %v1681 = vunpack.c.l.b16 %v913
    %v1682 = vunpack.c.h.b16 %v913
    %v1683 = vunpack.c.l.b16 %v914
    %v1684 = vunpack.c.h.b16 %v914
    %v1685 = vunpack.c.l.b16 %v915
    %v1686 = vunpack.c.h.b16 %v915
    %v1687 = vunpack.c.l.b16 %v916
    %v1688 = vunpack.c.h.b16 %v916
    %v1689 = vunpack.c.l.b16 %v917
    %v1690 = vunpack.c.h.b16 %v917
    %v1691 = vunpack.c.l.b16 %v918
    %v1692 = vunpack.c.h.b16 %v918
    %v1693 = vunpack.c.l.b16 %v919
    %v1694 = vunpack.c.h.b16 %v919
    %v1695 = vunpack.c.l.b16 %v920
    %v1696 = vunpack.c.h.b16 %v920
    %v1697 = vunpack.c.l.b16 %v921
    %v1698 = vunpack.c.h.b16 %v921
    %v1699 = vunpack.c.l.b16 %v922
    %v1700 = vunpack.c.h.b16 %v922
    %v1701 = vunpack.c.l.b16 %v923
    %v1702 = vunpack.c.h.b16 %v923
    %v1703 = vunpack.c.l.b16 %v924
    %v1704 = vunpack.c.h.b16 %v924
    %v1705 = vunpack.c.l.b16 %v925
    %v1706 = vunpack.c.h.b16 %v925
    %v1707 = vunpack.c.l.b16 %v926
    %v1708 = vunpack.c.h.b16 %v926
    %v1709 = vunpack.c.l.b16 %v927
    %v1710 = vunpack.c.h.b16 %v927
    %v1711 = vunpack.c.l.b16 %v928
    %v1712 = vunpack.c.h.b16 %v928
    %v1713 = vunpack.c.l.b16 %v929
    %v1714 = vunpack.c.h.b16 %v929
    %v1715 = vunpack.c.l.b16 %v930
    %v1716 = vunpack.c.h.b16 %v930
    %v1717 = vunpack.c.l.b16 %v931
    %v1718 = vunpack.c.h.b16 %v931
    %v1719 = vunpack.c.l.b16 %v932
    %v1720 = vunpack.c.h.b16 %v932
    %v1721 = vunpack.c.l.b16 %v933
    %v1722 = vunpack.c.h.b16 %v933
    %v1723 = vunpack.c.l.b16 %v934
    %v1724 = vunpack.c.h.b16 %v934
    %v1725 = vunpack.c.l.b16 %v935
    %v1726 = vunpack.c.h.b16 %v935
    %v1727 = vunpack.c.l.b16 %v936
    %v1728 = vunpack.c.h.b16 %v936
    %v1729 = vunpack.c.l.b16 %v937
    %v1730 = vunpack.c.h.b16 %v937
    %v1731 = vunpack.c.l.b16 %v938
    %v1732 = vunpack.c.h.b16 %v938
    %v1733 = vunpack.c.l.b16 %v939
    %v1734 = vunpack.c.h.b16 %v939
    %v1735 = vunpack.c.l.b16 %v940
    %v1736 = vunpack.c.h.b16 %v940
    %v1737 = vunpack.c.l.b16 %v941
    %v1738 = vunpack.c.h.b16 %v941
    %v1739 = vunpack.c.l.b16 %v942
    %v1740 = vunpack.c.h.b16 %v942
    %v1741 = vunpack.c.l.b16 %v943
    %v1742 = vunpack.c.h.b16 %v943
    %v1743 = vunpack.c.l.b16 %v944
    %v1744 = vunpack.c.h.b16 %v944
    %v1745 = vunpack.c.l.b16 %v945
    %v1746 = vunpack.c.h.b16 %v945
    %v1747 = vunpack.c.l.b16 %v946
    %v1748 = vunpack.c.h.b16 %v946
    %v1749 = vunpack.c.l.b16 %v947
    %v1750 = vunpack.c.h.b16 %v947
    %v1751 = vunpack.c.l.b16 %v948
    %v1752 = vunpack.c.h.b16 %v948
    %v1753 = vunpack.c.l.b16 %v949
    %v1754 = vunpack.c.h.b16 %v949
    %v1755 = vunpack.c.l.b16 %v950
    %v1756 = vunpack.c.h.b16 %v950
    %v1757 = vunpack.c.l.b16 %v951
    %v1758 = vunpack.c.h.b16 %v951
    %v1759 = vunpack.c.l.b16 %v952
    %v1760 = vunpack.c.h.b16 %v952
    %v1761 = vunpack.c.l.b16 %v953
    %v1762 = vunpack.c.h.b16 %v953
    %v1763 = vunpack.c.l.b16 %v954
    %v1764 = vunpack.c.h.b16 %v954
    %v1765 = vpack.c.b16 %v1261, %v1253
    %v1766 = vpack.c.b16 %v1262, %v1254
    %v1767 = vpack.c.b16 %v1263, %v1255
    %v1768 = vpack.c.b16 %v1264, %v1256
    %v1769 = vpack.c.b16 %v1265, %v1257
    %v1770 = vpack.c.b16 %v1266, %v1258
    %v1771 = vpack.c.b16 %v1267, %v1259
    %v1772 = vpack.c.b16 %v1268, %v1260
    %v1773 = vpack.c.b16 %v1277, %v1269
    %v1774 = vpack.c.b16 %v1278, %v1270
    %v1775 = vpack.c.b16 %v1279, %v1271
    %v1776 = vpack.c.b16 %v1280, %v1272
    %v1777 = vpack.c.b16 %v1281, %v1273
    %v1778 = vpack.c.b16 %v1282, %v1274
    %v1779 = vpack.c.b16 %v1283, %v1275
    %v1780 = vpack.c.b16 %v1284, %v1276
    %v1781 = vpack.c.b16 %v1293, %v1285
    %v1782 = vpack.c.b16 %v1294, %v1286
    %v1783 = vpack.c.b16 %v1295, %v1287
    %v1784 = vpack.c.b16 %v1296, %v1288
    %v1785 = vpack.c.b16 %v1297, %v1289
    %v1786 = vpack.c.b16 %v1298, %v1290
    %v1787 = vpack.c.b16 %v1299, %v1291
    %v1788 = vpack.c.b16 %v1300, %v1292
    %v1789 = vpack.c.b16 %v1309, %v1301
    %v1790 = vpack.c.b16 %v1310, %v1302
    %v1791 = vpack.c.b16 %v1311, %v1303
    %v1792 = vpack.c.b16 %v1312, %v1304
    %v1793 = vpack.c.b16 %v1313, %v1305
    %v1794 = vpack.c.b16 %v1314, %v1306
    %v1795 = vpack.c.b16 %v1315, %v1307
    %v1796 = vpack.c.b16 %v1316, %v1308
    %v1797 = vpack.c.b16 %v1325, %v1317
    %v1798 = vpack.c.b16 %v1326, %v1318
    %v1799 = vpack.c.b16 %v1327, %v1319
    %v1800 = vpack.c.b16 %v1328, %v1320
    %v1801 = vpack.c.b16 %v1329, %v1321
    %v1802 = vpack.c.b16 %v1330, %v1322
    %v1803 = vpack.c.b16 %v1331, %v1323
    %v1804 = vpack.c.b16 %v1332, %v1324
    %v1805 = vpack.c.b16 %v1341, %v1333
    %v1806 = vpack.c.b16 %v1342, %v1334
    %v1807 = vpack.c.b16 %v1343, %v1335
    %v1808 = vpack.c.b16 %v1344, %v1336
    %v1809 = vpack.c.b16 %v1345, %v1337
    %v1810 = vpack.c.b16 %v1346, %v1338
    %v1811 = vpack.c.b16 %v1347, %v1339
    %v1812 = vpack.c.b16 %v1348, %v1340
    %v1813 = vpack.c.b16 %v1357, %v1349
    %v1814 = vpack.c.b16 %v1358, %v1350
    %v1815 = vpack.c.b16 %v1359, %v1351
    %v1816 = vpack.c.b16 %v1360, %v1352
    %v1817 = vpack.c.b16 %v1361, %v1353
    %v1818 = vpack.c.b16 %v1362, %v1354
    %v1819 = vpack.c.b16 %v1363, %v1355
    %v1820 = vpack.c.b16 %v1364, %v1356
    %v1821 = vpack.c.b16 %v1373, %v1365
    %v1822 = vpack.c.b16 %v1374, %v1366
    %v1823 = vpack.c.b16 %v1375, %v1367
    %v1824 = vpack.c.b16 %v1376, %v1368
    %v1825 = vpack.c.b16 %v1377, %v1369
    %v1826 = vpack.c.b16 %v1378, %v1370
    %v1827 = vpack.c.b16 %v1379, %v1371
    %v1828 = vpack.c.b16 %v1380, %v1372
    %v1829 = vpack.c.b16 %v1389, %v1381
    %v1830 = vpack.c.b16 %v1390, %v1382
    %v1831 = vpack.c.b16 %v1391, %v1383
    %v1832 = vpack.c.b16 %v1392, %v1384
    %v1833 = vpack.c.b16 %v1393, %v1385
    %v1834 = vpack.c.b16 %v1394, %v1386
    %v1835 = vpack.c.b16 %v1395, %v1387
    %v1836 = vpack.c.b16 %v1396, %v1388
    %v1837 = vpack.c.b16 %v1405, %v1397
    %v1838 = vpack.c.b16 %v1406, %v1398
    %v1839 = vpack.c.b16 %v1407, %v1399
    %v1840 = vpack.c.b16 %v1408, %v1400
    %v1841 = vpack.c.b16 %v1409, %v1401
    %v1842 = vpack.c.b16 %v1410, %v1402
    %v1843 = vpack.c.b16 %v1411, %v1403
    %v1844 = vpack.c.b16 %v1412, %v1404
    %v1845 = vpack.c.b16 %v1421, %v1413
    %v1846 = vpack.c.b16 %v1422, %v1414
    %v1847 = vpack.c.b16 %v1423, %v1415
    %v1848 = vpack.c.b16 %v1424, %v1416
    %v1849 = vpack.c.b16 %v1425, %v1417
    %v1850 = vpack.c.b16 %v1426, %v1418
    %v1851 = vpack.c.b16 %v1427, %v1419
    %v1852 = vpack.c.b16 %v1428, %v1420
    %v1853 = vpack.c.b16 %v1437, %v1429
    %v1854 = vpack.c.b16 %v1438, %v1430
    %v1855 = vpack.c.b16 %v1439, %v1431
    %v1856 = vpack.c.b16 %v1440, %v1432
    %v1857 = vpack.c.b16 %v1441, %v1433
    %v1858 = vpack.c.b16 %v1442, %v1434
    %v1859 = vpack.c.b16 %v1443, %v1435
    %v1860 = vpack.c.b16 %v1444, %v1436
    %v1861 = vpack.c.b16 %v1453, %v1445
    %v1862 = vpack.c.b16 %v1454, %v1446
    %v1863 = vpack.c.b16 %v1455, %v1447
    %v1864 = vpack.c.b16 %v1456, %v1448
    %v1865 = vpack.c.b16 %v1457, %v1449
    %v1866 = vpack.c.b16 %v1458, %v1450
    %v1867 = vpack.c.b16 %v1459, %v1451
    %v1868 = vpack.c.b16 %v1460, %v1452
    %v1869 = vpack.c.b16 %v1469, %v1461
    %v1870 = vpack.c.b16 %v1470, %v1462
    %v1871 = vpack.c.b16 %v1471, %v1463
    %v1872 = vpack.c.b16 %v1472, %v1464
    %v1873 = vpack.c.b16 %v1473, %v1465
    %v1874 = vpack.c.b16 %v1474, %v1466
    %v1875 = vpack.c.b16 %v1475, %v1467
    %v1876 = vpack.c.b16 %v1476, %v1468
    %v1877 = vpack.c.b16 %v1485, %v1477
    %v1878 = vpack.c.b16 %v1486, %v1478
    %v1879 = vpack.c.b16 %v1487, %v1479
    %v1880 = vpack.c.b16 %v1488, %v1480
    %v1881 = vpack.c.b16 %v1489, %v1481
    %v1882 = vpack.c.b16 %v1490, %v1482
    %v1883 = vpack.c.b16 %v1491, %v1483
    %v1884 = vpack.c.b16 %v1492, %v1484
    %v1885 = vpack.c.b16 %v1501, %v1493
    %v1886 = vpack.c.b16 %v1502, %v1494
    %v1887 = vpack.c.b16 %v1503, %v1495
    %v1888 = vpack.c.b16 %v1504, %v1496
    %v1889 = vpack.c.b16 %v1505, %v1497
    %v1890 = vpack.c.b16 %v1506, %v1498
    %v1891 = vpack.c.b16 %v1507, %v1499
    %v1892 = vpack.c.b16 %v1508, %v1500
    %v1893 = vpack.c.b16 %v1517, %v1509
    %v1894 = vpack.c.b16 %v1518, %v1510
    %v1895 = vpack.c.b16 %v1519, %v1511
    %v1896 = vpack.c.b16 %v1520, %v1512
    %v1897 = vpack.c.b16 %v1521, %v1513
    %v1898 = vpack.c.b16 %v1522, %v1514
    %v1899 = vpack.c.b16 %v1523, %v1515
    %v1900 = vpack.c.b16 %v1524, %v1516
    %v1901 = vpack.c.b16 %v1533, %v1525
    %v1902 = vpack.c.b16 %v1534, %v1526
    %v1903 = vpack.c.b16 %v1535, %v1527
    %v1904 = vpack.c.b16 %v1536, %v1528
    %v1905 = vpack.c.b16 %v1537, %v1529
    %v1906 = vpack.c.b16 %v1538, %v1530
    %v1907 = vpack.c.b16 %v1539, %v1531
    %v1908 = vpack.c.b16 %v1540, %v1532
    %v1909 = vpack.c.b16 %v1549, %v1541
    %v1910 = vpack.c.b16 %v1550, %v1542
    %v1911 = vpack.c.b16 %v1551, %v1543
    %v1912 = vpack.c.b16 %v1552, %v1544
    %v1913 = vpack.c.b16 %v1553, %v1545
    %v1914 = vpack.c.b16 %v1554, %v1546
    %v1915 = vpack.c.b16 %v1555, %v1547
    %v1916 = vpack.c.b16 %v1556, %v1548
    %v1917 = vpack.c.b16 %v1565, %v1557
    %v1918 = vpack.c.b16 %v1566, %v1558
    %v1919 = vpack.c.b16 %v1567, %v1559
    %v1920 = vpack.c.b16 %v1568, %v1560
    %v1921 = vpack.c.b16 %v1569, %v1561
    %v1922 = vpack.c.b16 %v1570, %v1562
    %v1923 = vpack.c.b16 %v1571, %v1563
    %v1924 = vpack.c.b16 %v1572, %v1564
    %v1925 = vpack.c.b16 %v1581, %v1573
    %v1926 = vpack.c.b16 %v1582, %v1574
    %v1927 = vpack.c.b16 %v1583, %v1575
    %v1928 = vpack.c.b16 %v1584, %v1576
    %v1929 = vpack.c.b16 %v1585, %v1577
    %v1930 = vpack.c.b16 %v1586, %v1578
    %v1931 = vpack.c.b16 %v1587, %v1579
    %v1932 = vpack.c.b16 %v1588, %v1580
    %v1933 = vpack.c.b16 %v1597, %v1589
    %v1934 = vpack.c.b16 %v1598, %v1590
    %v1935 = vpack.c.b16 %v1599, %v1591
    %v1936 = vpack.c.b16 %v1600, %v1592
    %v1937 = vpack.c.b16 %v1601, %v1593
    %v1938 = vpack.c.b16 %v1602, %v1594
    %v1939 = vpack.c.b16 %v1603, %v1595
    %v1940 = vpack.c.b16 %v1604, %v1596
    %v1941 = vpack.c.b16 %v1613, %v1605
    %v1942 = vpack.c.b16 %v1614, %v1606
    %v1943 = vpack.c.b16 %v1615, %v1607
    %v1944 = vpack.c.b16 %v1616, %v1608
    %v1945 = vpack.c.b16 %v1617, %v1609
    %v1946 = vpack.c.b16 %v1618, %v1610
    %v1947 = vpack.c.b16 %v1619, %v1611
    %v1948 = vpack.c.b16 %v1620, %v1612
    %v1949 = vpack.c.b16 %v1629, %v1621
    %v1950 = vpack.c.b16 %v1630, %v1622
    %v1951 = vpack.c.b16 %v1631, %v1623
    %v1952 = vpack.c.b16 %v1632, %v1624
    %v1953 = vpack.c.b16 %v1633, %v1625
    %v1954 = vpack.c.b16 %v1634, %v1626
    %v1955 = vpack.c.b16 %v1635, %v1627
    %v1956 = vpack.c.b16 %v1636, %v1628
    %v1957 = vpack.c.b16 %v1645, %v1637
    %v1958 = vpack.c.b16 %v1646, %v1638
    %v1959 = vpack.c.b16 %v1647, %v1639
    %v1960 = vpack.c.b16 %v1648, %v1640
    %v1961 = vpack.c.b16 %v1649, %v1641
    %v1962 = vpack.c.b16 %v1650, %v1642
    %v1963 = vpack.c.b16 %v1651, %v1643
    %v1964 = vpack.c.b16 %v1652, %v1644
    %v1965 = vpack.c.b16 %v1661, %v1653
    %v1966 = vpack.c.b16 %v1662, %v1654
    %v1967 = vpack.c.b16 %v1663, %v1655
    %v1968 = vpack.c.b16 %v1664, %v1656
    %v1969 = vpack.c.b16 %v1665, %v1657
    %v1970 = vpack.c.b16 %v1666, %v1658
    %v1971 = vpack.c.b16 %v1667, %v1659
    %v1972 = vpack.c.b16 %v1668, %v1660
    %v1973 = vpack.c.b16 %v1677, %v1669
    %v1974 = vpack.c.b16 %v1678, %v1670
    %v1975 = vpack.c.b16 %v1679, %v1671
    %v1976 = vpack.c.b16 %v1680, %v1672
    %v1977 = vpack.c.b16 %v1681, %v1673
    %v1978 = vpack.c.b16 %v1682, %v1674
    %v1979 = vpack.c.b16 %v1683, %v1675
    %v1980 = vpack.c.b16 %v1684, %v1676
    %v1981 = vpack.c.b16 %v1693, %v1685
    %v1982 = vpack.c.b16 %v1694, %v1686
    %v1983 = vpack.c.b16 %v1695, %v1687
    %v1984 = vpack.c.b16 %v1696, %v1688
    %v1985 = vpack.c.b16 %v1697, %v1689
    %v1986 = vpack.c.b16 %v1698, %v1690
    %v1987 = vpack.c.b16 %v1699, %v1691
    %v1988 = vpack.c.b16 %v1700, %v1692
    %v1989 = vpack.c.b16 %v1709, %v1701
    %v1990 = vpack.c.b16 %v1710, %v1702
    %v1991 = vpack.c.b16 %v1711, %v1703
    %v1992 = vpack.c.b16 %v1712, %v1704
    %v1993 = vpack.c.b16 %v1713, %v1705
    %v1994 = vpack.c.b16 %v1714, %v1706
    %v1995 = vpack.c.b16 %v1715, %v1707
    %v1996 = vpack.c.b16 %v1716, %v1708
    %v1997 = vpack.c.b16 %v1725, %v1717
    %v1998 = vpack.c.b16 %v1726, %v1718
    %v1999 = vpack.c.b16 %v1727, %v1719
    %v2000 = vpack.c.b16 %v1728, %v1720
    %v2001 = vpack.c.b16 %v1729, %v1721
    %v2002 = vpack.c.b16 %v1730, %v1722
    %v2003 = vpack.c.b16 %v1731, %v1723
    %v2004 = vpack.c.b16 %v1732, %v1724
    %v2005 = vpack.c.b16 %v1741, %v1733
    %v2006 = vpack.c.b16 %v1742, %v1734
    %v2007 = vpack.c.b16 %v1743, %v1735
    %v2008 = vpack.c.b16 %v1744, %v1736
    %v2009 = vpack.c.b16 %v1745, %v1737
    %v2010 = vpack.c.b16 %v1746, %v1738
    %v2011 = vpack.c.b16 %v1747, %v1739
    %v2012 = vpack.c.b16 %v1748, %v1740
    %v2013 = vpack.c.b16 %v1757, %v1749
    %v2014 = vpack.c.b16 %v1758, %v1750
    %v2015 = vpack.c.b16 %v1759, %v1751
    %v2016 = vpack.c.b16 %v1760, %v1752
    %v2017 = vpack.c.b16 %v1761, %v1753
    %v2018 = vpack.c.b16 %v1762, %v1754
    %v2019 = vpack.c.b16 %v1763, %v1755
    %v2020 = vpack.c.b16 %v1764, %v1756
    %2277 = vmatprep.subr.bf16.mxu0 %v1822
    %2278 = vmatpush1.bf16.msra.mxu0 %v1821
    %2279 = vmatprep.subr.bf16.mxu0 %v1814
    %2280 = vmatpush1.bf16.msra.mxu0 %v1813
    %2281 = vmatprep.subr.bf16.mxu0 %v1806
    %2282 = vmatpush1.bf16.msra.mxu0 %v1805
    %2283 = vmatprep.subr.bf16.mxu0 %v1798
    %2284 = vmatpush1.bf16.msra.mxu0 %v1797
    %2285 = vmatprep.subr.bf16.mxu0 %v1790
    %2286 = vmatpush1.bf16.msra.mxu0 %v1789
    %2287 = vmatprep.subr.bf16.mxu0 %v1782
    %2288 = vmatpush1.bf16.msra.mxu0 %v1781
    %2289 = vmatprep.subr.bf16.mxu0 %v1774
    %2290 = vmatpush1.bf16.msra.mxu0 %v1773
    %2291 = vmatprep.subr.bf16.mxu0 %v1766
    %2292 = vmatpush1.bf16.msra.mxu0 %v1765
    %2293 = vmatprep.subr.bf16.mxu0 %v1886
    %2294 = vmatpush2.bf16.msra.mxu0 %v1885
    %2295 = vmatprep.subr.bf16.mxu0 %v1878
    %2296 = vmatpush2.bf16.msra.mxu0 %v1877
    %2297 = vmatprep.subr.bf16.mxu0 %v1870
    %2298 = vmatpush2.bf16.msra.mxu0 %v1869
    %2299 = vmatprep.subr.bf16.mxu0 %v1862
    %2300 = vmatpush2.bf16.msra.mxu0 %v1861
    %2301 = vmatprep.subr.bf16.mxu0 %v1854
    %2302 = vmatpush2.bf16.msra.mxu0 %v1853
    %2303 = vmatprep.subr.bf16.mxu0 %v1846
    %2304 = vmatpush2.bf16.msra.mxu0 %v1845
    %2305 = vmatprep.subr.bf16.mxu0 %v1838
    %2306 = vmatpush2.bf16.msra.mxu0 %v1837
    %2307 = vmatprep.subr.bf16.mxu0 %v1830
    %2308 = vmatpush2.bf16.msra.mxu0 %v1829
    %2309 = vmatprep.mubr.bf16.mxu0 %v696
    %2310 = vmatmul.mubr.bf16.gmra.mxu0 %v695
    %v2311 = vpop.f32.mrf.mxu0
    %v2312 = vadd.f32 %v960, %v2311
    %v2313 = vpop.f32.mrf.mxu0
    %v2314 = vadd.f32 %v964, %v2313
    %v2315 = vpop.f32.mrf.mxu0
    %v2316 = vpop.f32.mrf.mxu0
    %2317 = vdwg.mxu0
    %2318 = vmatprep.subr.bf16.mxu0 %v1950
    %2319 = vmatpush1.bf16.msra.mxu0 %v1949
    %2320 = vmatprep.subr.bf16.mxu0 %v1942
    %2321 = vmatpush1.bf16.msra.mxu0 %v1941
    %2322 = vmatprep.subr.bf16.mxu0 %v1934
    %2323 = vmatpush1.bf16.msra.mxu0 %v1933
    %2324 = vmatprep.subr.bf16.mxu0 %v1926
    %2325 = vmatpush1.bf16.msra.mxu0 %v1925
    %2326 = vmatprep.subr.bf16.mxu0 %v1918
    %2327 = vmatpush1.bf16.msra.mxu0 %v1917
    %2328 = vmatprep.subr.bf16.mxu0 %v1910
    %2329 = vmatpush1.bf16.msra.mxu0 %v1909
    %2330 = vmatprep.subr.bf16.mxu0 %v1902
    %2331 = vmatpush1.bf16.msra.mxu0 %v1901
    %2332 = vmatprep.subr.bf16.mxu0 %v1894
    %2333 = vmatpush1.bf16.msra.mxu0 %v1893
    %2334 = vmatprep.subr.bf16.mxu0 %v2014
    %2335 = vmatpush2.bf16.msra.mxu0 %v2013
    %2336 = vmatprep.subr.bf16.mxu0 %v2006
    %2337 = vmatpush2.bf16.msra.mxu0 %v2005
    %2338 = vmatprep.subr.bf16.mxu0 %v1998
    %2339 = vmatpush2.bf16.msra.mxu0 %v1997
    %2340 = vmatprep.subr.bf16.mxu0 %v1990
    %2341 = vmatpush2.bf16.msra.mxu0 %v1989
    %2342 = vmatprep.subr.bf16.mxu0 %v1982
    %2343 = vmatpush2.bf16.msra.mxu0 %v1981
    %2344 = vmatprep.subr.bf16.mxu0 %v1974
    %2345 = vmatpush2.bf16.msra.mxu0 %v1973
    %2346 = vmatprep.subr.bf16.mxu0 %v1966
    %2347 = vmatpush2.bf16.msra.mxu0 %v1965
    %2348 = vmatprep.subr.bf16.mxu0 %v1958
    %2349 = vmatpush2.bf16.msra.mxu0 %v1957
    %2350 = vmatprep.mubr.bf16.mxu0 %v698
    %2351 = vmatmul.mubr.bf16.gmra.mxu0 %v697
    %v2352 = vpop.f32.mrf.mxu0
    %v2353 = vadd.f32 %v2312, %v2352
    %v2354 = vpop.f32.mrf.mxu0
    %v2355 = vadd.f32 %v2314, %v2354
    %v2356 = vpop.f32.mrf.mxu0
    %v2357 = vpop.f32.mrf.mxu0
    %2358 = vdwg.mxu0
    %2359 = vmatprep.subr.bf16.mxu0 %v1824
    %2360 = vmatpush1.bf16.msra.mxu0 %v1823
    %2361 = vmatprep.subr.bf16.mxu0 %v1816
    %2362 = vmatpush1.bf16.msra.mxu0 %v1815
    %2363 = vmatprep.subr.bf16.mxu0 %v1808
    %2364 = vmatpush1.bf16.msra.mxu0 %v1807
    %2365 = vmatprep.subr.bf16.mxu0 %v1800
    %2366 = vmatpush1.bf16.msra.mxu0 %v1799
    %2367 = vmatprep.subr.bf16.mxu0 %v1792
    %2368 = vmatpush1.bf16.msra.mxu0 %v1791
    %2369 = vmatprep.subr.bf16.mxu0 %v1784
    %2370 = vmatpush1.bf16.msra.mxu0 %v1783
    %2371 = vmatprep.subr.bf16.mxu0 %v1776
    %2372 = vmatpush1.bf16.msra.mxu0 %v1775
    %2373 = vmatprep.subr.bf16.mxu0 %v1768
    %2374 = vmatpush1.bf16.msra.mxu0 %v1767
    %2375 = vmatprep.subr.bf16.mxu0 %v1888
    %2376 = vmatpush2.bf16.msra.mxu0 %v1887
    %2377 = vmatprep.subr.bf16.mxu0 %v1880
    %2378 = vmatpush2.bf16.msra.mxu0 %v1879
    %2379 = vmatprep.subr.bf16.mxu0 %v1872
    %2380 = vmatpush2.bf16.msra.mxu0 %v1871
    %2381 = vmatprep.subr.bf16.mxu0 %v1864
    %2382 = vmatpush2.bf16.msra.mxu0 %v1863
    %2383 = vmatprep.subr.bf16.mxu0 %v1856
    %2384 = vmatpush2.bf16.msra.mxu0 %v1855
    %2385 = vmatprep.subr.bf16.mxu0 %v1848
    %2386 = vmatpush2.bf16.msra.mxu0 %v1847
    %2387 = vmatprep.subr.bf16.mxu0 %v1840
    %2388 = vmatpush2.bf16.msra.mxu0 %v1839
    %2389 = vmatprep.subr.bf16.mxu0 %v1832
    %2390 = vmatpush2.bf16.msra.mxu0 %v1831
    %2391 = vmatprep.mubr.bf16.mxu0 %v696
    %2392 = vmatmul.mubr.bf16.gmra.mxu0 %v695
    %v2393 = vpop.f32.mrf.mxu0
    %v2394 = vadd.f32 %v968, %v2393
    %v2395 = vpop.f32.mrf.mxu0
    %v2396 = vadd.f32 %v972, %v2395
    %v2397 = vpop.f32.mrf.mxu0
    %v2398 = vpop.f32.mrf.mxu0
    %2399 = vdwg.mxu0
    %2400 = vmatprep.subr.bf16.mxu0 %v1952
    %2401 = vmatpush1.bf16.msra.mxu0 %v1951
    %2402 = vmatprep.subr.bf16.mxu0 %v1944
    %2403 = vmatpush1.bf16.msra.mxu0 %v1943
    %2404 = vmatprep.subr.bf16.mxu0 %v1936
    %2405 = vmatpush1.bf16.msra.mxu0 %v1935
    %2406 = vmatprep.subr.bf16.mxu0 %v1928
    %2407 = vmatpush1.bf16.msra.mxu0 %v1927
    %2408 = vmatprep.subr.bf16.mxu0 %v1920
    %2409 = vmatpush1.bf16.msra.mxu0 %v1919
    %2410 = vmatprep.subr.bf16.mxu0 %v1912
    %2411 = vmatpush1.bf16.msra.mxu0 %v1911
    %2412 = vmatprep.subr.bf16.mxu0 %v1904
    %2413 = vmatpush1.bf16.msra.mxu0 %v1903
    %2414 = vmatprep.subr.bf16.mxu0 %v1896
    %2415 = vmatpush1.bf16.msra.mxu0 %v1895
    %2416 = vmatprep.subr.bf16.mxu0 %v2016
    %2417 = vmatpush2.bf16.msra.mxu0 %v2015
    %2418 = vmatprep.subr.bf16.mxu0 %v2008
    %2419 = vmatpush2.bf16.msra.mxu0 %v2007
    %2420 = vmatprep.subr.bf16.mxu0 %v2000
    %2421 = vmatpush2.bf16.msra.mxu0 %v1999
    %2422 = vmatprep.subr.bf16.mxu0 %v1992
    %2423 = vmatpush2.bf16.msra.mxu0 %v1991
    %2424 = vmatprep.subr.bf16.mxu0 %v1984
    %2425 = vmatpush2.bf16.msra.mxu0 %v1983
    %2426 = vmatprep.subr.bf16.mxu0 %v1976
    %2427 = vmatpush2.bf16.msra.mxu0 %v1975
    %2428 = vmatprep.subr.bf16.mxu0 %v1968
    %2429 = vmatpush2.bf16.msra.mxu0 %v1967
    %2430 = vmatprep.subr.bf16.mxu0 %v1960
    %2431 = vmatpush2.bf16.msra.mxu0 %v1959
    %2432 = vmatprep.mubr.bf16.mxu0 %v698
    %2433 = vmatmul.mubr.bf16.gmra.mxu0 %v697
    %v2434 = vpop.f32.mrf.mxu0
    %v2435 = vadd.f32 %v2394, %v2434
    %v2436 = vpop.f32.mrf.mxu0
    %v2437 = vadd.f32 %v2396, %v2436
    %v2438 = vpop.f32.mrf.mxu0
    %v2439 = vpop.f32.mrf.mxu0
    %2440 = vdwg.mxu0
    %2441 = vmatprep.subr.bf16.mxu0 %v1826
    %2442 = vmatpush1.bf16.msra.mxu0 %v1825
    %2443 = vmatprep.subr.bf16.mxu0 %v1818
    %2444 = vmatpush1.bf16.msra.mxu0 %v1817
    %2445 = vmatprep.subr.bf16.mxu0 %v1810
    %2446 = vmatpush1.bf16.msra.mxu0 %v1809
    %2447 = vmatprep.subr.bf16.mxu0 %v1802
    %2448 = vmatpush1.bf16.msra.mxu0 %v1801
    %2449 = vmatprep.subr.bf16.mxu0 %v1794
    %2450 = vmatpush1.bf16.msra.mxu0 %v1793
    %2451 = vmatprep.subr.bf16.mxu0 %v1786
    %2452 = vmatpush1.bf16.msra.mxu0 %v1785
    %2453 = vmatprep.subr.bf16.mxu0 %v1778
    %2454 = vmatpush1.bf16.msra.mxu0 %v1777
    %2455 = vmatprep.subr.bf16.mxu0 %v1770
    %2456 = vmatpush1.bf16.msra.mxu0 %v1769
    %2457 = vmatprep.subr.bf16.mxu0 %v1890
    %2458 = vmatpush2.bf16.msra.mxu0 %v1889
    %2459 = vmatprep.subr.bf16.mxu0 %v1882
    %2460 = vmatpush2.bf16.msra.mxu0 %v1881
    %2461 = vmatprep.subr.bf16.mxu0 %v1874
    %2462 = vmatpush2.bf16.msra.mxu0 %v1873
    %2463 = vmatprep.subr.bf16.mxu0 %v1866
    %2464 = vmatpush2.bf16.msra.mxu0 %v1865
    %2465 = vmatprep.subr.bf16.mxu0 %v1858
    %2466 = vmatpush2.bf16.msra.mxu0 %v1857
    %2467 = vmatprep.subr.bf16.mxu0 %v1850
    %2468 = vmatpush2.bf16.msra.mxu0 %v1849
    %2469 = vmatprep.subr.bf16.mxu0 %v1842
    %2470 = vmatpush2.bf16.msra.mxu0 %v1841
    %2471 = vmatprep.subr.bf16.mxu0 %v1834
    %2472 = vmatpush2.bf16.msra.mxu0 %v1833
    %2473 = vmatprep.mubr.bf16.mxu0 %v696
    %2474 = vmatmul.mubr.bf16.gmra.mxu0 %v695
    %v2475 = vpop.f32.mrf.mxu0
    %v2476 = vadd.f32 %v976, %v2475
    %v2477 = vpop.f32.mrf.mxu0
    %v2478 = vadd.f32 %v980, %v2477
    %v2479 = vpop.f32.mrf.mxu0
    %v2480 = vpop.f32.mrf.mxu0
    %2481 = vdwg.mxu0
    %2482 = vmatprep.subr.bf16.mxu0 %v1954
    %2483 = vmatpush1.bf16.msra.mxu0 %v1953
    %2484 = vmatprep.subr.bf16.mxu0 %v1946
    %2485 = vmatpush1.bf16.msra.mxu0 %v1945
    %2486 = vmatprep.subr.bf16.mxu0 %v1938
    %2487 = vmatpush1.bf16.msra.mxu0 %v1937
    %2488 = vmatprep.subr.bf16.mxu0 %v1930
    %2489 = vmatpush1.bf16.msra.mxu0 %v1929
    %2490 = vmatprep.subr.bf16.mxu0 %v1922
    %2491 = vmatpush1.bf16.msra.mxu0 %v1921
    %2492 = vmatprep.subr.bf16.mxu0 %v1914
    %2493 = vmatpush1.bf16.msra.mxu0 %v1913
    %2494 = vmatprep.subr.bf16.mxu0 %v1906
    %2495 = vmatpush1.bf16.msra.mxu0 %v1905
    %2496 = vmatprep.subr.bf16.mxu0 %v1898
    %2497 = vmatpush1.bf16.msra.mxu0 %v1897
    %2498 = vmatprep.subr.bf16.mxu0 %v2018
    %2499 = vmatpush2.bf16.msra.mxu0 %v2017
    %2500 = vmatprep.subr.bf16.mxu0 %v2010
    %2501 = vmatpush2.bf16.msra.mxu0 %v2009
    %2502 = vmatprep.subr.bf16.mxu0 %v2002
    %2503 = vmatpush2.bf16.msra.mxu0 %v2001
    %2504 = vmatprep.subr.bf16.mxu0 %v1994
    %2505 = vmatpush2.bf16.msra.mxu0 %v1993
    %2506 = vmatprep.subr.bf16.mxu0 %v1986
    %2507 = vmatpush2.bf16.msra.mxu0 %v1985
    %2508 = vmatprep.subr.bf16.mxu0 %v1978
    %2509 = vmatpush2.bf16.msra.mxu0 %v1977
    %2510 = vmatprep.subr.bf16.mxu0 %v1970
    %2511 = vmatpush2.bf16.msra.mxu0 %v1969
    %2512 = vmatprep.subr.bf16.mxu0 %v1962
    %2513 = vmatpush2.bf16.msra.mxu0 %v1961
    %2514 = vmatprep.mubr.bf16.mxu0 %v698
    %2515 = vmatmul.mubr.bf16.gmra.mxu0 %v697
    %v2516 = vpop.f32.mrf.mxu0
    %v2517 = vadd.f32 %v2476, %v2516
    %v2518 = vpop.f32.mrf.mxu0
    %v2519 = vadd.f32 %v2478, %v2518
    %v2520 = vpop.f32.mrf.mxu0
    %v2521 = vpop.f32.mrf.mxu0
    %2522 = vdwg.mxu0
    %2523 = vmatprep.subr.bf16.mxu0 %v1828
    %2524 = vmatpush1.bf16.msra.mxu0 %v1827
    %2525 = vmatprep.subr.bf16.mxu0 %v1820
    %2526 = vmatpush1.bf16.msra.mxu0 %v1819
    %2527 = vmatprep.subr.bf16.mxu0 %v1812
    %2528 = vmatpush1.bf16.msra.mxu0 %v1811
    %2529 = vmatprep.subr.bf16.mxu0 %v1804
    %2530 = vmatpush1.bf16.msra.mxu0 %v1803
    %2531 = vmatprep.subr.bf16.mxu0 %v1796
    %2532 = vmatpush1.bf16.msra.mxu0 %v1795
    %2533 = vmatprep.subr.bf16.mxu0 %v1788
    %2534 = vmatpush1.bf16.msra.mxu0 %v1787
    %2535 = vmatprep.subr.bf16.mxu0 %v1780
    %2536 = vmatpush1.bf16.msra.mxu0 %v1779
    %2537 = vmatprep.subr.bf16.mxu0 %v1772
    %2538 = vmatpush1.bf16.msra.mxu0 %v1771
    %2539 = vmatprep.subr.bf16.mxu0 %v1892
    %2540 = vmatpush2.bf16.msra.mxu0 %v1891
    %2541 = vmatprep.subr.bf16.mxu0 %v1884
    %2542 = vmatpush2.bf16.msra.mxu0 %v1883
    %2543 = vmatprep.subr.bf16.mxu0 %v1876
    %2544 = vmatpush2.bf16.msra.mxu0 %v1875
    %2545 = vmatprep.subr.bf16.mxu0 %v1868
    %2546 = vmatpush2.bf16.msra.mxu0 %v1867
    %2547 = vmatprep.subr.bf16.mxu0 %v1860
    %2548 = vmatpush2.bf16.msra.mxu0 %v1859
    %2549 = vmatprep.subr.bf16.mxu0 %v1852
    %2550 = vmatpush2.bf16.msra.mxu0 %v1851
    %2551 = vmatprep.subr.bf16.mxu0 %v1844
    %2552 = vmatpush2.bf16.msra.mxu0 %v1843
    %2553 = vmatprep.subr.bf16.mxu0 %v1836
    %2554 = vmatpush2.bf16.msra.mxu0 %v1835
    %2555 = vmatprep.mubr.bf16.mxu0 %v696
    %2556 = vmatmul.mubr.bf16.gmra.mxu0 %v695
    %v2557 = vpop.f32.mrf.mxu0
    %v2558 = vadd.f32 %v984, %v2557
    %v2559 = vpop.f32.mrf.mxu0
    %v2560 = vadd.f32 %v988, %v2559
    %v2561 = vpop.f32.mrf.mxu0
    %v2562 = vpop.f32.mrf.mxu0
    %2563 = vdwg.mxu0
    %2564 = vmatprep.subr.bf16.mxu0 %v1956
    %2565 = vmatpush1.bf16.msra.mxu0 %v1955
    %2566 = vmatprep.subr.bf16.mxu0 %v1948
    %2567 = vmatpush1.bf16.msra.mxu0 %v1947
    %2568 = vmatprep.subr.bf16.mxu0 %v1940
    %2569 = vmatpush1.bf16.msra.mxu0 %v1939
    %2570 = vmatprep.subr.bf16.mxu0 %v1932
    %2571 = vmatpush1.bf16.msra.mxu0 %v1931
    %2572 = vmatprep.subr.bf16.mxu0 %v1924
    %2573 = vmatpush1.bf16.msra.mxu0 %v1923
    %2574 = vmatprep.subr.bf16.mxu0 %v1916
    %2575 = vmatpush1.bf16.msra.mxu0 %v1915
    %2576 = vmatprep.subr.bf16.mxu0 %v1908
    %2577 = vmatpush1.bf16.msra.mxu0 %v1907
    %2578 = vmatprep.subr.bf16.mxu0 %v1900
    %2579 = vmatpush1.bf16.msra.mxu0 %v1899
    %2580 = vmatprep.subr.bf16.mxu0 %v2020
    %2581 = vmatpush2.bf16.msra.mxu0 %v2019
    %2582 = vmatprep.subr.bf16.mxu0 %v2012
    %2583 = vmatpush2.bf16.msra.mxu0 %v2011
    %2584 = vmatprep.subr.bf16.mxu0 %v2004
    %2585 = vmatpush2.bf16.msra.mxu0 %v2003
    %2586 = vmatprep.subr.bf16.mxu0 %v1996
    %2587 = vmatpush2.bf16.msra.mxu0 %v1995
    %2588 = vmatprep.subr.bf16.mxu0 %v1988
    %2589 = vmatpush2.bf16.msra.mxu0 %v1987
    %2590 = vmatprep.subr.bf16.mxu0 %v1980
    %2591 = vmatpush2.bf16.msra.mxu0 %v1979
    %2592 = vmatprep.subr.bf16.mxu0 %v1972
    %2593 = vmatpush2.bf16.msra.mxu0 %v1971
    %2594 = vmatprep.subr.bf16.mxu0 %v1964
    %2595 = vmatpush2.bf16.msra.mxu0 %v1963
    %2596 = vmatprep.mubr.bf16.mxu0 %v698
    %2597 = vmatmul.mubr.bf16.gmra.mxu0 %v697
    %v2598 = vpop.f32.mrf.mxu0
    %v2599 = vadd.f32 %v2558, %v2598
    %v2600 = vpop.f32.mrf.mxu0
    %v2601 = vadd.f32 %v2560, %v2600
    %v2602 = vpop.f32.mrf.mxu0
    %v2603 = vpop.f32.mrf.mxu0
    %2604 = vdwg.mxu0
    %v2605 = vtanh.pop %v2353
    %v2606 = vtanh.pop %v2355
    %v2607 = vtanh.pop %v2435
    %v2608 = vtanh.pop %v2437
    %v2609 = vtanh.pop %v2517
    %v2610 = vtanh.pop %v2519
    %v2611 = vtanh.pop %v2599
    %v2612 = vtanh.pop %v2601
    %2613 = vst [vmem:[#allocation11] sm:$0xff] %v2605
    %2614 = vst [vmem:[#allocation11 + $0x8] sm:$0xff] %v2606
    %2615 = vst [vmem:[#allocation11 + $0x10] sm:$0xff] %v2607
    %2616 = vst [vmem:[#allocation11 + $0x18] sm:$0xff] %v2608
    %2617 = vst [vmem:[#allocation11 + $0x20] sm:$0xff] %v2609
    %2618 = vst [vmem:[#allocation11 + $0x28] sm:$0xff] %v2610
    %2619 = vst [vmem:[#allocation11 + $0x30] sm:$0xff] %v2611
    %2620 = vst [vmem:[#allocation11 + $0x38] sm:$0xff] %v2612
    // Predicated region
    $region50: #{tpu_custom_call.1} parent=1 // pred_check
      _
    $region51: #{tpu_custom_call.1} parent=1 // pred_check_branch
      %2622 = sbr.rel (0) target = $region53
    $region52: #{tpu_custom_call.1} parent=1 // pred_region
      %s2624 = ssub.s32 1024, 1024
      %2625 = vsyncadd [#allocation4], %s2624
      %s2627 = sshll.u32 [#allocation11], 4
      %s2628 = int_to_ptr.vmem [resolvable:$true] %s2627
      %2630 = dma.vmem_to_hbm [thread:$0]  %s2628, 1024, %s7, [#allocation4]
    $region53: #{tpu_custom_call.1} parent=1 // pred_fallthru
      _
    // Predicated region
    $region54: #{tpu_custom_call.1} parent=1 // pred_check
      _
    $region55: #{tpu_custom_call.1} parent=1 // pred_check_branch
      %2632 = sbr.rel (0) target = $region57
    $region56: #{tpu_custom_call.1} parent=1 // pred_region
      %2633 = dma.done [#allocation4], 1024
    $region57: #{tpu_custom_call.1} parent=1 // pred_fallthru
      _
    %2634 = vsyncpa [#allocation3], 1
    %2635 = vsyncpa [#allocation6], 1
    %2636 = vsyncpa [#allocation9], 1
    %2637 = vsyncpa [#allocation4], 1

</llo_original>
